<compile_context>
chip_gen: v5e
topology: v5e:2x2
jax: 0.10.0
libtpu: 0.0.40
codegen_flags: <defaults>
</compile_context>

<pallas_src>
import functools

import jax
import jax.numpy as jnp
from jax.experimental import pallas as pl
from jax.experimental.pallas import tpu as pltpu

BN_EPS = 1e-5
LRELU_SLOPE = 0.2

_TM_MAX = 256                      # M tile: >=2 blocks on the largest layers
_TK_MAX = 2048                     # keep full K as one block unless huge
_VMEM_LIMIT = 32 * 1024 * 1024     # explicit scoped-VMEM budget (v7x-safe)


def _round_up(x, m):
    return (x + m - 1) // m * m


# ----------------------------------------------------------------------------
# Pallas kernels: GEMM with fused bias + activation epilogue
# ----------------------------------------------------------------------------
def _epilogue(y_f32, bias_ref, act):
    if bias_ref is not None:
        y_f32 = y_f32 + bias_ref[...]                  # (1, N) broadcasts
    if act == "leaky_relu":
        y_f32 = jnp.maximum(y_f32, LRELU_SLOPE * y_f32)
    elif act == "sigmoid":
        # exp + approximate reciprocal both run on the EUP slot.
        y_f32 = pl.reciprocal(1.0 + jnp.exp(-y_f32), approx=True)
    return y_f32


def _gemm_kernel_1k(a_ref, b_ref, *rest, act, has_bias):
    """Single K block: no accumulator scratch, write fused epilogue directly."""
    if has_bias:
        bias_ref, o_ref = rest
    else:
        (o_ref,) = rest
        bias_ref = None
    acc = jnp.dot(a_ref[...], b_ref[...], preferred_element_type=jnp.float32)
    o_ref[...] = _epilogue(acc, bias_ref, act).astype(o_ref.dtype)


def _gemm_kernel_nk(a_ref, b_ref, *rest, act, has_bias):
    """K-tiled path (only used for very large K): f32 VMEM accumulator."""
    if has_bias:
        bias_ref, o_ref, acc_ref = rest
    else:
        o_ref, acc_ref = rest
        bias_ref = None
    k = pl.program_id(1)

    @pl.when(k == 0)
    def _():
        acc_ref[...] = jnp.zeros_like(acc_ref)

    acc_ref[...] += jnp.dot(a_ref[...], b_ref[...],
                            preferred_element_type=jnp.float32)

    @pl.when(k == pl.num_programs(1) - 1)
    def _():
        o_ref[...] = _epilogue(acc_ref[...], bias_ref, act).astype(o_ref.dtype)


def matmul_bias_act(a, b, bias=None, act="none", out_dtype=jnp.bfloat16):
    """(M,K) @ (K,N) + optional bias[N], fused activation, bf16 MXU, f32 acc."""
    M, K = a.shape
    Kb, N = b.shape
    assert K == Kb

    a = a.astype(jnp.bfloat16)
    b = b.astype(jnp.bfloat16)

    # --- M tiling: only dimension we tile; pad only when >1 tile is needed.
    if M <= _TM_MAX:
        tm, Mp = M, M
    else:
        tm = _TM_MAX
        Mp = _round_up(M, tm)
        if Mp != M:
            a = jnp.pad(a, ((0, Mp - M), (0, 0)))
    nm = Mp // tm

    # --- K: keep the whole (small) reduction as one full-extent block.
    if K <= _TK_MAX:
        tk, Kp = K, K
    else:
        tk = _TK_MAX
        Kp = _round_up(K, tk)
        if Kp != K:
            a = jnp.pad(a, ((0, 0), (0, Kp - K)))
            b = jnp.pad(b, ((0, Kp - K), (0, 0)))
    nk = Kp // tk

    has_bias = bias is not None
    operands = [a, b]
    if has_bias:
        operands.append(bias.astype(jnp.float32).reshape(1, N))

    if nk == 1:
        kernel = functools.partial(_gemm_kernel_1k, act=act, has_bias=has_bias)
        grid = (nm,)
        in_specs = [pl.BlockSpec((tm, Kp), lambda i: (i, 0)),
                    pl.BlockSpec((Kp, N), lambda i: (0, 0))]
        if has_bias:
            in_specs.append(pl.BlockSpec((1, N), lambda i: (0, 0)))
        out_specs = pl.BlockSpec((tm, N), lambda i: (i, 0))
        scratch = []
        dims = ("parallel",)
    else:
        kernel = functools.partial(_gemm_kernel_nk, act=act, has_bias=has_bias)
        grid = (nm, nk)
        in_specs = [pl.BlockSpec((tm, tk), lambda i, k: (i, k)),
                    pl.BlockSpec((tk, N), lambda i, k: (k, 0))]
        if has_bias:
            in_specs.append(pl.BlockSpec((1, N), lambda i, k: (0, 0)))
        out_specs = pl.BlockSpec((tm, N), lambda i, k: (i, 0))
        scratch = [pltpu.VMEM((tm, N), jnp.float32)]
        dims = ("parallel", "arbitrary")

    out = pl.pallas_call(
        kernel,
        out_shape=jax.ShapeDtypeStruct((Mp, N), out_dtype),
        grid_spec=pltpu.PrefetchScalarGridSpec(
            num_scalar_prefetch=0,
            grid=grid,
            in_specs=in_specs,
            out_specs=out_specs,
            scratch_shapes=scratch),
        compiler_params=pltpu.CompilerParams(
            dimension_semantics=dims,
            vmem_limit_bytes=_VMEM_LIMIT),
    )(*operands)
    return out[:M] if Mp != M else out


# ----------------------------------------------------------------------------
# Glue ops (patch extraction / pooling / pixel-shuffle stay in XLA, all bf16)
# ----------------------------------------------------------------------------
def _extract_3x3_patches(x):
    """x: (B,H,W,C) bf16 -> (B*H*W, 9*C); column index = (di*3+dj)*C + c."""
    # TODO(synk): fuse this 3x3 patch extraction into the GEMM kernel (halo'd
    # row-block direct conv) to drop the 9x activation HBM round-trip; needs a
    # validated in-kernel (H,W,C)->(H*W,C) collapse on all spatial sizes.
    B, H, W, C = x.shape
    xp = jnp.pad(x, ((0, 0), (1, 1), (1, 1), (0, 0)))
    cols = [xp[:, di:di + H, dj:dj + W, :]
            for di in range(3) for dj in range(3)]
    return jnp.concatenate(cols, axis=-1).reshape(B * H * W, 9 * C)


def conv3x3_bn_lrelu(x, w):
    """Conv2d(3x3, pad=1, bias=False) + BatchNorm2d(eval) + LeakyReLU(0.2).

    x: (B,H,W,Cin) NHWC bf16, w: (Cout,Cin,3,3) PyTorch layout (f32).
    """
    B, H, W, C = x.shape
    Cout = w.shape[0]
    bn_scale = 1.0 / jnp.sqrt(jnp.float32(1.0 + BN_EPS))   # running stats fold
    wr = jnp.transpose(w, (2, 3, 1, 0)).reshape(9 * C, Cout) * bn_scale
    patches = _extract_3x3_patches(x.astype(jnp.bfloat16))
    y = matmul_bias_act(patches, wr, bias=None, act="leaky_relu")
    return y.reshape(B, H, W, Cout)


def res_double_conv(x, p):
    x = conv3x3_bn_lrelu(x, p["w1"])
    x = conv3x3_bn_lrelu(x, p["w2"])
    return x


def maxpool2x2(x):
    B, H, W, C = x.shape
    return x.reshape(B, H // 2, 2, W // 2, 2, C).max(axis=(2, 4))


def conv_transpose2x2(x, w, b):
    """ConvTranspose2d(k=2, s=2). x: (B,H,W,Cin), w: (Cin,Cout,2,2), b: (Cout,).

    Weight columns ordered (di,dj,cout) so the GEMM output is already
    (B,H,W,2,2,Cout) and the up-sample is a lane-dense pixel shuffle.
    """
    B, H, W, Cin = x.shape
    Cout = w.shape[1]
    wr = jnp.transpose(w, (0, 2, 3, 1)).reshape(Cin, 4 * Cout)
    bias = jnp.tile(b, 4)                              # col = (di*2+dj)*Cout+co
    y = matmul_bias_act(x.reshape(B * H * W, Cin), wr, bias, act="none")
    y = y.reshape(B, H, W, 2, 2, Cout)
    y = jnp.transpose(y, (0, 1, 3, 2, 4, 5)).reshape(B, 2 * H, 2 * W, Cout)
    return y


def final_conv_sigmoid(x, w, b):
    """Conv2d(1x1) + Sigmoid. w: (Cout,Cin,1,1). Returns f32."""
    B, H, W, C = x.shape
    Cout = w.shape[0]
    wr = w.reshape(Cout, C).T
    y = matmul_bias_act(x.reshape(B * H * W, C), wr, b, act="sigmoid",
                        out_dtype=jnp.float32)
    return y.reshape(B, H, W, Cout)


# ----------------------------------------------------------------------------
# Parameter init (deterministic, PyTorch-like shapes)
# ----------------------------------------------------------------------------
def init_params(key, in_channels, out_channels, features):
    keys = iter(jax.random.split(key, 4 * len(features) * 4 + 8))

    def conv_w(cout, cin, k):
        fan_in = cin * k * k
        bound = 1.0 / (fan_in ** 0.5)
        return jax.random.uniform(next(keys), (cout, cin, k, k),
                                  jnp.float32, -bound, bound)

    def vec(n, fan_in):
        bound = 1.0 / (fan_in ** 0.5)
        return jax.random.uniform(next(keys), (n,), jnp.float32, -bound, bound)

    params = {"downs": [], "ups_t": [], "ups_r": []}
    cin = in_channels
    for f in features:
        params["downs"].append({"w1": conv_w(f, cin, 3), "w2": conv_w(f, f, 3)})
        cin = f
    for f in reversed(features):
        # ConvTranspose2d(f*2, f, 2, 2): weight (Cin, Cout, 2, 2), bias (Cout,)
        bound = 1.0 / (2 * f * 4) ** 0.5
        wt = jax.random.uniform(next(keys), (2 * f, f, 2, 2), jnp.float32,
                                -bound, bound)
        params["ups_t"].append({"w": wt, "b": vec(f, 2 * f * 4)})
        params["ups_r"].append({"w1": conv_w(f, 2 * f, 3), "w2": conv_w(f, f, 3)})
    fb = features[-1]
    params["bottleneck"] = {"w1": conv_w(2 * fb, fb, 3),
                            "w2": conv_w(2 * fb, 2 * fb, 3)}
    params["final_w"] = conv_w(out_channels, features[0], 1)
    params["final_b"] = vec(out_channels, features[0])
    return params


# ----------------------------------------------------------------------------
# UNET forward (eval mode: Dropout = identity, BN = running stats)
# ----------------------------------------------------------------------------
def unet_forward(x_nchw, params):
    x = jnp.transpose(x_nchw, (0, 2, 3, 1)).astype(jnp.bfloat16)  # NCHW->NHWC

    skips = []
    for p in params["downs"]:
        x = res_double_conv(x, p)
        skips.append(x)
        x = maxpool2x2(x)                    # Dropout(p=0.5): identity in eval

    x = res_double_conv(x, params["bottleneck"])

    skips = skips[::-1]
    for i, (pt, pr) in enumerate(zip(params["ups_t"], params["ups_r"])):
        x = conv_transpose2x2(x, pt["w"], pt["b"])
        skip = skips[i]
        if x.shape[1:3] != skip.shape[1:3]:
            # nearest-neighbor resize, matches F.interpolate default mode
            x = jax.image.resize(
                x, (x.shape[0], skip.shape[1], skip.shape[2], x.shape[3]),
                method="nearest")
        x = jnp.concatenate([skip, x], axis=-1)   # torch.cat((skip, x), dim=1)
        x = res_double_conv(x, pr)                # Dropout: identity in eval

    y = final_conv_sigmoid(x, params["final_w"], params["final_b"])
    return jnp.transpose(y, (0, 3, 1, 2))         # NHWC -> NCHW, f32


# ----------------------------------------------------------------------------
if __name__ == "__main__":
    IN_CH, OUT_CH = 2, 2
    FEATURES = (8, 16)          # small UNET(features=[8, 16]) for the demo
    B, H, W = 2, 16, 16

    root = jax.random.PRNGKey(0)
    k_x, k_p = jax.random.split(root)
    x = jax.random.normal(k_x, (B, IN_CH, H, W), jnp.float32)
    params = init_params(k_p, IN_CH, OUT_CH, FEATURES)

    fwd = jax.jit(unet_forward)
    out = jax.block_until_ready(fwd(x, params))

    assert out.shape == (B, OUT_CH, H, W), out.shape
    assert bool(jnp.all(jnp.isfinite(out)))
    # sigmoid range (small tolerance for the approximate EUP reciprocal)
    assert bool(jnp.all((out > -1e-3) & (out < 1.0 + 1e-3)))
    print("KERNEL_OK")
</pallas_src>

<mosaic_0001>
module attributes {stable_mosaic.version = 11 : i64} {
  func.func @_gemm_kernel_1k(%arg0: i32, %arg1: memref<256x18xbf16, #tpu.memory_space<vmem>>, %arg2: memref<18x8xbf16, #tpu.memory_space<vmem>>, %arg3: memref<256x8xbf16, #tpu.memory_space<vmem>>) attributes {dimension_semantics = [#tpu.dimension_semantics<parallel>], iteration_bounds = array<i64: 2>, scalar_prefetch = 0 : i64, scratch_operands = 0 : i64, tpu.core_type = #tpu.core_type<tc>, window_params = [{transform_indices = @transform_0, window_bounds = array<i64: 256, 18>}, {pipeline_mode = #tpu.pipeline_mode<synchronous>, transform_indices = @transform_1, window_bounds = array<i64: 18, 8>}, {transform_indices = @transform_2, window_bounds = array<i64: 256, 8>}]} {
    %c0 = arith.constant 0 : index
    %c0_0 = arith.constant 0 : index
    %0 = vector.load %arg1[%c0, %c0_0] : memref<256x18xbf16, #tpu.memory_space<vmem>>, vector<256x18xbf16>
    %c0_1 = arith.constant 0 : index
    %c0_2 = arith.constant 0 : index
    %1 = vector.load %arg2[%c0_1, %c0_2] : memref<18x8xbf16, #tpu.memory_space<vmem>>, vector<18x8xbf16>
    %cst = arith.constant dense<0.000000e+00> : vector<256x8xf32>
    %2 = tpu.matmul %0, %1, %cst {dimension_numbers = #tpu.dot_dimension_numbers<[1], [0], [0], [1], [0, 0, 1, 1], [], []>} : vector<256x18xbf16>, vector<18x8xbf16>, vector<256x8xf32> -> vector<256x8xf32>
    %cst_3 = arith.constant 2.000000e-01 : f32
    %3 = vector.broadcast %cst_3 : f32 to vector<256x8xf32>
    %4 = arith.mulf %3, %2 : vector<256x8xf32>
    %5 = arith.maximumf %2, %4 : vector<256x8xf32>
    %6 = arith.truncf %5 : vector<256x8xf32> to vector<256x8xbf16>
    %c0_4 = arith.constant 0 : index
    %c0_5 = arith.constant 0 : index
    %7 = vector.load %arg3[%c0_4, %c0_5] : memref<256x8xbf16, #tpu.memory_space<vmem>>, vector<256x8xbf16>
    tpu.vector_store %arg3[%c0_4, %c0_5], %6 {strides = array<i32>} : memref<256x8xbf16, #tpu.memory_space<vmem>>, vector<256x8xbf16>,
    return
  }
  func.func @transform_0(%arg0: i32) -> (i32, i32) {
    %c0_i32 = arith.constant 0 : i32
    %c0_i32_0 = arith.constant 0 : i32
    return %arg0, %c0_i32 : i32, i32
  }
  func.func @transform_1(%arg0: i32) -> (i32, i32) {
    %c0_i32 = arith.constant 0 : i32
    %c0_i32_0 = arith.constant 0 : i32
    %c0_i32_1 = arith.constant 0 : i32
    return %c0_i32, %c0_i32_0 : i32, i32
  }
  func.func @transform_2(%arg0: i32) -> (i32, i32) {
    %c0_i32 = arith.constant 0 : i32
    %c0_i32_0 = arith.constant 0 : i32
    return %arg0, %c0_i32 : i32, i32
  }
}

module attributes {stable_mosaic.version = 11 : i64} {
  func.func @_gemm_kernel_1k(%arg0: i32, %arg1: memref<256x72xbf16, #tpu.memory_space<vmem>>, %arg2: memref<72x8xbf16, #tpu.memory_space<vmem>>, %arg3: memref<256x8xbf16, #tpu.memory_space<vmem>>) attributes {dimension_semantics = [#tpu.dimension_semantics<parallel>], iteration_bounds = array<i64: 2>, scalar_prefetch = 0 : i64, scratch_operands = 0 : i64, tpu.core_type = #tpu.core_type<tc>, window_params = [{transform_indices = @transform_0, window_bounds = array<i64: 256, 72>}, {pipeline_mode = #tpu.pipeline_mode<synchronous>, transform_indices = @transform_1, window_bounds = array<i64: 72, 8>}, {transform_indices = @transform_2, window_bounds = array<i64: 256, 8>}]} {
    %c0 = arith.constant 0 : index
    %c0_0 = arith.constant 0 : index
    %0 = vector.load %arg1[%c0, %c0_0] : memref<256x72xbf16, #tpu.memory_space<vmem>>, vector<256x72xbf16>
    %c0_1 = arith.constant 0 : index
    %c0_2 = arith.constant 0 : index
    %1 = vector.load %arg2[%c0_1, %c0_2] : memref<72x8xbf16, #tpu.memory_space<vmem>>, vector<72x8xbf16>
    %cst = arith.constant dense<0.000000e+00> : vector<256x8xf32>
    %2 = tpu.matmul %0, %1, %cst {dimension_numbers = #tpu.dot_dimension_numbers<[1], [0], [0], [1], [0, 0, 1, 1], [], []>} : vector<256x72xbf16>, vector<72x8xbf16>, vector<256x8xf32> -> vector<256x8xf32>
    %cst_3 = arith.constant 2.000000e-01 : f32
    %3 = vector.broadcast %cst_3 : f32 to vector<256x8xf32>
    %4 = arith.mulf %3, %2 : vector<256x8xf32>
    %5 = arith.maximumf %2, %4 : vector<256x8xf32>
    %6 = arith.truncf %5 : vector<256x8xf32> to vector<256x8xbf16>
    %c0_4 = arith.constant 0 : index
    %c0_5 = arith.constant 0 : index
    %7 = vector.load %arg3[%c0_4, %c0_5] : memref<256x8xbf16, #tpu.memory_space<vmem>>, vector<256x8xbf16>
    tpu.vector_store %arg3[%c0_4, %c0_5], %6 {strides = array<i32>} : memref<256x8xbf16, #tpu.memory_space<vmem>>, vector<256x8xbf16>,
    return
  }
  func.func @transform_0(%arg0: i32) -> (i32, i32) {
    %c0_i32 = arith.constant 0 : i32
    %c0_i32_0 = arith.constant 0 : i32
    return %arg0, %c0_i32 : i32, i32
  }
  func.func @transform_1(%arg0: i32) -> (i32, i32) {
    %c0_i32 = arith.constant 0 : i32
    %c0_i32_0 = arith.constant 0 : i32
    %c0_i32_1 = arith.constant 0 : i32
    return %c0_i32, %c0_i32_0 : i32, i32
  }
  func.func @transform_2(%arg0: i32) -> (i32, i32) {
    %c0_i32 = arith.constant 0 : i32
    %c0_i32_0 = arith.constant 0 : i32
    return %arg0, %c0_i32 : i32, i32
  }
}

module attributes {stable_mosaic.version = 11 : i64} {
  func.func @_gemm_kernel_1k(%arg0: i32, %arg1: memref<128x72xbf16, #tpu.memory_space<vmem>>, %arg2: memref<72x16xbf16, #tpu.memory_space<vmem>>, %arg3: memref<128x16xbf16, #tpu.memory_space<vmem>>) attributes {dimension_semantics = [#tpu.dimension_semantics<parallel>], iteration_bounds = array<i64: 1>, scalar_prefetch = 0 : i64, scratch_operands = 0 : i64, tpu.core_type = #tpu.core_type<tc>, window_params = [{transform_indices = @transform_0, window_bounds = array<i64: 128, 72>}, {pipeline_mode = #tpu.pipeline_mode<synchronous>, transform_indices = @transform_1, window_bounds = array<i64: 72, 16>}, {transform_indices = @transform_2, window_bounds = array<i64: 128, 16>}]} {
    %c0 = arith.constant 0 : index
    %c0_0 = arith.constant 0 : index
    %0 = vector.load %arg1[%c0, %c0_0] : memref<128x72xbf16, #tpu.memory_space<vmem>>, vector<128x72xbf16>
    %c0_1 = arith.constant 0 : index
    %c0_2 = arith.constant 0 : index
    %1 = vector.load %arg2[%c0_1, %c0_2] : memref<72x16xbf16, #tpu.memory_space<vmem>>, vector<72x16xbf16>
    %cst = arith.constant dense<0.000000e+00> : vector<128x16xf32>
    %2 = tpu.matmul %0, %1, %cst {dimension_numbers = #tpu.dot_dimension_numbers<[1], [0], [0], [1], [0, 0, 1, 1], [], []>} : vector<128x72xbf16>, vector<72x16xbf16>, vector<128x16xf32> -> vector<128x16xf32>
    %cst_3 = arith.constant 2.000000e-01 : f32
    %3 = vector.broadcast %cst_3 : f32 to vector<128x16xf32>
    %4 = arith.mulf %3, %2 : vector<128x16xf32>
    %5 = arith.maximumf %2, %4 : vector<128x16xf32>
    %6 = arith.truncf %5 : vector<128x16xf32> to vector<128x16xbf16>
    %c0_4 = arith.constant 0 : index
    %c0_5 = arith.constant 0 : index
    %7 = vector.load %arg3[%c0_4, %c0_5] : memref<128x16xbf16, #tpu.memory_space<vmem>>, vector<128x16xbf16>
    tpu.vector_store %arg3[%c0_4, %c0_5], %6 {strides = array<i32>} : memref<128x16xbf16, #tpu.memory_space<vmem>>, vector<128x16xbf16>,
    return
  }
  func.func @transform_0(%arg0: i32) -> (i32, i32) {
    %c0_i32 = arith.constant 0 : i32
    %c0_i32_0 = arith.constant 0 : i32
    return %arg0, %c0_i32 : i32, i32
  }
  func.func @transform_1(%arg0: i32) -> (i32, i32) {
    %c0_i32 = arith.constant 0 : i32
    %c0_i32_0 = arith.constant 0 : i32
    %c0_i32_1 = arith.constant 0 : i32
    return %c0_i32, %c0_i32_0 : i32, i32
  }
  func.func @transform_2(%arg0: i32) -> (i32, i32) {
    %c0_i32 = arith.constant 0 : i32
    %c0_i32_0 = arith.constant 0 : i32
    return %arg0, %c0_i32 : i32, i32
  }
}

module attributes {stable_mosaic.version = 11 : i64} {
  func.func @_gemm_kernel_1k(%arg0: i32, %arg1: memref<128x144xbf16, #tpu.memory_space<vmem>>, %arg2: memref<144x16xbf16, #tpu.memory_space<vmem>>, %arg3: memref<128x16xbf16, #tpu.memory_space<vmem>>) attributes {dimension_semantics = [#tpu.dimension_semantics<parallel>], iteration_bounds = array<i64: 1>, scalar_prefetch = 0 : i64, scratch_operands = 0 : i64, tpu.core_type = #tpu.core_type<tc>, window_params = [{transform_indices = @transform_0, window_bounds = array<i64: 128, 144>}, {pipeline_mode = #tpu.pipeline_mode<synchronous>, transform_indices = @transform_1, window_bounds = array<i64: 144, 16>}, {transform_indices = @transform_2, window_bounds = array<i64: 128, 16>}]} {
    %c0 = arith.constant 0 : index
    %c0_0 = arith.constant 0 : index
    %0 = vector.load %arg1[%c0, %c0_0] : memref<128x144xbf16, #tpu.memory_space<vmem>>, vector<128x144xbf16>
    %c0_1 = arith.constant 0 : index
    %c0_2 = arith.constant 0 : index
    %1 = vector.load %arg2[%c0_1, %c0_2] : memref<144x16xbf16, #tpu.memory_space<vmem>>, vector<144x16xbf16>
    %cst = arith.constant dense<0.000000e+00> : vector<128x16xf32>
    %2 = tpu.matmul %0, %1, %cst {dimension_numbers = #tpu.dot_dimension_numbers<[1], [0], [0], [1], [0, 0, 1, 1], [], []>} : vector<128x144xbf16>, vector<144x16xbf16>, vector<128x16xf32> -> vector<128x16xf32>
    %cst_3 = arith.constant 2.000000e-01 : f32
    %3 = vector.broadcast %cst_3 : f32 to vector<128x16xf32>
    %4 = arith.mulf %3, %2 : vector<128x16xf32>
    %5 = arith.maximumf %2, %4 : vector<128x16xf32>
    %6 = arith.truncf %5 : vector<128x16xf32> to vector<128x16xbf16>
    %c0_4 = arith.constant 0 : index
    %c0_5 = arith.constant 0 : index
    %7 = vector.load %arg3[%c0_4, %c0_5] : memref<128x16xbf16, #tpu.memory_space<vmem>>, vector<128x16xbf16>
    tpu.vector_store %arg3[%c0_4, %c0_5], %6 {strides = array<i32>} : memref<128x16xbf16, #tpu.memory_space<vmem>>, vector<128x16xbf16>,
    return
  }
  func.func @transform_0(%arg0: i32) -> (i32, i32) {
    %c0_i32 = arith.constant 0 : i32
    %c0_i32_0 = arith.constant 0 : i32
    return %arg0, %c0_i32 : i32, i32
  }
  func.func @transform_1(%arg0: i32) -> (i32, i32) {
    %c0_i32 = arith.constant 0 : i32
    %c0_i32_0 = arith.constant 0 : i32
    %c0_i32_1 = arith.constant 0 : i32
    return %c0_i32, %c0_i32_0 : i32, i32
  }
  func.func @transform_2(%arg0: i32) -> (i32, i32) {
    %c0_i32 = arith.constant 0 : i32
    %c0_i32_0 = arith.constant 0 : i32
    return %arg0, %c0_i32 : i32, i32
  }
}

module attributes {stable_mosaic.version = 11 : i64} {
  func.func @_gemm_kernel_1k(%arg0: i32, %arg1: memref<32x144xbf16, #tpu.memory_space<vmem>>, %arg2: memref<144x32xbf16, #tpu.memory_space<vmem>>, %arg3: memref<32x32xbf16, #tpu.memory_space<vmem>>) attributes {dimension_semantics = [#tpu.dimension_semantics<parallel>], iteration_bounds = array<i64: 1>, scalar_prefetch = 0 : i64, scratch_operands = 0 : i64, tpu.core_type = #tpu.core_type<tc>, window_params = [{transform_indices = @transform_0, window_bounds = array<i64: 32, 144>}, {pipeline_mode = #tpu.pipeline_mode<synchronous>, transform_indices = @transform_1, window_bounds = array<i64: 144, 32>}, {transform_indices = @transform_2, window_bounds = array<i64: 32, 32>}]} {
    %c0 = arith.constant 0 : index
    %c0_0 = arith.constant 0 : index
    %0 = vector.load %arg1[%c0, %c0_0] : memref<32x144xbf16, #tpu.memory_space<vmem>>, vector<32x144xbf16>
    %c0_1 = arith.constant 0 : index
    %c0_2 = arith.constant 0 : index
    %1 = vector.load %arg2[%c0_1, %c0_2] : memref<144x32xbf16, #tpu.memory_space<vmem>>, vector<144x32xbf16>
    %cst = arith.constant dense<0.000000e+00> : vector<32x32xf32>
    %2 = tpu.matmul %0, %1, %cst {dimension_numbers = #tpu.dot_dimension_numbers<[1], [0], [0], [1], [0, 0, 1, 1], [], []>} : vector<32x144xbf16>, vector<144x32xbf16>, vector<32x32xf32> -> vector<32x32xf32>
    %cst_3 = arith.constant 2.000000e-01 : f32
    %3 = vector.broadcast %cst_3 : f32 to vector<32x32xf32>
    %4 = arith.mulf %3, %2 : vector<32x32xf32>
    %5 = arith.maximumf %2, %4 : vector<32x32xf32>
    %6 = arith.truncf %5 : vector<32x32xf32> to vector<32x32xbf16>
    %c0_4 = arith.constant 0 : index
    %c0_5 = arith.constant 0 : index
    %7 = vector.load %arg3[%c0_4, %c0_5] : memref<32x32xbf16, #tpu.memory_space<vmem>>, vector<32x32xbf16>
    tpu.vector_store %arg3[%c0_4, %c0_5], %6 {strides = array<i32>} : memref<32x32xbf16, #tpu.memory_space<vmem>>, vector<32x32xbf16>,
    return
  }
  func.func @transform_0(%arg0: i32) -> (i32, i32) {
    %c0_i32 = arith.constant 0 : i32
    %c0_i32_0 = arith.constant 0 : i32
    return %arg0, %c0_i32 : i32, i32
  }
  func.func @transform_1(%arg0: i32) -> (i32, i32) {
    %c0_i32 = arith.constant 0 : i32
    %c0_i32_0 = arith.constant 0 : i32
    %c0_i32_1 = arith.constant 0 : i32
    return %c0_i32, %c0_i32_0 : i32, i32
  }
  func.func @transform_2(%arg0: i32) -> (i32, i32) {
    %c0_i32 = arith.constant 0 : i32
    %c0_i32_0 = arith.constant 0 : i32
    return %arg0, %c0_i32 : i32, i32
  }
}

module attributes {stable_mosaic.version = 11 : i64} {
  func.func @_gemm_kernel_1k(%arg0: i32, %arg1: memref<32x32xbf16, #tpu.memory_space<vmem>>, %arg2: memref<32x64xbf16, #tpu.memory_space<vmem>>, %arg3: memref<1x64xf32, #tpu.memory_space<vmem>>, %arg4: memref<32x64xbf16, #tpu.memory_space<vmem>>) attributes {dimension_semantics = [#tpu.dimension_semantics<parallel>], iteration_bounds = array<i64: 1>, scalar_prefetch = 0 : i64, scratch_operands = 0 : i64, tpu.core_type = #tpu.core_type<tc>, window_params = [{transform_indices = @transform_0, window_bounds = array<i64: 32, 32>}, {pipeline_mode = #tpu.pipeline_mode<synchronous>, transform_indices = @transform_1, window_bounds = array<i64: 32, 64>}, {pipeline_mode = #tpu.pipeline_mode<synchronous>, transform_indices = @transform_2, window_bounds = array<i64: 1, 64>}, {transform_indices = @transform_3, window_bounds = array<i64: 32, 64>}]} {
    %c0 = arith.constant 0 : index
    %c0_0 = arith.constant 0 : index
    %0 = vector.load %arg1[%c0, %c0_0] : memref<32x32xbf16, #tpu.memory_space<vmem>>, vector<32x32xbf16>
    %c0_1 = arith.constant 0 : index
    %c0_2 = arith.constant 0 : index
    %1 = vector.load %arg2[%c0_1, %c0_2] : memref<32x64xbf16, #tpu.memory_space<vmem>>, vector<32x64xbf16>
    %cst = arith.constant dense<0.000000e+00> : vector<32x64xf32>
    %2 = tpu.matmul %0, %1, %cst {dimension_numbers = #tpu.dot_dimension_numbers<[1], [0], [0], [1], [0, 0, 1, 1], [], []>} : vector<32x32xbf16>, vector<32x64xbf16>, vector<32x64xf32> -> vector<32x64xf32>
    %c0_3 = arith.constant 0 : index
    %c0_4 = arith.constant 0 : index
    %3 = vector.load %arg3[%c0_3, %c0_4] : memref<1x64xf32, #tpu.memory_space<vmem>>, vector<1x64xf32>
    %4 = vector.broadcast %3 : vector<1x64xf32> to vector<32x64xf32>
    %5 = arith.addf %2, %4 : vector<32x64xf32>
    %6 = arith.truncf %5 : vector<32x64xf32> to vector<32x64xbf16>
    %c0_5 = arith.constant 0 : index
    %c0_6 = arith.constant 0 : index
    %7 = vector.load %arg4[%c0_5, %c0_6] : memref<32x64xbf16, #tpu.memory_space<vmem>>, vector<32x64xbf16>
    tpu.vector_store %arg4[%c0_5, %c0_6], %6 {strides = array<i32>} : memref<32x64xbf16, #tpu.memory_space<vmem>>, vector<32x64xbf16>,
    return
  }
  func.func @transform_0(%arg0: i32) -> (i32, i32) {
    %c0_i32 = arith.constant 0 : i32
    %c0_i32_0 = arith.constant 0 : i32
    return %arg0, %c0_i32 : i32, i32
  }
  func.func @transform_1(%arg0: i32) -> (i32, i32) {
    %c0_i32 = arith.constant 0 : i32
    %c0_i32_0 = arith.constant 0 : i32
    %c0_i32_1 = arith.constant 0 : i32
    return %c0_i32, %c0_i32_0 : i32, i32
  }
  func.func @transform_2(%arg0: i32) -> (i32, i32) {
    %c0_i32 = arith.constant 0 : i32
    %c0_i32_0 = arith.constant 0 : i32
    %c0_i32_1 = arith.constant 0 : i32
    return %c0_i32, %c0_i32_0 : i32, i32
  }
  func.func @transform_3(%arg0: i32) -> (i32, i32) {
    %c0_i32 = arith.constant 0 : i32
    %c0_i32_0 = arith.constant 0 : i32
    return %arg0, %c0_i32 : i32, i32
  }
}

module attributes {stable_mosaic.version = 11 : i64} {
  func.func @_gemm_kernel_1k(%arg0: i32, %arg1: memref<32x288xbf16, #tpu.memory_space<vmem>>, %arg2: memref<288x32xbf16, #tpu.memory_space<vmem>>, %arg3: memref<32x32xbf16, #tpu.memory_space<vmem>>) attributes {dimension_semantics = [#tpu.dimension_semantics<parallel>], iteration_bounds = array<i64: 1>, scalar_prefetch = 0 : i64, scratch_operands = 0 : i64, tpu.core_type = #tpu.core_type<tc>, window_params = [{transform_indices = @transform_0, window_bounds = array<i64: 32, 288>}, {pipeline_mode = #tpu.pipeline_mode<synchronous>, transform_indices = @transform_1, window_bounds = array<i64: 288, 32>}, {transform_indices = @transform_2, window_bounds = array<i64: 32, 32>}]} {
    %c0 = arith.constant 0 : index
    %c0_0 = arith.constant 0 : index
    %0 = vector.load %arg1[%c0, %c0_0] : memref<32x288xbf16, #tpu.memory_space<vmem>>, vector<32x288xbf16>
    %c0_1 = arith.constant 0 : index
    %c0_2 = arith.constant 0 : index
    %1 = vector.load %arg2[%c0_1, %c0_2] : memref<288x32xbf16, #tpu.memory_space<vmem>>, vector<288x32xbf16>
    %cst = arith.constant dense<0.000000e+00> : vector<32x32xf32>
    %2 = tpu.matmul %0, %1, %cst {dimension_numbers = #tpu.dot_dimension_numbers<[1], [0], [0], [1], [0, 0, 1, 1], [], []>} : vector<32x288xbf16>, vector<288x32xbf16>, vector<32x32xf32> -> vector<32x32xf32>
    %cst_3 = arith.constant 2.000000e-01 : f32
    %3 = vector.broadcast %cst_3 : f32 to vector<32x32xf32>
    %4 = arith.mulf %3, %2 : vector<32x32xf32>
    %5 = arith.maximumf %2, %4 : vector<32x32xf32>
    %6 = arith.truncf %5 : vector<32x32xf32> to vector<32x32xbf16>
    %c0_4 = arith.constant 0 : index
    %c0_5 = arith.constant 0 : index
    %7 = vector.load %arg3[%c0_4, %c0_5] : memref<32x32xbf16, #tpu.memory_space<vmem>>, vector<32x32xbf16>
    tpu.vector_store %arg3[%c0_4, %c0_5], %6 {strides = array<i32>} : memref<32x32xbf16, #tpu.memory_space<vmem>>, vector<32x32xbf16>,
    return
  }
  func.func @transform_0(%arg0: i32) -> (i32, i32) {
    %c0_i32 = arith.constant 0 : i32
    %c0_i32_0 = arith.constant 0 : i32
    return %arg0, %c0_i32 : i32, i32
  }
  func.func @transform_1(%arg0: i32) -> (i32, i32) {
    %c0_i32 = arith.constant 0 : i32
    %c0_i32_0 = arith.constant 0 : i32
    %c0_i32_1 = arith.constant 0 : i32
    return %c0_i32, %c0_i32_0 : i32, i32
  }
  func.func @transform_2(%arg0: i32) -> (i32, i32) {
    %c0_i32 = arith.constant 0 : i32
    %c0_i32_0 = arith.constant 0 : i32
    return %arg0, %c0_i32 : i32, i32
  }
}

module attributes {stable_mosaic.version = 11 : i64} {
  func.func @_gemm_kernel_1k(%arg0: i32, %arg1: memref<128x288xbf16, #tpu.memory_space<vmem>>, %arg2: memref<288x16xbf16, #tpu.memory_space<vmem>>, %arg3: memref<128x16xbf16, #tpu.memory_space<vmem>>) attributes {dimension_semantics = [#tpu.dimension_semantics<parallel>], iteration_bounds = array<i64: 1>, scalar_prefetch = 0 : i64, scratch_operands = 0 : i64, tpu.core_type = #tpu.core_type<tc>, window_params = [{transform_indices = @transform_0, window_bounds = array<i64: 128, 288>}, {pipeline_mode = #tpu.pipeline_mode<synchronous>, transform_indices = @transform_1, window_bounds = array<i64: 288, 16>}, {transform_indices = @transform_2, window_bounds = array<i64: 128, 16>}]} {
    %c0 = arith.constant 0 : index
    %c0_0 = arith.constant 0 : index
    %0 = vector.load %arg1[%c0, %c0_0] : memref<128x288xbf16, #tpu.memory_space<vmem>>, vector<128x288xbf16>
    %c0_1 = arith.constant 0 : index
    %c0_2 = arith.constant 0 : index
    %1 = vector.load %arg2[%c0_1, %c0_2] : memref<288x16xbf16, #tpu.memory_space<vmem>>, vector<288x16xbf16>
    %cst = arith.constant dense<0.000000e+00> : vector<128x16xf32>
    %2 = tpu.matmul %0, %1, %cst {dimension_numbers = #tpu.dot_dimension_numbers<[1], [0], [0], [1], [0, 0, 1, 1], [], []>} : vector<128x288xbf16>, vector<288x16xbf16>, vector<128x16xf32> -> vector<128x16xf32>
    %cst_3 = arith.constant 2.000000e-01 : f32
    %3 = vector.broadcast %cst_3 : f32 to vector<128x16xf32>
    %4 = arith.mulf %3, %2 : vector<128x16xf32>
    %5 = arith.maximumf %2, %4 : vector<128x16xf32>
    %6 = arith.truncf %5 : vector<128x16xf32> to vector<128x16xbf16>
    %c0_4 = arith.constant 0 : index
    %c0_5 = arith.constant 0 : index
    %7 = vector.load %arg3[%c0_4, %c0_5] : memref<128x16xbf16, #tpu.memory_space<vmem>>, vector<128x16xbf16>
    tpu.vector_store %arg3[%c0_4, %c0_5], %6 {strides = array<i32>} : memref<128x16xbf16, #tpu.memory_space<vmem>>, vector<128x16xbf16>,
    return
  }
  func.func @transform_0(%arg0: i32) -> (i32, i32) {
    %c0_i32 = arith.constant 0 : i32
    %c0_i32_0 = arith.constant 0 : i32
    return %arg0, %c0_i32 : i32, i32
  }
  func.func @transform_1(%arg0: i32) -> (i32, i32) {
    %c0_i32 = arith.constant 0 : i32
    %c0_i32_0 = arith.constant 0 : i32
    %c0_i32_1 = arith.constant 0 : i32
    return %c0_i32, %c0_i32_0 : i32, i32
  }
  func.func @transform_2(%arg0: i32) -> (i32, i32) {
    %c0_i32 = arith.constant 0 : i32
    %c0_i32_0 = arith.constant 0 : i32
    return %arg0, %c0_i32 : i32, i32
  }
}

module attributes {stable_mosaic.version = 11 : i64} {
  func.func @_gemm_kernel_1k(%arg0: i32, %arg1: memref<128x16xbf16, #tpu.memory_space<vmem>>, %arg2: memref<16x32xbf16, #tpu.memory_space<vmem>>, %arg3: memref<1x32xf32, #tpu.memory_space<vmem>>, %arg4: memref<128x32xbf16, #tpu.memory_space<vmem>>) attributes {dimension_semantics = [#tpu.dimension_semantics<parallel>], iteration_bounds = array<i64: 1>, scalar_prefetch = 0 : i64, scratch_operands = 0 : i64, tpu.core_type = #tpu.core_type<tc>, window_params = [{transform_indices = @transform_0, window_bounds = array<i64: 128, 16>}, {pipeline_mode = #tpu.pipeline_mode<synchronous>, transform_indices = @transform_1, window_bounds = array<i64: 16, 32>}, {pipeline_mode = #tpu.pipeline_mode<synchronous>, transform_indices = @transform_2, window_bounds = array<i64: 1, 32>}, {transform_indices = @transform_3, window_bounds = array<i64: 128, 32>}]} {
    %c0 = arith.constant 0 : index
    %c0_0 = arith.constant 0 : index
    %0 = vector.load %arg1[%c0, %c0_0] : memref<128x16xbf16, #tpu.memory_space<vmem>>, vector<128x16xbf16>
    %c0_1 = arith.constant 0 : index
    %c0_2 = arith.constant 0 : index
    %1 = vector.load %arg2[%c0_1, %c0_2] : memref<16x32xbf16, #tpu.memory_space<vmem>>, vector<16x32xbf16>
    %cst = arith.constant dense<0.000000e+00> : vector<128x32xf32>
    %2 = tpu.matmul %0, %1, %cst {dimension_numbers = #tpu.dot_dimension_numbers<[1], [0], [0], [1], [0, 0, 1, 1], [], []>} : vector<128x16xbf16>, vector<16x32xbf16>, vector<128x32xf32> -> vector<128x32xf32>
    %c0_3 = arith.constant 0 : index
    %c0_4 = arith.constant 0 : index
    %3 = vector.load %arg3[%c0_3, %c0_4] : memref<1x32xf32, #tpu.memory_space<vmem>>, vector<1x32xf32>
    %4 = vector.broadcast %3 : vector<1x32xf32> to vector<128x32xf32>
    %5 = arith.addf %2, %4 : vector<128x32xf32>
    %6 = arith.truncf %5 : vector<128x32xf32> to vector<128x32xbf16>
    %c0_5 = arith.constant 0 : index
    %c0_6 = arith.constant 0 : index
    %7 = vector.load %arg4[%c0_5, %c0_6] : memref<128x32xbf16, #tpu.memory_space<vmem>>, vector<128x32xbf16>
    tpu.vector_store %arg4[%c0_5, %c0_6], %6 {strides = array<i32>} : memref<128x32xbf16, #tpu.memory_space<vmem>>, vector<128x32xbf16>,
    return
  }
  func.func @transform_0(%arg0: i32) -> (i32, i32) {
    %c0_i32 = arith.constant 0 : i32
    %c0_i32_0 = arith.constant 0 : i32
    return %arg0, %c0_i32 : i32, i32
  }
  func.func @transform_1(%arg0: i32) -> (i32, i32) {
    %c0_i32 = arith.constant 0 : i32
    %c0_i32_0 = arith.constant 0 : i32
    %c0_i32_1 = arith.constant 0 : i32
    return %c0_i32, %c0_i32_0 : i32, i32
  }
  func.func @transform_2(%arg0: i32) -> (i32, i32) {
    %c0_i32 = arith.constant 0 : i32
    %c0_i32_0 = arith.constant 0 : i32
    %c0_i32_1 = arith.constant 0 : i32
    return %c0_i32, %c0_i32_0 : i32, i32
  }
  func.func @transform_3(%arg0: i32) -> (i32, i32) {
    %c0_i32 = arith.constant 0 : i32
    %c0_i32_0 = arith.constant 0 : i32
    return %arg0, %c0_i32 : i32, i32
  }
}

module attributes {stable_mosaic.version = 11 : i64} {
  func.func @_gemm_kernel_1k(%arg0: i32, %arg1: memref<256x144xbf16, #tpu.memory_space<vmem>>, %arg2: memref<144x8xbf16, #tpu.memory_space<vmem>>, %arg3: memref<256x8xbf16, #tpu.memory_space<vmem>>) attributes {dimension_semantics = [#tpu.dimension_semantics<parallel>], iteration_bounds = array<i64: 2>, scalar_prefetch = 0 : i64, scratch_operands = 0 : i64, tpu.core_type = #tpu.core_type<tc>, window_params = [{transform_indices = @transform_0, window_bounds = array<i64: 256, 144>}, {pipeline_mode = #tpu.pipeline_mode<synchronous>, transform_indices = @transform_1, window_bounds = array<i64: 144, 8>}, {transform_indices = @transform_2, window_bounds = array<i64: 256, 8>}]} {
    %c0 = arith.constant 0 : index
    %c0_0 = arith.constant 0 : index
    %0 = vector.load %arg1[%c0, %c0_0] : memref<256x144xbf16, #tpu.memory_space<vmem>>, vector<256x144xbf16>
    %c0_1 = arith.constant 0 : index
    %c0_2 = arith.constant 0 : index
    %1 = vector.load %arg2[%c0_1, %c0_2] : memref<144x8xbf16, #tpu.memory_space<vmem>>, vector<144x8xbf16>
    %cst = arith.constant dense<0.000000e+00> : vector<256x8xf32>
    %2 = tpu.matmul %0, %1, %cst {dimension_numbers = #tpu.dot_dimension_numbers<[1], [0], [0], [1], [0, 0, 1, 1], [], []>} : vector<256x144xbf16>, vector<144x8xbf16>, vector<256x8xf32> -> vector<256x8xf32>
    %cst_3 = arith.constant 2.000000e-01 : f32
    %3 = vector.broadcast %cst_3 : f32 to vector<256x8xf32>
    %4 = arith.mulf %3, %2 : vector<256x8xf32>
    %5 = arith.maximumf %2, %4 : vector<256x8xf32>
    %6 = arith.truncf %5 : vector<256x8xf32> to vector<256x8xbf16>
    %c0_4 = arith.constant 0 : index
    %c0_5 = arith.constant 0 : index
    %7 = vector.load %arg3[%c0_4, %c0_5] : memref<256x8xbf16, #tpu.memory_space<vmem>>, vector<256x8xbf16>
    tpu.vector_store %arg3[%c0_4, %c0_5], %6 {strides = array<i32>} : memref<256x8xbf16, #tpu.memory_space<vmem>>, vector<256x8xbf16>,
    return
  }
  func.func @transform_0(%arg0: i32) -> (i32, i32) {
    %c0_i32 = arith.constant 0 : i32
    %c0_i32_0 = arith.constant 0 : i32
    return %arg0, %c0_i32 : i32, i32
  }
  func.func @transform_1(%arg0: i32) -> (i32, i32) {
    %c0_i32 = arith.constant 0 : i32
    %c0_i32_0 = arith.constant 0 : i32
    %c0_i32_1 = arith.constant 0 : i32
    return %c0_i32, %c0_i32_0 : i32, i32
  }
  func.func @transform_2(%arg0: i32) -> (i32, i32) {
    %c0_i32 = arith.constant 0 : i32
    %c0_i32_0 = arith.constant 0 : i32
    return %arg0, %c0_i32 : i32, i32
  }
}

module attributes {stable_mosaic.version = 11 : i64} {
  func.func @_gemm_kernel_1k(%arg0: i32, %arg1: memref<256x8xbf16, #tpu.memory_space<vmem>>, %arg2: memref<8x2xbf16, #tpu.memory_space<vmem>>, %arg3: memref<1x2xf32, #tpu.memory_space<vmem>>, %arg4: memref<256x2xf32, #tpu.memory_space<vmem>>) attributes {dimension_semantics = [#tpu.dimension_semantics<parallel>], iteration_bounds = array<i64: 2>, scalar_prefetch = 0 : i64, scratch_operands = 0 : i64, tpu.core_type = #tpu.core_type<tc>, window_params = [{transform_indices = @transform_0, window_bounds = array<i64: 256, 8>}, {pipeline_mode = #tpu.pipeline_mode<synchronous>, transform_indices = @transform_1, window_bounds = array<i64: 8, 2>}, {pipeline_mode = #tpu.pipeline_mode<synchronous>, transform_indices = @transform_2, window_bounds = array<i64: 1, 2>}, {transform_indices = @transform_3, window_bounds = array<i64: 256, 2>}]} {
    %c0 = arith.constant 0 : index
    %c0_0 = arith.constant 0 : index
    %0 = vector.load %arg1[%c0, %c0_0] : memref<256x8xbf16, #tpu.memory_space<vmem>>, vector<256x8xbf16>
    %c0_1 = arith.constant 0 : index
    %c0_2 = arith.constant 0 : index
    %1 = vector.load %arg2[%c0_1, %c0_2] : memref<8x2xbf16, #tpu.memory_space<vmem>>, vector<8x2xbf16>
    %cst = arith.constant dense<0.000000e+00> : vector<256x2xf32>
    %2 = tpu.matmul %0, %1, %cst {dimension_numbers = #tpu.dot_dimension_numbers<[1], [0], [0], [1], [0, 0, 1, 1], [], []>} : vector<256x8xbf16>, vector<8x2xbf16>, vector<256x2xf32> -> vector<256x2xf32>
    %c0_3 = arith.constant 0 : index
    %c0_4 = arith.constant 0 : index
    %3 = vector.load %arg3[%c0_3, %c0_4] : memref<1x2xf32, #tpu.memory_space<vmem>>, vector<1x2xf32>
    %4 = vector.broadcast %3 : vector<1x2xf32> to vector<256x2xf32>
    %5 = arith.addf %2, %4 : vector<256x2xf32>
    %cst_5 = arith.constant 0.000000e+00 : f32
    %6 = vector.broadcast %cst_5 : f32 to vector<256x2xf32>
    %7 = arith.subf %6, %5 : vector<256x2xf32>
    %8 = math.exp %7 : vector<256x2xf32>
    %cst_6 = arith.constant 1.000000e+00 : f32
    %9 = vector.broadcast %cst_6 : f32 to vector<256x2xf32>
    %10 = arith.addf %9, %8 : vector<256x2xf32>
    %11 = tpu.reciprocal %10 {approx = true} : vector<256x2xf32> -> vector<256x2xf32>
    %c0_7 = arith.constant 0 : index
    %c0_8 = arith.constant 0 : index
    %12 = vector.load %arg4[%c0_7, %c0_8] : memref<256x2xf32, #tpu.memory_space<vmem>>, vector<256x2xf32>
    tpu.vector_store %arg4[%c0_7, %c0_8], %11 {strides = array<i32>} : memref<256x2xf32, #tpu.memory_space<vmem>>, vector<256x2xf32>,
    return
  }
  func.func @transform_0(%arg0: i32) -> (i32, i32) {
    %c0_i32 = arith.constant 0 : i32
    %c0_i32_0 = arith.constant 0 : i32
    return %arg0, %c0_i32 : i32, i32
  }
  func.func @transform_1(%arg0: i32) -> (i32, i32) {
    %c0_i32 = arith.constant 0 : i32
    %c0_i32_0 = arith.constant 0 : i32
    %c0_i32_1 = arith.constant 0 : i32
    return %c0_i32, %c0_i32_0 : i32, i32
  }
  func.func @transform_2(%arg0: i32) -> (i32, i32) {
    %c0_i32 = arith.constant 0 : i32
    %c0_i32_0 = arith.constant 0 : i32
    %c0_i32_1 = arith.constant 0 : i32
    return %c0_i32, %c0_i32_0 : i32, i32
  }
  func.func @transform_3(%arg0: i32) -> (i32, i32) {
    %c0_i32 = arith.constant 0 : i32
    %c0_i32_0 = arith.constant 0 : i32
    return %arg0, %c0_i32 : i32, i32
  }
}

</mosaic_0001>

<llo_original>
// kernel: unet_forward.13
$region0: #{unet_forward.13}
  #allocation0 [shape = 'u32[]', space=smem, size = 0x4, offset = 0x4, fixed_abs, tag = 'smem constant byte address 0x4 - core index']
  #allocation1 [shape = 'u32[72,128]{1,0:T(1,128)}', space=vmem, size = 0x9000, scoped, tag = 'internal scratch']
  %s0 = inlined_call_operand.vmem [shape: bf16[512,18], index: 0, kind: input, shape index: {}]
  %s1 = inlined_call_operand.vmem [shape: bf16[18,8], index: 1, kind: input, shape index: {}]
  %s2 = inlined_call_operand.vmem [shape: bf16[512,8], index: 2, kind: output, shape index: {}]
  %s3 = sld [smem:[#allocation0]]
  $region41: #{unet_forward.13} parent=0
    _
  %s5 = ssub.s32 1, %s3
  %s6 = scalar_select 0, %s5, %s3
  loop: start=0, step=1, limit=4
  $region2: #{unet_forward.13} parent=0 // loop_pre_header
    _
  $region3: #{unet_forward.13} parent=0 // loop_header
    %s8 = sphi 0, %s12
    %p9 = scmp.ge.s32.totalorder %s8, 4
    %s18 = sphi 0, %s20
    %s21 = sphi 0, %s18
    %s22 = sphi 0, %s21
    %s38 = sphi 0, %s22
    %s42 = sphi 0, %s42
    %s44 = sphi 0, %s42
    %s45 = sphi 0, %s44
    %s59 = sphi 0, %s45
    %s65 = sphi 0, %s67
    %s68 = sphi 0, %s65
    %s69 = sphi 0, %s68
    %s85 = sphi 0, %s69
  $region4: #{unet_forward.13} parent=0 // loop_header_branch
    %11 = sbr.rel (%p9) target = $region8
  $region5: #{unet_forward.13} parent=0 // loop_body
    %s13 = ssub.s32 %s8, 1
    %s14 = ssub.s32 %s8, 2
    %s15 = sadd.s32 %s8, 1
    %s16 = ssub.s32 %s8, %s15
    %p17 = scmp.eq.s32.totalorder %s16, 0
    %s19 = sadd.s32 %s18, 1
    %s20 = scalar_select %p17, %s18, %s19
    %p23 = pneg %p17
    %p24 = scmp.eq.s32.totalorder %s8, 1
    %p25 = por %p23, %p24
    %p26 = scmp.ne.s32.totalorder %s18, %s21
    %p27 = scmp.eq.s32.totalorder %s8, 0
    %p28 = por %p26, %p27
    %p29 = scmp.ne.s32.totalorder %s18, %s21
    %p30 = scmp.eq.s32.totalorder %s13, 1
    %p31 = por %p29, %p30
    %p32 = scmp.ne.s32.totalorder %s21, %s22
    %p33 = scmp.eq.s32.totalorder %s13, 0
    %p34 = por %p32, %p33
    %p35 = scmp.ne.s32.totalorder %s21, %s22
    %p36 = scmp.eq.s32.totalorder %s14, 1
    %p37 = por %p35, %p36
    %p39 = scmp.ne.s32.totalorder %s22, %s38
    %p40 = scmp.eq.s32.totalorder %s14, 0
    %p41 = por %p39, %p40
    %s43 = sadd.s32 %s42, 1
    %p46 = scmp.eq.s32.totalorder %s8, 1
    %p47 = scmp.ne.s32.totalorder %s42, %s44
    %p48 = scmp.eq.s32.totalorder %s8, 0
    %p49 = por %p47, %p48
    %p50 = scmp.ne.s32.totalorder %s42, %s44
    %p51 = scmp.eq.s32.totalorder %s13, 1
    %p52 = por %p50, %p51
    %p53 = scmp.ne.s32.totalorder %s44, %s45
    %p54 = scmp.eq.s32.totalorder %s13, 0
    %p55 = por %p53, %p54
    %p56 = scmp.ne.s32.totalorder %s44, %s45
    %p57 = scmp.eq.s32.totalorder %s14, 1
    %p58 = por %p56, %p57
    %p60 = scmp.ne.s32.totalorder %s45, %s59
    %p61 = scmp.eq.s32.totalorder %s14, 0
    %p62 = por %p60, %p61
    %s63 = ssub.s32 %s8, %s15
    %p64 = scmp.eq.s32.totalorder %s63, 0
    %s66 = sadd.s32 %s65, 1
    %s67 = scalar_select %p64, %s65, %s66
    %p70 = pneg %p64
    %p71 = scmp.eq.s32.totalorder %s8, 1
    %p72 = por %p70, %p71
    %p73 = scmp.ne.s32.totalorder %s65, %s68
    %p74 = scmp.eq.s32.totalorder %s8, 0
    %p75 = por %p73, %p74
    %p76 = scmp.ne.s32.totalorder %s65, %s68
    %p77 = scmp.eq.s32.totalorder %s13, 1
    %p78 = por %p76, %p77
    %p79 = scmp.ne.s32.totalorder %s68, %s69
    %p80 = scmp.eq.s32.totalorder %s13, 0
    %p81 = por %p79, %p80
    %p82 = scmp.ne.s32.totalorder %s68, %s69
    %p83 = scmp.eq.s32.totalorder %s14, 1
    %p84 = por %p82, %p83
    %p86 = scmp.ne.s32.totalorder %s69, %s85
    %p87 = scmp.eq.s32.totalorder %s14, 0
    %p88 = por %p86, %p87
    %p89 = scmp.le.s32.totalorder 1, %s8
    %p90 = scmp.lt.s32.totalorder %s8, 3
    %p91 = pnand %p89, %p90
    %p92 = pneg %p91
    // Predicated region
    $region9: #{unet_forward.13} parent=5 // pred_check
      _
    $region10: #{unet_forward.13} parent=5 // pred_check_branch
      %94 = sbr.rel (%p91) target = $region12
    $region11: #{unet_forward.13} parent=5 // pred_region
      %s95 = ssub.s32 %s8, 1
      // Predicated region
      $region13: #{unet_forward.13} parent=11 // pred_check
        %p96 = pneg %p55
      $region14: #{unet_forward.13} parent=11 // pred_check_branch
        %98 = sbr.rel (%p96) target = $region16
      $region15: #{unet_forward.13} parent=11 // pred_region
        _
      $region16: #{unet_forward.13} parent=11 // pred_fallthru
        _
    $region12: #{unet_forward.13} parent=5 // pred_fallthru
      _
    %p99 = scmp.lt.s32.totalorder %s8, 2
    // Predicated region
    $region17: #{unet_forward.13} parent=5 // pred_check
      %p100 = pneg %p99
    $region18: #{unet_forward.13} parent=5 // pred_check_branch
      %102 = sbr.rel (%p100) target = $region20
    $region19: #{unet_forward.13} parent=5 // pred_region
      // Predicated region
      $region21: #{unet_forward.13} parent=19 // pred_check
        %p103 = pneg %p28
      $region22: #{unet_forward.13} parent=19 // pred_check_branch
        %105 = sbr.rel (%p103) target = $region24
      $region23: #{unet_forward.13} parent=19 // pred_region
        %s106 = smul.u32 32, %s8
        %p107 = scmp.lt.s32.totalorder %s106, 63
        %s108 = scalar_select %p107, %s106, 63
        %s109 = smul.addr %s108, 4
        %s110 = scalar_lea.vmem %s0, %s109
        %s111 = smul.u32 32, %s8
      $region24: #{unet_forward.13} parent=19 // pred_fallthru
        _
    $region20: #{unet_forward.13} parent=5 // pred_fallthru
      _
    %p112 = scmp.le.s32.totalorder 1, %s8
    %p113 = scmp.lt.s32.totalorder %s8, 3
    %p114 = pnand %p112, %p113
    %p115 = pneg %p114
    // Predicated region
    $region25: #{unet_forward.13} parent=5 // pred_check
      _
    $region26: #{unet_forward.13} parent=5 // pred_check_branch
      %117 = sbr.rel (%p114) target = $region28
    $region27: #{unet_forward.13} parent=5 // pred_region
      %s118 = ssub.s32 %s8, 1
      %s119 = smul.u32 32, %s13
      %p120 = scmp.lt.s32.totalorder %s119, 63
      %s121 = scalar_select %p120, %s119, 63
      %s122 = smul.addr %s121, 4
      %s123 = scalar_lea.vmem %s0, %s122
      %p124 = pneg %p34
      %p125 = pneg %p31
      %p126 = pneg %p55
      %p127 = pneg %p52
      %p128 = pneg %p81
      %p129 = pneg %p78
      %s130 = smul.u32 32, %s13
      %p131 = scmp.lt.s32.totalorder %s130, 63
      %s132 = scalar_select %p131, %s130, 63
      %s133 = smul.addr %s132, 4
      %s134 = scalar_lea.vmem %s2, %s133
      %s135 = smul.u32 32, %s13
      %p136 = scmp.lt.s32.totalorder %s135, 63
      %s137 = scalar_select %p136, %s135, 63
      %s138 = smul.addr %s137, 4
      %s139 = scalar_lea.vmem %s0, %s138
      %s140 = smul.u32 32, %s13
      %s141 = smul.u32 32, %s13
      %p142 = scmp.lt.s32.totalorder %s141, 63
      %s143 = scalar_select %p142, %s141, 63
      %s144 = smul.addr %s143, 4
      %s145 = scalar_lea.vmem %s2, %s144
      %s146 = smul.u32 32, %s13
      %v148 = vld [vmem:[%s139] sm:$0xf]
      %v149 = vld [vmem:[%s139 + $0x4] sm:$0xf]
      %v150 = vld [vmem:[%s139 + $0x8] sm:$0xf]
      %v151 = vld [vmem:[%s139 + $0xc] sm:$0xf]
      %v152 = vld [vmem:[%s139 + $0x10] sm:$0xf]
      %v153 = vld [vmem:[%s139 + $0x14] sm:$0xf]
      %v154 = vld [vmem:[%s139 + $0x18] sm:$0xf]
      %v155 = vld [vmem:[%s139 + $0x1c] sm:$0xf]
      %v156 = vld [vmem:[%s139 + $0x20] sm:$0xf]
      %v157 = vld [vmem:[%s139 + $0x24] sm:$0xf]
      %v158 = vld [vmem:[%s139 + $0x28] sm:$0xf]
      %v159 = vld [vmem:[%s139 + $0x2c] sm:$0xf]
      %v160 = vld [vmem:[%s139 + $0x30] sm:$0xf]
      %v161 = vld [vmem:[%s139 + $0x34] sm:$0xf]
      %v162 = vld [vmem:[%s139 + $0x38] sm:$0xf]
      %v163 = vld [vmem:[%s139 + $0x3c] sm:$0xf]
      %v164 = vld [vmem:[%s139 + $0x40] sm:$0xf]
      %v165 = vld [vmem:[%s139 + $0x44] sm:$0xf]
      %v166 = vld [vmem:[%s139 + $0x48] sm:$0xf]
      %v167 = vld [vmem:[%s139 + $0x4c] sm:$0xf]
      %v168 = vld [vmem:[%s139 + $0x50] sm:$0xf]
      %v169 = vld [vmem:[%s139 + $0x54] sm:$0xf]
      %v170 = vld [vmem:[%s139 + $0x58] sm:$0xf]
      %v171 = vld [vmem:[%s139 + $0x5c] sm:$0xf]
      %v172 = vld [vmem:[%s139 + $0x60] sm:$0xf]
      %v173 = vld [vmem:[%s139 + $0x64] sm:$0xf]
      %v174 = vld [vmem:[%s139 + $0x68] sm:$0xf]
      %v175 = vld [vmem:[%s139 + $0x6c] sm:$0xf]
      %v176 = vld [vmem:[%s139 + $0x70] sm:$0xf]
      %v177 = vld [vmem:[%s139 + $0x74] sm:$0xf]
      %v178 = vld [vmem:[%s139 + $0x78] sm:$0xf]
      %v179 = vld [vmem:[%s139 + $0x7c] sm:$0xf]
      %v180 = vld [vmem:[%s1] sm:$0xf]
      %v181 = vld [vmem:[%s1 + $0x4] sm:$0xf]
      %v182 = vld [vmem:[%s1 + $0x8] sm:$0x1]
      %v215 = vunpack.c.l.b16 %v148
      %v216 = vunpack.c.l.b16 %v149
      %v217 = vunpack.c.l.b16 %v150
      %v218 = vunpack.c.l.b16 %v151
      %v219 = vunpack.c.l.b16 %v152
      %v220 = vunpack.c.l.b16 %v153
      %v221 = vunpack.c.l.b16 %v154
      %v222 = vunpack.c.l.b16 %v155
      %v223 = vunpack.c.l.b16 %v156
      %v224 = vunpack.c.l.b16 %v157
      %v225 = vunpack.c.l.b16 %v158
      %v226 = vunpack.c.l.b16 %v159
      %v227 = vunpack.c.l.b16 %v160
      %v228 = vunpack.c.l.b16 %v161
      %v229 = vunpack.c.l.b16 %v162
      %v230 = vunpack.c.l.b16 %v163
      %v231 = vunpack.c.l.b16 %v164
      %v232 = vunpack.c.l.b16 %v165
      %v233 = vunpack.c.l.b16 %v166
      %v234 = vunpack.c.l.b16 %v167
      %v235 = vunpack.c.l.b16 %v168
      %v236 = vunpack.c.l.b16 %v169
      %v237 = vunpack.c.l.b16 %v170
      %v238 = vunpack.c.l.b16 %v171
      %v239 = vunpack.c.l.b16 %v172
      %v240 = vunpack.c.l.b16 %v173
      %v241 = vunpack.c.l.b16 %v174
      %v242 = vunpack.c.l.b16 %v175
      %v243 = vunpack.c.l.b16 %v176
      %v244 = vunpack.c.l.b16 %v177
      %v245 = vunpack.c.l.b16 %v178
      %v246 = vunpack.c.l.b16 %v179
      %v247 = vpack.c.b16 %v216, %v215
      %v248 = vpack.c.b16 %v218, %v217
      %v249 = vpack.c.b16 %v220, %v219
      %v250 = vpack.c.b16 %v222, %v221
      %v251 = vpack.c.b16 %v224, %v223
      %v252 = vpack.c.b16 %v226, %v225
      %v253 = vpack.c.b16 %v228, %v227
      %v254 = vpack.c.b16 %v230, %v229
      %v255 = vpack.c.b16 %v232, %v231
      %v256 = vpack.c.b16 %v234, %v233
      %v257 = vpack.c.b16 %v236, %v235
      %v258 = vpack.c.b16 %v238, %v237
      %v259 = vpack.c.b16 %v240, %v239
      %v260 = vpack.c.b16 %v242, %v241
      %v261 = vpack.c.b16 %v244, %v243
      %v262 = vpack.c.b16 %v246, %v245
      %v266 = vunpack.c.l.b16 %v180
      %v267 = vunpack.c.l.b16 %v181
      %v268 = vunpack.c.l.b16 %v182
      %v269 = vpack.c.b16 %v267, %v266
      %v270 = vpack.c.b16 %v268, %v268
      %vm272 = vcmask 146432
      %v274 = vsel %vm272, %v247, 0
      %v277 = vsel %vm272, %v248, 0
      %v280 = vsel %vm272, %v249, 0
      %v283 = vsel %vm272, %v250, 0
      %v286 = vsel %vm272, %v251, 0
      %v289 = vsel %vm272, %v252, 0
      %v292 = vsel %vm272, %v253, 0
      %v295 = vsel %vm272, %v254, 0
      %v298 = vsel %vm272, %v255, 0
      %v301 = vsel %vm272, %v256, 0
      %v304 = vsel %vm272, %v257, 0
      %v307 = vsel %vm272, %v258, 0
      %v310 = vsel %vm272, %v259, 0
      %v313 = vsel %vm272, %v260, 0
      %v316 = vsel %vm272, %v261, 0
      %v319 = vsel %vm272, %v262, 0
      %vm321 = vcmask 1040384
      %v323 = vsel %vm321, %v270, 0
      %325 = vmatpush.bf16.msra.mxu0 0
      %326 = vmatpush.bf16.msra.mxu0 0
      %327 = vmatpush.bf16.msra.mxu0 0
      %328 = vmatpush.bf16.msra.mxu0 0
      %329 = vmatpush.bf16.msra.mxu0 0
      %330 = vmatpush.bf16.msra.mxu0 0
      %331 = vmatpush.bf16.msra.mxu0 %v323
      %332 = vmatpush.bf16.msra.mxu0 %v269
      %333 = vmatmul.bf16.gmra.mxu0 %v274
      %v334 = vpop.f32.mrf.mxu0
      %v335 = vadd.f32 0.0, %v334
      %v336 = vpop.f32.mrf.mxu0
      %v337 = vadd.f32 0.0, %v336
      %338 = vmatmul.bf16.gmra.mxu0 %v277
      %v339 = vpop.f32.mrf.mxu0
      %v340 = vadd.f32 0.0, %v339
      %v341 = vpop.f32.mrf.mxu0
      %v342 = vadd.f32 0.0, %v341
      %343 = vmatmul.bf16.gmra.mxu0 %v280
      %v344 = vpop.f32.mrf.mxu0
      %v345 = vadd.f32 0.0, %v344
      %v346 = vpop.f32.mrf.mxu0
      %v347 = vadd.f32 0.0, %v346
      %348 = vmatmul.bf16.gmra.mxu0 %v283
      %v349 = vpop.f32.mrf.mxu0
      %v350 = vadd.f32 0.0, %v349
      %v351 = vpop.f32.mrf.mxu0
      %v352 = vadd.f32 0.0, %v351
      %353 = vmatmul.bf16.gmra.mxu0 %v286
      %v354 = vpop.f32.mrf.mxu0
      %v355 = vadd.f32 0.0, %v354
      %v356 = vpop.f32.mrf.mxu0
      %v357 = vadd.f32 0.0, %v356
      %358 = vmatmul.bf16.gmra.mxu0 %v289
      %v359 = vpop.f32.mrf.mxu0
      %v360 = vadd.f32 0.0, %v359
      %v361 = vpop.f32.mrf.mxu0
      %v362 = vadd.f32 0.0, %v361
      %363 = vmatmul.bf16.gmra.mxu0 %v292
      %v364 = vpop.f32.mrf.mxu0
      %v365 = vadd.f32 0.0, %v364
      %v366 = vpop.f32.mrf.mxu0
      %v367 = vadd.f32 0.0, %v366
      %368 = vmatmul.bf16.gmra.mxu0 %v295
      %v369 = vpop.f32.mrf.mxu0
      %v370 = vadd.f32 0.0, %v369
      %v371 = vpop.f32.mrf.mxu0
      %v372 = vadd.f32 0.0, %v371
      %373 = vmatmul.bf16.gmra.mxu0 %v298
      %v374 = vpop.f32.mrf.mxu0
      %v375 = vadd.f32 0.0, %v374
      %v376 = vpop.f32.mrf.mxu0
      %v377 = vadd.f32 0.0, %v376
      %378 = vmatmul.bf16.gmra.mxu0 %v301
      %v379 = vpop.f32.mrf.mxu0
      %v380 = vadd.f32 0.0, %v379
      %v381 = vpop.f32.mrf.mxu0
      %v382 = vadd.f32 0.0, %v381
      %383 = vmatmul.bf16.gmra.mxu0 %v304
      %v384 = vpop.f32.mrf.mxu0
      %v385 = vadd.f32 0.0, %v384
      %v386 = vpop.f32.mrf.mxu0
      %v387 = vadd.f32 0.0, %v386
      %388 = vmatmul.bf16.gmra.mxu0 %v307
      %v389 = vpop.f32.mrf.mxu0
      %v390 = vadd.f32 0.0, %v389
      %v391 = vpop.f32.mrf.mxu0
      %v392 = vadd.f32 0.0, %v391
      %393 = vmatmul.bf16.gmra.mxu0 %v310
      %v394 = vpop.f32.mrf.mxu0
      %v395 = vadd.f32 0.0, %v394
      %v396 = vpop.f32.mrf.mxu0
      %v397 = vadd.f32 0.0, %v396
      %398 = vmatmul.bf16.gmra.mxu0 %v313
      %v399 = vpop.f32.mrf.mxu0
      %v400 = vadd.f32 0.0, %v399
      %v401 = vpop.f32.mrf.mxu0
      %v402 = vadd.f32 0.0, %v401
      %403 = vmatmul.bf16.gmra.mxu0 %v316
      %v404 = vpop.f32.mrf.mxu0
      %v405 = vadd.f32 0.0, %v404
      %v406 = vpop.f32.mrf.mxu0
      %v407 = vadd.f32 0.0, %v406
      %408 = vmatmul.bf16.gmra.mxu0 %v319
      %v409 = vpop.f32.mrf.mxu0
      %v410 = vadd.f32 0.0, %v409
      %v411 = vpop.f32.mrf.mxu0
      %v412 = vadd.f32 0.0, %v411
      %413 = vdwg.mxu0
      %v414 = vmul.f32 %v335, 0.2
      %v415 = vmul.f32 %v337, 0.2
      %v416 = vmul.f32 %v340, 0.2
      %v417 = vmul.f32 %v342, 0.2
      %v418 = vmul.f32 %v345, 0.2
      %v419 = vmul.f32 %v347, 0.2
      %v420 = vmul.f32 %v350, 0.2
      %v421 = vmul.f32 %v352, 0.2
      %v422 = vmul.f32 %v355, 0.2
      %v423 = vmul.f32 %v357, 0.2
      %v424 = vmul.f32 %v360, 0.2
      %v425 = vmul.f32 %v362, 0.2
      %v426 = vmul.f32 %v365, 0.2
      %v427 = vmul.f32 %v367, 0.2
      %v428 = vmul.f32 %v370, 0.2
      %v429 = vmul.f32 %v372, 0.2
      %v430 = vmul.f32 %v375, 0.2
      %v431 = vmul.f32 %v377, 0.2
      %v432 = vmul.f32 %v380, 0.2
      %v433 = vmul.f32 %v382, 0.2
      %v434 = vmul.f32 %v385, 0.2
      %v435 = vmul.f32 %v387, 0.2
      %v436 = vmul.f32 %v390, 0.2
      %v437 = vmul.f32 %v392, 0.2
      %v438 = vmul.f32 %v395, 0.2
      %v439 = vmul.f32 %v397, 0.2
      %v440 = vmul.f32 %v400, 0.2
      %v441 = vmul.f32 %v402, 0.2
      %v442 = vmul.f32 %v405, 0.2
      %v443 = vmul.f32 %v407, 0.2
      %v444 = vmul.f32 %v410, 0.2
      %v445 = vmul.f32 %v412, 0.2
      %v446 = vmax.f32 %v335, %v414
      %v447 = vmax.f32 %v337, %v415
      %v448 = vmax.f32 %v340, %v416
      %v449 = vmax.f32 %v342, %v417
      %v450 = vmax.f32 %v345, %v418
      %v451 = vmax.f32 %v347, %v419
      %v452 = vmax.f32 %v350, %v420
      %v453 = vmax.f32 %v352, %v421
      %v454 = vmax.f32 %v355, %v422
      %v455 = vmax.f32 %v357, %v423
      %v456 = vmax.f32 %v360, %v424
      %v457 = vmax.f32 %v362, %v425
      %v458 = vmax.f32 %v365, %v426
      %v459 = vmax.f32 %v367, %v427
      %v460 = vmax.f32 %v370, %v428
      %v461 = vmax.f32 %v372, %v429
      %v462 = vmax.f32 %v375, %v430
      %v463 = vmax.f32 %v377, %v431
      %v464 = vmax.f32 %v380, %v432
      %v465 = vmax.f32 %v382, %v433
      %v466 = vmax.f32 %v385, %v434
      %v467 = vmax.f32 %v387, %v435
      %v468 = vmax.f32 %v390, %v436
      %v469 = vmax.f32 %v392, %v437
      %v470 = vmax.f32 %v395, %v438
      %v471 = vmax.f32 %v397, %v439
      %v472 = vmax.f32 %v400, %v440
      %v473 = vmax.f32 %v402, %v441
      %v474 = vmax.f32 %v405, %v442
      %v475 = vmax.f32 %v407, %v443
      %v476 = vmax.f32 %v410, %v444
      %v477 = vmax.f32 %v412, %v445
      %v478 = vpack.c.bf16 %v446, %v446
      %v479 = vpack.c.bf16 %v447, %v447
      %v480 = vpack.c.bf16 %v448, %v448
      %v481 = vpack.c.bf16 %v449, %v449
      %v482 = vpack.c.bf16 %v450, %v450
      %v483 = vpack.c.bf16 %v451, %v451
      %v484 = vpack.c.bf16 %v452, %v452
      %v485 = vpack.c.bf16 %v453, %v453
      %v486 = vpack.c.bf16 %v454, %v454
      %v487 = vpack.c.bf16 %v455, %v455
      %v488 = vpack.c.bf16 %v456, %v456
      %v489 = vpack.c.bf16 %v457, %v457
      %v490 = vpack.c.bf16 %v458, %v458
      %v491 = vpack.c.bf16 %v459, %v459
      %v492 = vpack.c.bf16 %v460, %v460
      %v493 = vpack.c.bf16 %v461, %v461
      %v494 = vpack.c.bf16 %v462, %v462
      %v495 = vpack.c.bf16 %v463, %v463
      %v496 = vpack.c.bf16 %v464, %v464
      %v497 = vpack.c.bf16 %v465, %v465
      %v498 = vpack.c.bf16 %v466, %v466
      %v499 = vpack.c.bf16 %v467, %v467
      %v500 = vpack.c.bf16 %v468, %v468
      %v501 = vpack.c.bf16 %v469, %v469
      %v502 = vpack.c.bf16 %v470, %v470
      %v503 = vpack.c.bf16 %v471, %v471
      %v504 = vpack.c.bf16 %v472, %v472
      %v505 = vpack.c.bf16 %v473, %v473
      %v506 = vpack.c.bf16 %v474, %v474
      %v507 = vpack.c.bf16 %v475, %v475
      %v508 = vpack.c.bf16 %v476, %v476
      %v509 = vpack.c.bf16 %v477, %v477
      %vm510 = vcmask 60416
      %511 = vst.msk [vmem:[%s145] sm:$0xf] %vm510, %v478
      %512 = vst.msk [vmem:[%s145 + $0x4] sm:$0xf] %vm510, %v479
      %513 = vst.msk [vmem:[%s145 + $0x8] sm:$0xf] %vm510, %v480
      %514 = vst.msk [vmem:[%s145 + $0xc] sm:$0xf] %vm510, %v481
      %515 = vst.msk [vmem:[%s145 + $0x10] sm:$0xf] %vm510, %v482
      %516 = vst.msk [vmem:[%s145 + $0x14] sm:$0xf] %vm510, %v483
      %517 = vst.msk [vmem:[%s145 + $0x18] sm:$0xf] %vm510, %v484
      %518 = vst.msk [vmem:[%s145 + $0x1c] sm:$0xf] %vm510, %v485
      %519 = vst.msk [vmem:[%s145 + $0x20] sm:$0xf] %vm510, %v486
      %520 = vst.msk [vmem:[%s145 + $0x24] sm:$0xf] %vm510, %v487
      %521 = vst.msk [vmem:[%s145 + $0x28] sm:$0xf] %vm510, %v488
      %522 = vst.msk [vmem:[%s145 + $0x2c] sm:$0xf] %vm510, %v489
      %523 = vst.msk [vmem:[%s145 + $0x30] sm:$0xf] %vm510, %v490
      %524 = vst.msk [vmem:[%s145 + $0x34] sm:$0xf] %vm510, %v491
      %525 = vst.msk [vmem:[%s145 + $0x38] sm:$0xf] %vm510, %v492
      %526 = vst.msk [vmem:[%s145 + $0x3c] sm:$0xf] %vm510, %v493
      %527 = vst.msk [vmem:[%s145 + $0x40] sm:$0xf] %vm510, %v494
      %528 = vst.msk [vmem:[%s145 + $0x44] sm:$0xf] %vm510, %v495
      %529 = vst.msk [vmem:[%s145 + $0x48] sm:$0xf] %vm510, %v496
      %530 = vst.msk [vmem:[%s145 + $0x4c] sm:$0xf] %vm510, %v497
      %531 = vst.msk [vmem:[%s145 + $0x50] sm:$0xf] %vm510, %v498
      %532 = vst.msk [vmem:[%s145 + $0x54] sm:$0xf] %vm510, %v499
      %533 = vst.msk [vmem:[%s145 + $0x58] sm:$0xf] %vm510, %v500
      %534 = vst.msk [vmem:[%s145 + $0x5c] sm:$0xf] %vm510, %v501
      %535 = vst.msk [vmem:[%s145 + $0x60] sm:$0xf] %vm510, %v502
      %536 = vst.msk [vmem:[%s145 + $0x64] sm:$0xf] %vm510, %v503
      %537 = vst.msk [vmem:[%s145 + $0x68] sm:$0xf] %vm510, %v504
      %538 = vst.msk [vmem:[%s145 + $0x6c] sm:$0xf] %vm510, %v505
      %539 = vst.msk [vmem:[%s145 + $0x70] sm:$0xf] %vm510, %v506
      %540 = vst.msk [vmem:[%s145 + $0x74] sm:$0xf] %vm510, %v507
      %541 = vst.msk [vmem:[%s145 + $0x78] sm:$0xf] %vm510, %v508
      %542 = vst.msk [vmem:[%s145 + $0x7c] sm:$0xf] %vm510, %v509
      %s543 = smul.u32 32, %s13
      %p544 = scmp.lt.s32.totalorder %s543, 63
      %s545 = scalar_select %p544, %s543, 63
      %s546 = smul.addr %s545, 4
      %s547 = scalar_lea.vmem %s2, %s546
      // Predicated region
      $region29: #{unet_forward.13} parent=27 // pred_check
        %p548 = pneg %p78
      $region30: #{unet_forward.13} parent=27 // pred_check_branch
        %550 = sbr.rel (%p548) target = $region32
      $region31: #{unet_forward.13} parent=27 // pred_region
        %s551 = smul.u32 32, %s13
      $region32: #{unet_forward.13} parent=27 // pred_fallthru
        _
    $region28: #{unet_forward.13} parent=5 // pred_fallthru
      _
    %p552 = scmp.le.s32.totalorder 2, %s8
    // Predicated region
    $region33: #{unet_forward.13} parent=5 // pred_check
      %p553 = pneg %p552
    $region34: #{unet_forward.13} parent=5 // pred_check_branch
      %555 = sbr.rel (%p553) target = $region36
    $region35: #{unet_forward.13} parent=5 // pred_region
      %s556 = ssub.s32 %s8, 2
      // Predicated region
      $region37: #{unet_forward.13} parent=35 // pred_check
        %p557 = pneg %p84
      $region38: #{unet_forward.13} parent=35 // pred_check_branch
        %559 = sbr.rel (%p557) target = $region40
      $region39: #{unet_forward.13} parent=35 // pred_region
        %s560 = smul.u32 32, %s14
        %p561 = scmp.lt.s32.totalorder %s560, 63
        %s562 = scalar_select %p561, %s560, 63
        %s563 = smul.addr %s562, 4
        %s564 = scalar_lea.vmem %s2, %s563
      $region40: #{unet_forward.13} parent=35 // pred_fallthru
        _
    $region36: #{unet_forward.13} parent=5 // pred_fallthru
      _
  $region6: #{unet_forward.13} parent=0 // loop_footer
    %s12 = sadd.s32 1, %s8
  $region7: #{unet_forward.13} parent=0 // loop_footer_branch
    %7 = sbr.rel target = $region3
  $region8: #{unet_forward.13} parent=0 // loop_exit
    _

// kernel: unet_forward.14
$region0: #{unet_forward.14}
  #allocation0 [shape = 'u32[]', space=smem, size = 0x4, offset = 0x4, fixed_abs, tag = 'smem constant byte address 0x4 - core index']
  #allocation1 [shape = 'u32[72,128]{1,0:T(1,128)}', space=vmem, size = 0x9000, scoped, tag = 'internal scratch']
  %s0 = inlined_call_operand.vmem [shape: bf16[512,72], index: 0, kind: input, shape index: {}]
  %s1 = inlined_call_operand.vmem [shape: bf16[72,8], index: 1, kind: input, shape index: {}]
  %s2 = inlined_call_operand.vmem [shape: bf16[512,8], index: 2, kind: output, shape index: {}]
  %s3 = sld [smem:[#allocation0]]
  $region41: #{unet_forward.14} parent=0
    _
  %s5 = ssub.s32 1, %s3
  %s6 = scalar_select 0, %s5, %s3
  loop: start=0, step=1, limit=4
  $region2: #{unet_forward.14} parent=0 // loop_pre_header
    _
  $region3: #{unet_forward.14} parent=0 // loop_header
    %s8 = sphi 0, %s12
    %p9 = scmp.ge.s32.totalorder %s8, 4
    %s18 = sphi 0, %s20
    %s21 = sphi 0, %s18
    %s22 = sphi 0, %s21
    %s38 = sphi 0, %s22
    %s42 = sphi 0, %s42
    %s44 = sphi 0, %s42
    %s45 = sphi 0, %s44
    %s59 = sphi 0, %s45
    %s65 = sphi 0, %s67
    %s68 = sphi 0, %s65
    %s69 = sphi 0, %s68
    %s85 = sphi 0, %s69
  $region4: #{unet_forward.14} parent=0 // loop_header_branch
    %11 = sbr.rel (%p9) target = $region8
  $region5: #{unet_forward.14} parent=0 // loop_body
    %s13 = ssub.s32 %s8, 1
    %s14 = ssub.s32 %s8, 2
    %s15 = sadd.s32 %s8, 1
    %s16 = ssub.s32 %s8, %s15
    %p17 = scmp.eq.s32.totalorder %s16, 0
    %s19 = sadd.s32 %s18, 1
    %s20 = scalar_select %p17, %s18, %s19
    %p23 = pneg %p17
    %p24 = scmp.eq.s32.totalorder %s8, 1
    %p25 = por %p23, %p24
    %p26 = scmp.ne.s32.totalorder %s18, %s21
    %p27 = scmp.eq.s32.totalorder %s8, 0
    %p28 = por %p26, %p27
    %p29 = scmp.ne.s32.totalorder %s18, %s21
    %p30 = scmp.eq.s32.totalorder %s13, 1
    %p31 = por %p29, %p30
    %p32 = scmp.ne.s32.totalorder %s21, %s22
    %p33 = scmp.eq.s32.totalorder %s13, 0
    %p34 = por %p32, %p33
    %p35 = scmp.ne.s32.totalorder %s21, %s22
    %p36 = scmp.eq.s32.totalorder %s14, 1
    %p37 = por %p35, %p36
    %p39 = scmp.ne.s32.totalorder %s22, %s38
    %p40 = scmp.eq.s32.totalorder %s14, 0
    %p41 = por %p39, %p40
    %s43 = sadd.s32 %s42, 1
    %p46 = scmp.eq.s32.totalorder %s8, 1
    %p47 = scmp.ne.s32.totalorder %s42, %s44
    %p48 = scmp.eq.s32.totalorder %s8, 0
    %p49 = por %p47, %p48
    %p50 = scmp.ne.s32.totalorder %s42, %s44
    %p51 = scmp.eq.s32.totalorder %s13, 1
    %p52 = por %p50, %p51
    %p53 = scmp.ne.s32.totalorder %s44, %s45
    %p54 = scmp.eq.s32.totalorder %s13, 0
    %p55 = por %p53, %p54
    %p56 = scmp.ne.s32.totalorder %s44, %s45
    %p57 = scmp.eq.s32.totalorder %s14, 1
    %p58 = por %p56, %p57
    %p60 = scmp.ne.s32.totalorder %s45, %s59
    %p61 = scmp.eq.s32.totalorder %s14, 0
    %p62 = por %p60, %p61
    %s63 = ssub.s32 %s8, %s15
    %p64 = scmp.eq.s32.totalorder %s63, 0
    %s66 = sadd.s32 %s65, 1
    %s67 = scalar_select %p64, %s65, %s66
    %p70 = pneg %p64
    %p71 = scmp.eq.s32.totalorder %s8, 1
    %p72 = por %p70, %p71
    %p73 = scmp.ne.s32.totalorder %s65, %s68
    %p74 = scmp.eq.s32.totalorder %s8, 0
    %p75 = por %p73, %p74
    %p76 = scmp.ne.s32.totalorder %s65, %s68
    %p77 = scmp.eq.s32.totalorder %s13, 1
    %p78 = por %p76, %p77
    %p79 = scmp.ne.s32.totalorder %s68, %s69
    %p80 = scmp.eq.s32.totalorder %s13, 0
    %p81 = por %p79, %p80
    %p82 = scmp.ne.s32.totalorder %s68, %s69
    %p83 = scmp.eq.s32.totalorder %s14, 1
    %p84 = por %p82, %p83
    %p86 = scmp.ne.s32.totalorder %s69, %s85
    %p87 = scmp.eq.s32.totalorder %s14, 0
    %p88 = por %p86, %p87
    %p89 = scmp.le.s32.totalorder 1, %s8
    %p90 = scmp.lt.s32.totalorder %s8, 3
    %p91 = pnand %p89, %p90
    %p92 = pneg %p91
    // Predicated region
    $region9: #{unet_forward.14} parent=5 // pred_check
      _
    $region10: #{unet_forward.14} parent=5 // pred_check_branch
      %94 = sbr.rel (%p91) target = $region12
    $region11: #{unet_forward.14} parent=5 // pred_region
      %s95 = ssub.s32 %s8, 1
      // Predicated region
      $region13: #{unet_forward.14} parent=11 // pred_check
        %p96 = pneg %p55
      $region14: #{unet_forward.14} parent=11 // pred_check_branch
        %98 = sbr.rel (%p96) target = $region16
      $region15: #{unet_forward.14} parent=11 // pred_region
        _
      $region16: #{unet_forward.14} parent=11 // pred_fallthru
        _
    $region12: #{unet_forward.14} parent=5 // pred_fallthru
      _
    %p99 = scmp.lt.s32.totalorder %s8, 2
    // Predicated region
    $region17: #{unet_forward.14} parent=5 // pred_check
      %p100 = pneg %p99
    $region18: #{unet_forward.14} parent=5 // pred_check_branch
      %102 = sbr.rel (%p100) target = $region20
    $region19: #{unet_forward.14} parent=5 // pred_region
      // Predicated region
      $region21: #{unet_forward.14} parent=19 // pred_check
        %p103 = pneg %p28
      $region22: #{unet_forward.14} parent=19 // pred_check_branch
        %105 = sbr.rel (%p103) target = $region24
      $region23: #{unet_forward.14} parent=19 // pred_region
        %s106 = smul.u32 32, %s8
        %p107 = scmp.lt.s32.totalorder %s106, 63
        %s108 = scalar_select %p107, %s106, 63
        %s109 = smul.addr %s108, 4
        %s110 = scalar_lea.vmem %s0, %s109
        %s111 = smul.u32 32, %s8
      $region24: #{unet_forward.14} parent=19 // pred_fallthru
        _
    $region20: #{unet_forward.14} parent=5 // pred_fallthru
      _
    %p112 = scmp.le.s32.totalorder 1, %s8
    %p113 = scmp.lt.s32.totalorder %s8, 3
    %p114 = pnand %p112, %p113
    %p115 = pneg %p114
    // Predicated region
    $region25: #{unet_forward.14} parent=5 // pred_check
      _
    $region26: #{unet_forward.14} parent=5 // pred_check_branch
      %117 = sbr.rel (%p114) target = $region28
    $region27: #{unet_forward.14} parent=5 // pred_region
      %s118 = ssub.s32 %s8, 1
      %s119 = smul.u32 32, %s13
      %p120 = scmp.lt.s32.totalorder %s119, 63
      %s121 = scalar_select %p120, %s119, 63
      %s122 = smul.addr %s121, 4
      %s123 = scalar_lea.vmem %s0, %s122
      %p124 = pneg %p34
      %p125 = pneg %p31
      %p126 = pneg %p55
      %p127 = pneg %p52
      %p128 = pneg %p81
      %p129 = pneg %p78
      %s130 = smul.u32 32, %s13
      %p131 = scmp.lt.s32.totalorder %s130, 63
      %s132 = scalar_select %p131, %s130, 63
      %s133 = smul.addr %s132, 4
      %s134 = scalar_lea.vmem %s2, %s133
      %s135 = smul.u32 32, %s13
      %p136 = scmp.lt.s32.totalorder %s135, 63
      %s137 = scalar_select %p136, %s135, 63
      %s138 = smul.addr %s137, 4
      %s139 = scalar_lea.vmem %s0, %s138
      %s140 = smul.u32 32, %s13
      %s141 = smul.u32 32, %s13
      %p142 = scmp.lt.s32.totalorder %s141, 63
      %s143 = scalar_select %p142, %s141, 63
      %s144 = smul.addr %s143, 4
      %s145 = scalar_lea.vmem %s2, %s144
      %s146 = smul.u32 32, %s13
      %v148 = vld [vmem:[%s139] sm:$0xf]
      %v149 = vld [vmem:[%s139 + $0x4] sm:$0xf]
      %v150 = vld [vmem:[%s139 + $0x8] sm:$0xf]
      %v151 = vld [vmem:[%s139 + $0xc] sm:$0xf]
      %v152 = vld [vmem:[%s139 + $0x10] sm:$0xf]
      %v153 = vld [vmem:[%s139 + $0x14] sm:$0xf]
      %v154 = vld [vmem:[%s139 + $0x18] sm:$0xf]
      %v155 = vld [vmem:[%s139 + $0x1c] sm:$0xf]
      %v156 = vld [vmem:[%s139 + $0x20] sm:$0xf]
      %v157 = vld [vmem:[%s139 + $0x24] sm:$0xf]
      %v158 = vld [vmem:[%s139 + $0x28] sm:$0xf]
      %v159 = vld [vmem:[%s139 + $0x2c] sm:$0xf]
      %v160 = vld [vmem:[%s139 + $0x30] sm:$0xf]
      %v161 = vld [vmem:[%s139 + $0x34] sm:$0xf]
      %v162 = vld [vmem:[%s139 + $0x38] sm:$0xf]
      %v163 = vld [vmem:[%s139 + $0x3c] sm:$0xf]
      %v164 = vld [vmem:[%s139 + $0x40] sm:$0xf]
      %v165 = vld [vmem:[%s139 + $0x44] sm:$0xf]
      %v166 = vld [vmem:[%s139 + $0x48] sm:$0xf]
      %v167 = vld [vmem:[%s139 + $0x4c] sm:$0xf]
      %v168 = vld [vmem:[%s139 + $0x50] sm:$0xf]
      %v169 = vld [vmem:[%s139 + $0x54] sm:$0xf]
      %v170 = vld [vmem:[%s139 + $0x58] sm:$0xf]
      %v171 = vld [vmem:[%s139 + $0x5c] sm:$0xf]
      %v172 = vld [vmem:[%s139 + $0x60] sm:$0xf]
      %v173 = vld [vmem:[%s139 + $0x64] sm:$0xf]
      %v174 = vld [vmem:[%s139 + $0x68] sm:$0xf]
      %v175 = vld [vmem:[%s139 + $0x6c] sm:$0xf]
      %v176 = vld [vmem:[%s139 + $0x70] sm:$0xf]
      %v177 = vld [vmem:[%s139 + $0x74] sm:$0xf]
      %v178 = vld [vmem:[%s139 + $0x78] sm:$0xf]
      %v179 = vld [vmem:[%s139 + $0x7c] sm:$0xf]
      %v180 = vld [vmem:[%s1] sm:$0xf]
      %v181 = vld [vmem:[%s1 + $0x4] sm:$0xf]
      %v182 = vld [vmem:[%s1 + $0x8] sm:$0xf]
      %v183 = vld [vmem:[%s1 + $0xc] sm:$0xf]
      %v184 = vld [vmem:[%s1 + $0x10] sm:$0xf]
      %v185 = vld [vmem:[%s1 + $0x14] sm:$0xf]
      %v186 = vld [vmem:[%s1 + $0x18] sm:$0xf]
      %v187 = vld [vmem:[%s1 + $0x1c] sm:$0xf]
      %v188 = vld [vmem:[%s1 + $0x20] sm:$0xf]
      %v221 = vunpack.c.l.b16 %v148
      %v222 = vunpack.c.l.b16 %v149
      %v223 = vunpack.c.l.b16 %v150
      %v224 = vunpack.c.l.b16 %v151
      %v225 = vunpack.c.l.b16 %v152
      %v226 = vunpack.c.l.b16 %v153
      %v227 = vunpack.c.l.b16 %v154
      %v228 = vunpack.c.l.b16 %v155
      %v229 = vunpack.c.l.b16 %v156
      %v230 = vunpack.c.l.b16 %v157
      %v231 = vunpack.c.l.b16 %v158
      %v232 = vunpack.c.l.b16 %v159
      %v233 = vunpack.c.l.b16 %v160
      %v234 = vunpack.c.l.b16 %v161
      %v235 = vunpack.c.l.b16 %v162
      %v236 = vunpack.c.l.b16 %v163
      %v237 = vunpack.c.l.b16 %v164
      %v238 = vunpack.c.l.b16 %v165
      %v239 = vunpack.c.l.b16 %v166
      %v240 = vunpack.c.l.b16 %v167
      %v241 = vunpack.c.l.b16 %v168
      %v242 = vunpack.c.l.b16 %v169
      %v243 = vunpack.c.l.b16 %v170
      %v244 = vunpack.c.l.b16 %v171
      %v245 = vunpack.c.l.b16 %v172
      %v246 = vunpack.c.l.b16 %v173
      %v247 = vunpack.c.l.b16 %v174
      %v248 = vunpack.c.l.b16 %v175
      %v249 = vunpack.c.l.b16 %v176
      %v250 = vunpack.c.l.b16 %v177
      %v251 = vunpack.c.l.b16 %v178
      %v252 = vunpack.c.l.b16 %v179
      %v253 = vpack.c.b16 %v222, %v221
      %v254 = vpack.c.b16 %v224, %v223
      %v255 = vpack.c.b16 %v226, %v225
      %v256 = vpack.c.b16 %v228, %v227
      %v257 = vpack.c.b16 %v230, %v229
      %v258 = vpack.c.b16 %v232, %v231
      %v259 = vpack.c.b16 %v234, %v233
      %v260 = vpack.c.b16 %v236, %v235
      %v261 = vpack.c.b16 %v238, %v237
      %v262 = vpack.c.b16 %v240, %v239
      %v263 = vpack.c.b16 %v242, %v241
      %v264 = vpack.c.b16 %v244, %v243
      %v265 = vpack.c.b16 %v246, %v245
      %v266 = vpack.c.b16 %v248, %v247
      %v267 = vpack.c.b16 %v250, %v249
      %v268 = vpack.c.b16 %v252, %v251
      %v278 = vunpack.c.l.b16 %v180
      %v279 = vunpack.c.l.b16 %v181
      %v280 = vunpack.c.l.b16 %v182
      %v281 = vunpack.c.l.b16 %v183
      %v282 = vunpack.c.l.b16 %v184
      %v283 = vunpack.c.l.b16 %v185
      %v284 = vunpack.c.l.b16 %v186
      %v285 = vunpack.c.l.b16 %v187
      %v286 = vunpack.c.l.b16 %v188
      %v287 = vpack.c.b16 %v279, %v278
      %v288 = vpack.c.b16 %v281, %v280
      %v289 = vpack.c.b16 %v283, %v282
      %v290 = vpack.c.b16 %v285, %v284
      %v291 = vpack.c.b16 %v286, %v286
      %vm296 = vcmask 588800
      %v298 = vsel %vm296, %v253, 0
      %v301 = vsel %vm296, %v254, 0
      %v304 = vsel %vm296, %v255, 0
      %v307 = vsel %vm296, %v256, 0
      %v310 = vsel %vm296, %v257, 0
      %v313 = vsel %vm296, %v258, 0
      %v316 = vsel %vm296, %v259, 0
      %v319 = vsel %vm296, %v260, 0
      %v322 = vsel %vm296, %v261, 0
      %v325 = vsel %vm296, %v262, 0
      %v328 = vsel %vm296, %v263, 0
      %v331 = vsel %vm296, %v264, 0
      %v334 = vsel %vm296, %v265, 0
      %v337 = vsel %vm296, %v266, 0
      %v340 = vsel %vm296, %v267, 0
      %v343 = vsel %vm296, %v268, 0
      %vm345 = vcmask 1043456
      %v347 = vsel %vm345, %v291, 0
      %349 = vmatpush.bf16.msra.mxu0 0
      %350 = vmatpush.bf16.msra.mxu0 0
      %351 = vmatpush.bf16.msra.mxu0 0
      %352 = vmatpush.bf16.msra.mxu0 %v347
      %353 = vmatpush.bf16.msra.mxu0 %v290
      %354 = vmatpush.bf16.msra.mxu0 %v289
      %355 = vmatpush.bf16.msra.mxu0 %v288
      %356 = vmatpush.bf16.msra.mxu0 %v287
      %357 = vmatmul.bf16.gmra.mxu0 %v298
      %v358 = vpop.f32.mrf.mxu0
      %v359 = vadd.f32 0.0, %v358
      %v360 = vpop.f32.mrf.mxu0
      %v361 = vadd.f32 0.0, %v360
      %362 = vmatmul.bf16.gmra.mxu0 %v301
      %v363 = vpop.f32.mrf.mxu0
      %v364 = vadd.f32 0.0, %v363
      %v365 = vpop.f32.mrf.mxu0
      %v366 = vadd.f32 0.0, %v365
      %367 = vmatmul.bf16.gmra.mxu0 %v304
      %v368 = vpop.f32.mrf.mxu0
      %v369 = vadd.f32 0.0, %v368
      %v370 = vpop.f32.mrf.mxu0
      %v371 = vadd.f32 0.0, %v370
      %372 = vmatmul.bf16.gmra.mxu0 %v307
      %v373 = vpop.f32.mrf.mxu0
      %v374 = vadd.f32 0.0, %v373
      %v375 = vpop.f32.mrf.mxu0
      %v376 = vadd.f32 0.0, %v375
      %377 = vmatmul.bf16.gmra.mxu0 %v310
      %v378 = vpop.f32.mrf.mxu0
      %v379 = vadd.f32 0.0, %v378
      %v380 = vpop.f32.mrf.mxu0
      %v381 = vadd.f32 0.0, %v380
      %382 = vmatmul.bf16.gmra.mxu0 %v313
      %v383 = vpop.f32.mrf.mxu0
      %v384 = vadd.f32 0.0, %v383
      %v385 = vpop.f32.mrf.mxu0
      %v386 = vadd.f32 0.0, %v385
      %387 = vmatmul.bf16.gmra.mxu0 %v316
      %v388 = vpop.f32.mrf.mxu0
      %v389 = vadd.f32 0.0, %v388
      %v390 = vpop.f32.mrf.mxu0
      %v391 = vadd.f32 0.0, %v390
      %392 = vmatmul.bf16.gmra.mxu0 %v319
      %v393 = vpop.f32.mrf.mxu0
      %v394 = vadd.f32 0.0, %v393
      %v395 = vpop.f32.mrf.mxu0
      %v396 = vadd.f32 0.0, %v395
      %397 = vmatmul.bf16.gmra.mxu0 %v322
      %v398 = vpop.f32.mrf.mxu0
      %v399 = vadd.f32 0.0, %v398
      %v400 = vpop.f32.mrf.mxu0
      %v401 = vadd.f32 0.0, %v400
      %402 = vmatmul.bf16.gmra.mxu0 %v325
      %v403 = vpop.f32.mrf.mxu0
      %v404 = vadd.f32 0.0, %v403
      %v405 = vpop.f32.mrf.mxu0
      %v406 = vadd.f32 0.0, %v405
      %407 = vmatmul.bf16.gmra.mxu0 %v328
      %v408 = vpop.f32.mrf.mxu0
      %v409 = vadd.f32 0.0, %v408
      %v410 = vpop.f32.mrf.mxu0
      %v411 = vadd.f32 0.0, %v410
      %412 = vmatmul.bf16.gmra.mxu0 %v331
      %v413 = vpop.f32.mrf.mxu0
      %v414 = vadd.f32 0.0, %v413
      %v415 = vpop.f32.mrf.mxu0
      %v416 = vadd.f32 0.0, %v415
      %417 = vmatmul.bf16.gmra.mxu0 %v334
      %v418 = vpop.f32.mrf.mxu0
      %v419 = vadd.f32 0.0, %v418
      %v420 = vpop.f32.mrf.mxu0
      %v421 = vadd.f32 0.0, %v420
      %422 = vmatmul.bf16.gmra.mxu0 %v337
      %v423 = vpop.f32.mrf.mxu0
      %v424 = vadd.f32 0.0, %v423
      %v425 = vpop.f32.mrf.mxu0
      %v426 = vadd.f32 0.0, %v425
      %427 = vmatmul.bf16.gmra.mxu0 %v340
      %v428 = vpop.f32.mrf.mxu0
      %v429 = vadd.f32 0.0, %v428
      %v430 = vpop.f32.mrf.mxu0
      %v431 = vadd.f32 0.0, %v430
      %432 = vmatmul.bf16.gmra.mxu0 %v343
      %v433 = vpop.f32.mrf.mxu0
      %v434 = vadd.f32 0.0, %v433
      %v435 = vpop.f32.mrf.mxu0
      %v436 = vadd.f32 0.0, %v435
      %437 = vdwg.mxu0
      %v438 = vmul.f32 %v359, 0.2
      %v439 = vmul.f32 %v361, 0.2
      %v440 = vmul.f32 %v364, 0.2
      %v441 = vmul.f32 %v366, 0.2
      %v442 = vmul.f32 %v369, 0.2
      %v443 = vmul.f32 %v371, 0.2
      %v444 = vmul.f32 %v374, 0.2
      %v445 = vmul.f32 %v376, 0.2
      %v446 = vmul.f32 %v379, 0.2
      %v447 = vmul.f32 %v381, 0.2
      %v448 = vmul.f32 %v384, 0.2
      %v449 = vmul.f32 %v386, 0.2
      %v450 = vmul.f32 %v389, 0.2
      %v451 = vmul.f32 %v391, 0.2
      %v452 = vmul.f32 %v394, 0.2
      %v453 = vmul.f32 %v396, 0.2
      %v454 = vmul.f32 %v399, 0.2
      %v455 = vmul.f32 %v401, 0.2
      %v456 = vmul.f32 %v404, 0.2
      %v457 = vmul.f32 %v406, 0.2
      %v458 = vmul.f32 %v409, 0.2
      %v459 = vmul.f32 %v411, 0.2
      %v460 = vmul.f32 %v414, 0.2
      %v461 = vmul.f32 %v416, 0.2
      %v462 = vmul.f32 %v419, 0.2
      %v463 = vmul.f32 %v421, 0.2
      %v464 = vmul.f32 %v424, 0.2
      %v465 = vmul.f32 %v426, 0.2
      %v466 = vmul.f32 %v429, 0.2
      %v467 = vmul.f32 %v431, 0.2
      %v468 = vmul.f32 %v434, 0.2
      %v469 = vmul.f32 %v436, 0.2
      %v470 = vmax.f32 %v359, %v438
      %v471 = vmax.f32 %v361, %v439
      %v472 = vmax.f32 %v364, %v440
      %v473 = vmax.f32 %v366, %v441
      %v474 = vmax.f32 %v369, %v442
      %v475 = vmax.f32 %v371, %v443
      %v476 = vmax.f32 %v374, %v444
      %v477 = vmax.f32 %v376, %v445
      %v478 = vmax.f32 %v379, %v446
      %v479 = vmax.f32 %v381, %v447
      %v480 = vmax.f32 %v384, %v448
      %v481 = vmax.f32 %v386, %v449
      %v482 = vmax.f32 %v389, %v450
      %v483 = vmax.f32 %v391, %v451
      %v484 = vmax.f32 %v394, %v452
      %v485 = vmax.f32 %v396, %v453
      %v486 = vmax.f32 %v399, %v454
      %v487 = vmax.f32 %v401, %v455
      %v488 = vmax.f32 %v404, %v456
      %v489 = vmax.f32 %v406, %v457
      %v490 = vmax.f32 %v409, %v458
      %v491 = vmax.f32 %v411, %v459
      %v492 = vmax.f32 %v414, %v460
      %v493 = vmax.f32 %v416, %v461
      %v494 = vmax.f32 %v419, %v462
      %v495 = vmax.f32 %v421, %v463
      %v496 = vmax.f32 %v424, %v464
      %v497 = vmax.f32 %v426, %v465
      %v498 = vmax.f32 %v429, %v466
      %v499 = vmax.f32 %v431, %v467
      %v500 = vmax.f32 %v434, %v468
      %v501 = vmax.f32 %v436, %v469
      %v502 = vpack.c.bf16 %v470, %v470
      %v503 = vpack.c.bf16 %v471, %v471
      %v504 = vpack.c.bf16 %v472, %v472
      %v505 = vpack.c.bf16 %v473, %v473
      %v506 = vpack.c.bf16 %v474, %v474
      %v507 = vpack.c.bf16 %v475, %v475
      %v508 = vpack.c.bf16 %v476, %v476
      %v509 = vpack.c.bf16 %v477, %v477
      %v510 = vpack.c.bf16 %v478, %v478
      %v511 = vpack.c.bf16 %v479, %v479
      %v512 = vpack.c.bf16 %v480, %v480
      %v513 = vpack.c.bf16 %v481, %v481
      %v514 = vpack.c.bf16 %v482, %v482
      %v515 = vpack.c.bf16 %v483, %v483
      %v516 = vpack.c.bf16 %v484, %v484
      %v517 = vpack.c.bf16 %v485, %v485
      %v518 = vpack.c.bf16 %v486, %v486
      %v519 = vpack.c.bf16 %v487, %v487
      %v520 = vpack.c.bf16 %v488, %v488
      %v521 = vpack.c.bf16 %v489, %v489
      %v522 = vpack.c.bf16 %v490, %v490
      %v523 = vpack.c.bf16 %v491, %v491
      %v524 = vpack.c.bf16 %v492, %v492
      %v525 = vpack.c.bf16 %v493, %v493
      %v526 = vpack.c.bf16 %v494, %v494
      %v527 = vpack.c.bf16 %v495, %v495
      %v528 = vpack.c.bf16 %v496, %v496
      %v529 = vpack.c.bf16 %v497, %v497
      %v530 = vpack.c.bf16 %v498, %v498
      %v531 = vpack.c.bf16 %v499, %v499
      %v532 = vpack.c.bf16 %v500, %v500
      %v533 = vpack.c.bf16 %v501, %v501
      %vm534 = vcmask 60416
      %535 = vst.msk [vmem:[%s145] sm:$0xf] %vm534, %v502
      %536 = vst.msk [vmem:[%s145 + $0x4] sm:$0xf] %vm534, %v503
      %537 = vst.msk [vmem:[%s145 + $0x8] sm:$0xf] %vm534, %v504
      %538 = vst.msk [vmem:[%s145 + $0xc] sm:$0xf] %vm534, %v505
      %539 = vst.msk [vmem:[%s145 + $0x10] sm:$0xf] %vm534, %v506
      %540 = vst.msk [vmem:[%s145 + $0x14] sm:$0xf] %vm534, %v507
      %541 = vst.msk [vmem:[%s145 + $0x18] sm:$0xf] %vm534, %v508
      %542 = vst.msk [vmem:[%s145 + $0x1c] sm:$0xf] %vm534, %v509
      %543 = vst.msk [vmem:[%s145 + $0x20] sm:$0xf] %vm534, %v510
      %544 = vst.msk [vmem:[%s145 + $0x24] sm:$0xf] %vm534, %v511
      %545 = vst.msk [vmem:[%s145 + $0x28] sm:$0xf] %vm534, %v512
      %546 = vst.msk [vmem:[%s145 + $0x2c] sm:$0xf] %vm534, %v513
      %547 = vst.msk [vmem:[%s145 + $0x30] sm:$0xf] %vm534, %v514
      %548 = vst.msk [vmem:[%s145 + $0x34] sm:$0xf] %vm534, %v515
      %549 = vst.msk [vmem:[%s145 + $0x38] sm:$0xf] %vm534, %v516
      %550 = vst.msk [vmem:[%s145 + $0x3c] sm:$0xf] %vm534, %v517
      %551 = vst.msk [vmem:[%s145 + $0x40] sm:$0xf] %vm534, %v518
      %552 = vst.msk [vmem:[%s145 + $0x44] sm:$0xf] %vm534, %v519
      %553 = vst.msk [vmem:[%s145 + $0x48] sm:$0xf] %vm534, %v520
      %554 = vst.msk [vmem:[%s145 + $0x4c] sm:$0xf] %vm534, %v521
      %555 = vst.msk [vmem:[%s145 + $0x50] sm:$0xf] %vm534, %v522
      %556 = vst.msk [vmem:[%s145 + $0x54] sm:$0xf] %vm534, %v523
      %557 = vst.msk [vmem:[%s145 + $0x58] sm:$0xf] %vm534, %v524
      %558 = vst.msk [vmem:[%s145 + $0x5c] sm:$0xf] %vm534, %v525
      %559 = vst.msk [vmem:[%s145 + $0x60] sm:$0xf] %vm534, %v526
      %560 = vst.msk [vmem:[%s145 + $0x64] sm:$0xf] %vm534, %v527
      %561 = vst.msk [vmem:[%s145 + $0x68] sm:$0xf] %vm534, %v528
      %562 = vst.msk [vmem:[%s145 + $0x6c] sm:$0xf] %vm534, %v529
      %563 = vst.msk [vmem:[%s145 + $0x70] sm:$0xf] %vm534, %v530
      %564 = vst.msk [vmem:[%s145 + $0x74] sm:$0xf] %vm534, %v531
      %565 = vst.msk [vmem:[%s145 + $0x78] sm:$0xf] %vm534, %v532
      %566 = vst.msk [vmem:[%s145 + $0x7c] sm:$0xf] %vm534, %v533
      %s567 = smul.u32 32, %s13
      %p568 = scmp.lt.s32.totalorder %s567, 63
      %s569 = scalar_select %p568, %s567, 63
      %s570 = smul.addr %s569, 4
      %s571 = scalar_lea.vmem %s2, %s570
      // Predicated region
      $region29: #{unet_forward.14} parent=27 // pred_check
        %p572 = pneg %p78
      $region30: #{unet_forward.14} parent=27 // pred_check_branch
        %574 = sbr.rel (%p572) target = $region32
      $region31: #{unet_forward.14} parent=27 // pred_region
        %s575 = smul.u32 32, %s13
      $region32: #{unet_forward.14} parent=27 // pred_fallthru
        _
    $region28: #{unet_forward.14} parent=5 // pred_fallthru
      _
    %p576 = scmp.le.s32.totalorder 2, %s8
    // Predicated region
    $region33: #{unet_forward.14} parent=5 // pred_check
      %p577 = pneg %p576
    $region34: #{unet_forward.14} parent=5 // pred_check_branch
      %579 = sbr.rel (%p577) target = $region36
    $region35: #{unet_forward.14} parent=5 // pred_region
      %s580 = ssub.s32 %s8, 2
      // Predicated region
      $region37: #{unet_forward.14} parent=35 // pred_check
        %p581 = pneg %p84
      $region38: #{unet_forward.14} parent=35 // pred_check_branch
        %583 = sbr.rel (%p581) target = $region40
      $region39: #{unet_forward.14} parent=35 // pred_region
        %s584 = smul.u32 32, %s14
        %p585 = scmp.lt.s32.totalorder %s584, 63
        %s586 = scalar_select %p585, %s584, 63
        %s587 = smul.addr %s586, 4
        %s588 = scalar_lea.vmem %s2, %s587
      $region40: #{unet_forward.14} parent=35 // pred_fallthru
        _
    $region36: #{unet_forward.14} parent=5 // pred_fallthru
      _
  $region6: #{unet_forward.14} parent=0 // loop_footer
    %s12 = sadd.s32 1, %s8
  $region7: #{unet_forward.14} parent=0 // loop_footer_branch
    %7 = sbr.rel target = $region3
  $region8: #{unet_forward.14} parent=0 // loop_exit
    _

// kernel: unet_forward.15
$region0: #{unet_forward.15}
  #allocation0 [shape = 'u32[]', space=smem, size = 0x4, offset = 0x4, fixed_abs, tag = 'smem constant byte address 0x4 - core index']
  #allocation1 [shape = 'u32[72,128]{1,0:T(1,128)}', space=vmem, size = 0x9000, scoped, tag = 'internal scratch']
  %s0 = inlined_call_operand.vmem [shape: bf16[128,72], index: 0, kind: input, shape index: {}]
  %s1 = inlined_call_operand.vmem [shape: bf16[72,16], index: 1, kind: input, shape index: {}]
  %s2 = inlined_call_operand.vmem [shape: bf16[128,16], index: 2, kind: output, shape index: {}]
  %s3 = sld [smem:[#allocation0]]
  $region18: #{unet_forward.15} parent=0
    _
  %s5 = ssub.s32 1, %s3
  %s6 = scalar_select 0, %s5, %s3
  // Predicated region
  $region2: #{unet_forward.15} parent=0 // pred_check
    _
  $region3: #{unet_forward.15} parent=0 // pred_check_branch
    %8 = sbr.rel (0) target = $region5
  $region4: #{unet_forward.15} parent=0 // pred_region
    _
  $region5: #{unet_forward.15} parent=0 // pred_fallthru
    _
  // Predicated region
  $region6: #{unet_forward.15} parent=0 // pred_check
    _
  $region7: #{unet_forward.15} parent=0 // pred_check_branch
    %10 = sbr.rel (0) target = $region9
  $region8: #{unet_forward.15} parent=0 // pred_region
    _
  $region9: #{unet_forward.15} parent=0 // pred_fallthru
    _
  %v12 = vld [vmem:[%s0] sm:$0xf]
  %v13 = vld [vmem:[%s0 + $0x4] sm:$0xf]
  %v14 = vld [vmem:[%s0 + $0x8] sm:$0xf]
  %v15 = vld [vmem:[%s0 + $0xc] sm:$0xf]
  %v16 = vld [vmem:[%s0 + $0x10] sm:$0xf]
  %v17 = vld [vmem:[%s0 + $0x14] sm:$0xf]
  %v18 = vld [vmem:[%s0 + $0x18] sm:$0xf]
  %v19 = vld [vmem:[%s0 + $0x1c] sm:$0xf]
  %v20 = vld [vmem:[%s0 + $0x20] sm:$0xf]
  %v21 = vld [vmem:[%s0 + $0x24] sm:$0xf]
  %v22 = vld [vmem:[%s0 + $0x28] sm:$0xf]
  %v23 = vld [vmem:[%s0 + $0x2c] sm:$0xf]
  %v24 = vld [vmem:[%s0 + $0x30] sm:$0xf]
  %v25 = vld [vmem:[%s0 + $0x34] sm:$0xf]
  %v26 = vld [vmem:[%s0 + $0x38] sm:$0xf]
  %v27 = vld [vmem:[%s0 + $0x3c] sm:$0xf]
  %v28 = vld [vmem:[%s1] sm:$0xf]
  %v29 = vld [vmem:[%s1 + $0x4] sm:$0xf]
  %v30 = vld [vmem:[%s1 + $0x8] sm:$0xf]
  %v31 = vld [vmem:[%s1 + $0xc] sm:$0xf]
  %v32 = vld [vmem:[%s1 + $0x10] sm:$0xf]
  %v33 = vld [vmem:[%s1 + $0x14] sm:$0xf]
  %v34 = vld [vmem:[%s1 + $0x18] sm:$0xf]
  %v35 = vld [vmem:[%s1 + $0x1c] sm:$0xf]
  %v36 = vld [vmem:[%s1 + $0x20] sm:$0xf]
  %v53 = vunpack.c.l.b16 %v12
  %v54 = vunpack.c.l.b16 %v13
  %v55 = vunpack.c.l.b16 %v14
  %v56 = vunpack.c.l.b16 %v15
  %v57 = vunpack.c.l.b16 %v16
  %v58 = vunpack.c.l.b16 %v17
  %v59 = vunpack.c.l.b16 %v18
  %v60 = vunpack.c.l.b16 %v19
  %v61 = vunpack.c.l.b16 %v20
  %v62 = vunpack.c.l.b16 %v21
  %v63 = vunpack.c.l.b16 %v22
  %v64 = vunpack.c.l.b16 %v23
  %v65 = vunpack.c.l.b16 %v24
  %v66 = vunpack.c.l.b16 %v25
  %v67 = vunpack.c.l.b16 %v26
  %v68 = vunpack.c.l.b16 %v27
  %v69 = vpack.c.b16 %v54, %v53
  %v70 = vpack.c.b16 %v56, %v55
  %v71 = vpack.c.b16 %v58, %v57
  %v72 = vpack.c.b16 %v60, %v59
  %v73 = vpack.c.b16 %v62, %v61
  %v74 = vpack.c.b16 %v64, %v63
  %v75 = vpack.c.b16 %v66, %v65
  %v76 = vpack.c.b16 %v68, %v67
  %v86 = vunpack.c.l.b16 %v28
  %v87 = vunpack.c.l.b16 %v29
  %v88 = vunpack.c.l.b16 %v30
  %v89 = vunpack.c.l.b16 %v31
  %v90 = vunpack.c.l.b16 %v32
  %v91 = vunpack.c.l.b16 %v33
  %v92 = vunpack.c.l.b16 %v34
  %v93 = vunpack.c.l.b16 %v35
  %v94 = vunpack.c.l.b16 %v36
  %v95 = vpack.c.b16 %v87, %v86
  %v96 = vpack.c.b16 %v89, %v88
  %v97 = vpack.c.b16 %v91, %v90
  %v98 = vpack.c.b16 %v93, %v92
  %v99 = vpack.c.b16 %v94, %v94
  %vm104 = vcmask 588800
  %v106 = vsel %vm104, %v69, 0
  %v109 = vsel %vm104, %v70, 0
  %v112 = vsel %vm104, %v71, 0
  %v115 = vsel %vm104, %v72, 0
  %v118 = vsel %vm104, %v73, 0
  %v121 = vsel %vm104, %v74, 0
  %v124 = vsel %vm104, %v75, 0
  %v127 = vsel %vm104, %v76, 0
  %vm129 = vcmask 1043456
  %v131 = vsel %vm129, %v99, 0
  %133 = vmatpush.bf16.msra.mxu0 0
  %134 = vmatpush.bf16.msra.mxu0 0
  %135 = vmatpush.bf16.msra.mxu0 0
  %136 = vmatpush.bf16.msra.mxu0 %v131
  %137 = vmatpush.bf16.msra.mxu0 %v98
  %138 = vmatpush.bf16.msra.mxu0 %v97
  %139 = vmatpush.bf16.msra.mxu0 %v96
  %140 = vmatpush.bf16.msra.mxu0 %v95
  %141 = vmatmul.bf16.gmra.mxu0 %v106
  %v142 = vpop.f32.mrf.mxu0
  %v143 = vadd.f32 0.0, %v142
  %v144 = vpop.f32.mrf.mxu0
  %v145 = vadd.f32 0.0, %v144
  %146 = vmatmul.bf16.gmra.mxu0 %v109
  %v147 = vpop.f32.mrf.mxu0
  %v148 = vadd.f32 0.0, %v147
  %v149 = vpop.f32.mrf.mxu0
  %v150 = vadd.f32 0.0, %v149
  %151 = vmatmul.bf16.gmra.mxu0 %v112
  %v152 = vpop.f32.mrf.mxu0
  %v153 = vadd.f32 0.0, %v152
  %v154 = vpop.f32.mrf.mxu0
  %v155 = vadd.f32 0.0, %v154
  %156 = vmatmul.bf16.gmra.mxu0 %v115
  %v157 = vpop.f32.mrf.mxu0
  %v158 = vadd.f32 0.0, %v157
  %v159 = vpop.f32.mrf.mxu0
  %v160 = vadd.f32 0.0, %v159
  %161 = vmatmul.bf16.gmra.mxu0 %v118
  %v162 = vpop.f32.mrf.mxu0
  %v163 = vadd.f32 0.0, %v162
  %v164 = vpop.f32.mrf.mxu0
  %v165 = vadd.f32 0.0, %v164
  %166 = vmatmul.bf16.gmra.mxu0 %v121
  %v167 = vpop.f32.mrf.mxu0
  %v168 = vadd.f32 0.0, %v167
  %v169 = vpop.f32.mrf.mxu0
  %v170 = vadd.f32 0.0, %v169
  %171 = vmatmul.bf16.gmra.mxu0 %v124
  %v172 = vpop.f32.mrf.mxu0
  %v173 = vadd.f32 0.0, %v172
  %v174 = vpop.f32.mrf.mxu0
  %v175 = vadd.f32 0.0, %v174
  %176 = vmatmul.bf16.gmra.mxu0 %v127
  %v177 = vpop.f32.mrf.mxu0
  %v178 = vadd.f32 0.0, %v177
  %v179 = vpop.f32.mrf.mxu0
  %v180 = vadd.f32 0.0, %v179
  %181 = vdwg.mxu0
  %v182 = vmul.f32 %v143, 0.2
  %v183 = vmul.f32 %v145, 0.2
  %v184 = vmul.f32 %v148, 0.2
  %v185 = vmul.f32 %v150, 0.2
  %v186 = vmul.f32 %v153, 0.2
  %v187 = vmul.f32 %v155, 0.2
  %v188 = vmul.f32 %v158, 0.2
  %v189 = vmul.f32 %v160, 0.2
  %v190 = vmul.f32 %v163, 0.2
  %v191 = vmul.f32 %v165, 0.2
  %v192 = vmul.f32 %v168, 0.2
  %v193 = vmul.f32 %v170, 0.2
  %v194 = vmul.f32 %v173, 0.2
  %v195 = vmul.f32 %v175, 0.2
  %v196 = vmul.f32 %v178, 0.2
  %v197 = vmul.f32 %v180, 0.2
  %v198 = vmax.f32 %v143, %v182
  %v199 = vmax.f32 %v145, %v183
  %v200 = vmax.f32 %v148, %v184
  %v201 = vmax.f32 %v150, %v185
  %v202 = vmax.f32 %v153, %v186
  %v203 = vmax.f32 %v155, %v187
  %v204 = vmax.f32 %v158, %v188
  %v205 = vmax.f32 %v160, %v189
  %v206 = vmax.f32 %v163, %v190
  %v207 = vmax.f32 %v165, %v191
  %v208 = vmax.f32 %v168, %v192
  %v209 = vmax.f32 %v170, %v193
  %v210 = vmax.f32 %v173, %v194
  %v211 = vmax.f32 %v175, %v195
  %v212 = vmax.f32 %v178, %v196
  %v213 = vmax.f32 %v180, %v197
  %v214 = vpack.c.bf16 %v198, %v198
  %v215 = vpack.c.bf16 %v199, %v199
  %v216 = vpack.c.bf16 %v200, %v200
  %v217 = vpack.c.bf16 %v201, %v201
  %v218 = vpack.c.bf16 %v202, %v202
  %v219 = vpack.c.bf16 %v203, %v203
  %v220 = vpack.c.bf16 %v204, %v204
  %v221 = vpack.c.bf16 %v205, %v205
  %v222 = vpack.c.bf16 %v206, %v206
  %v223 = vpack.c.bf16 %v207, %v207
  %v224 = vpack.c.bf16 %v208, %v208
  %v225 = vpack.c.bf16 %v209, %v209
  %v226 = vpack.c.bf16 %v210, %v210
  %v227 = vpack.c.bf16 %v211, %v211
  %v228 = vpack.c.bf16 %v212, %v212
  %v229 = vpack.c.bf16 %v213, %v213
  %vm230 = vcmask 125952
  %231 = vst.msk [vmem:[%s2] sm:$0xf] %vm230, %v214
  %232 = vst.msk [vmem:[%s2 + $0x4] sm:$0xf] %vm230, %v215
  %233 = vst.msk [vmem:[%s2 + $0x8] sm:$0xf] %vm230, %v216
  %234 = vst.msk [vmem:[%s2 + $0xc] sm:$0xf] %vm230, %v217
  %235 = vst.msk [vmem:[%s2 + $0x10] sm:$0xf] %vm230, %v218
  %236 = vst.msk [vmem:[%s2 + $0x14] sm:$0xf] %vm230, %v219
  %237 = vst.msk [vmem:[%s2 + $0x18] sm:$0xf] %vm230, %v220
  %238 = vst.msk [vmem:[%s2 + $0x1c] sm:$0xf] %vm230, %v221
  %239 = vst.msk [vmem:[%s2 + $0x20] sm:$0xf] %vm230, %v222
  %240 = vst.msk [vmem:[%s2 + $0x24] sm:$0xf] %vm230, %v223
  %241 = vst.msk [vmem:[%s2 + $0x28] sm:$0xf] %vm230, %v224
  %242 = vst.msk [vmem:[%s2 + $0x2c] sm:$0xf] %vm230, %v225
  %243 = vst.msk [vmem:[%s2 + $0x30] sm:$0xf] %vm230, %v226
  %244 = vst.msk [vmem:[%s2 + $0x34] sm:$0xf] %vm230, %v227
  %245 = vst.msk [vmem:[%s2 + $0x38] sm:$0xf] %vm230, %v228
  %246 = vst.msk [vmem:[%s2 + $0x3c] sm:$0xf] %vm230, %v229
  // Predicated region
  $region10: #{unet_forward.15} parent=0 // pred_check
    _
  $region11: #{unet_forward.15} parent=0 // pred_check_branch
    %248 = sbr.rel (0) target = $region13
  $region12: #{unet_forward.15} parent=0 // pred_region
    _
  $region13: #{unet_forward.15} parent=0 // pred_fallthru
    _
  // Predicated region
  $region14: #{unet_forward.15} parent=0 // pred_check
    _
  $region15: #{unet_forward.15} parent=0 // pred_check_branch
    %250 = sbr.rel (0) target = $region17
  $region16: #{unet_forward.15} parent=0 // pred_region
    _
  $region17: #{unet_forward.15} parent=0 // pred_fallthru
    _

// kernel: unet_forward.16
$region0: #{unet_forward.16}
  #allocation0 [shape = 'u32[]', space=smem, size = 0x4, offset = 0x4, fixed_abs, tag = 'smem constant byte address 0x4 - core index']
  #allocation1 [shape = 'u32[72,128]{1,0:T(1,128)}', space=vmem, size = 0x9000, scoped, tag = 'internal scratch']
  %s0 = inlined_call_operand.vmem [shape: bf16[128,144], index: 0, kind: input, shape index: {}]
  %s1 = inlined_call_operand.vmem [shape: bf16[144,16], index: 1, kind: input, shape index: {}]
  %s2 = inlined_call_operand.vmem [shape: bf16[128,16], index: 2, kind: output, shape index: {}]
  %s3 = sld [smem:[#allocation0]]
  $region18: #{unet_forward.16} parent=0
    _
  %s5 = ssub.s32 1, %s3
  %s6 = scalar_select 0, %s5, %s3
  // Predicated region
  $region2: #{unet_forward.16} parent=0 // pred_check
    _
  $region3: #{unet_forward.16} parent=0 // pred_check_branch
    %8 = sbr.rel (0) target = $region5
  $region4: #{unet_forward.16} parent=0 // pred_region
    _
  $region5: #{unet_forward.16} parent=0 // pred_fallthru
    _
  // Predicated region
  $region6: #{unet_forward.16} parent=0 // pred_check
    _
  $region7: #{unet_forward.16} parent=0 // pred_check_branch
    %10 = sbr.rel (0) target = $region9
  $region8: #{unet_forward.16} parent=0 // pred_region
    _
  $region9: #{unet_forward.16} parent=0 // pred_fallthru
    _
  %v12 = vld [vmem:[%s0] sm:$0xff]
  %v13 = vld [vmem:[%s0 + $0x8] sm:$0xff]
  %v14 = vld [vmem:[%s0 + $0x10] sm:$0xff]
  %v15 = vld [vmem:[%s0 + $0x18] sm:$0xff]
  %v16 = vld [vmem:[%s0 + $0x20] sm:$0xff]
  %v17 = vld [vmem:[%s0 + $0x28] sm:$0xff]
  %v18 = vld [vmem:[%s0 + $0x30] sm:$0xff]
  %v19 = vld [vmem:[%s0 + $0x38] sm:$0xff]
  %v20 = vld [vmem:[%s0 + $0x40] sm:$0xff]
  %v21 = vld [vmem:[%s0 + $0x48] sm:$0xff]
  %v22 = vld [vmem:[%s0 + $0x50] sm:$0xff]
  %v23 = vld [vmem:[%s0 + $0x58] sm:$0xff]
  %v24 = vld [vmem:[%s0 + $0x60] sm:$0xff]
  %v25 = vld [vmem:[%s0 + $0x68] sm:$0xff]
  %v26 = vld [vmem:[%s0 + $0x70] sm:$0xff]
  %v27 = vld [vmem:[%s0 + $0x78] sm:$0xff]
  %v28 = vld [vmem:[%s1] sm:$0xf]
  %v29 = vld [vmem:[%s1 + $0x4] sm:$0xf]
  %v30 = vld [vmem:[%s1 + $0x8] sm:$0xf]
  %v31 = vld [vmem:[%s1 + $0xc] sm:$0xf]
  %v32 = vld [vmem:[%s1 + $0x10] sm:$0xf]
  %v33 = vld [vmem:[%s1 + $0x14] sm:$0xf]
  %v34 = vld [vmem:[%s1 + $0x18] sm:$0xf]
  %v35 = vld [vmem:[%s1 + $0x1c] sm:$0xf]
  %v36 = vld [vmem:[%s1 + $0x20] sm:$0xf]
  %v37 = vld [vmem:[%s1 + $0x24] sm:$0xf]
  %v38 = vld [vmem:[%s1 + $0x28] sm:$0xf]
  %v39 = vld [vmem:[%s1 + $0x2c] sm:$0xf]
  %v40 = vld [vmem:[%s1 + $0x30] sm:$0xf]
  %v41 = vld [vmem:[%s1 + $0x34] sm:$0xf]
  %v42 = vld [vmem:[%s1 + $0x38] sm:$0xf]
  %v43 = vld [vmem:[%s1 + $0x3c] sm:$0xf]
  %v44 = vld [vmem:[%s1 + $0x40] sm:$0xf]
  %v45 = vld [vmem:[%s1 + $0x44] sm:$0xf]
  %v62 = vunpack.c.l.b16 %v12
  %v63 = vunpack.c.h.b16 %v12
  %v64 = vunpack.c.l.b16 %v13
  %v65 = vunpack.c.h.b16 %v13
  %v66 = vunpack.c.l.b16 %v14
  %v67 = vunpack.c.h.b16 %v14
  %v68 = vunpack.c.l.b16 %v15
  %v69 = vunpack.c.h.b16 %v15
  %v70 = vunpack.c.l.b16 %v16
  %v71 = vunpack.c.h.b16 %v16
  %v72 = vunpack.c.l.b16 %v17
  %v73 = vunpack.c.h.b16 %v17
  %v74 = vunpack.c.l.b16 %v18
  %v75 = vunpack.c.h.b16 %v18
  %v76 = vunpack.c.l.b16 %v19
  %v77 = vunpack.c.h.b16 %v19
  %v78 = vunpack.c.l.b16 %v20
  %v79 = vunpack.c.h.b16 %v20
  %v80 = vunpack.c.l.b16 %v21
  %v81 = vunpack.c.h.b16 %v21
  %v82 = vunpack.c.l.b16 %v22
  %v83 = vunpack.c.h.b16 %v22
  %v84 = vunpack.c.l.b16 %v23
  %v85 = vunpack.c.h.b16 %v23
  %v86 = vunpack.c.l.b16 %v24
  %v87 = vunpack.c.h.b16 %v24
  %v88 = vunpack.c.l.b16 %v25
  %v89 = vunpack.c.h.b16 %v25
  %v90 = vunpack.c.l.b16 %v26
  %v91 = vunpack.c.h.b16 %v26
  %v92 = vunpack.c.l.b16 %v27
  %v93 = vunpack.c.h.b16 %v27
  %v94 = vpack.c.b16 %v64, %v62
  %v95 = vpack.c.b16 %v65, %v63
  %v96 = vpack.c.b16 %v68, %v66
  %v97 = vpack.c.b16 %v69, %v67
  %v98 = vpack.c.b16 %v72, %v70
  %v99 = vpack.c.b16 %v73, %v71
  %v100 = vpack.c.b16 %v76, %v74
  %v101 = vpack.c.b16 %v77, %v75
  %v102 = vpack.c.b16 %v80, %v78
  %v103 = vpack.c.b16 %v81, %v79
  %v104 = vpack.c.b16 %v84, %v82
  %v105 = vpack.c.b16 %v85, %v83
  %v106 = vpack.c.b16 %v88, %v86
  %v107 = vpack.c.b16 %v89, %v87
  %v108 = vpack.c.b16 %v92, %v90
  %v109 = vpack.c.b16 %v93, %v91
  %v136 = vunpack.c.l.b16 %v28
  %v137 = vunpack.c.l.b16 %v29
  %v138 = vunpack.c.l.b16 %v30
  %v139 = vunpack.c.l.b16 %v31
  %v140 = vunpack.c.l.b16 %v32
  %v141 = vunpack.c.l.b16 %v33
  %v142 = vunpack.c.l.b16 %v34
  %v143 = vunpack.c.l.b16 %v35
  %v144 = vunpack.c.l.b16 %v36
  %v145 = vunpack.c.l.b16 %v37
  %v146 = vunpack.c.l.b16 %v38
  %v147 = vunpack.c.l.b16 %v39
  %v148 = vunpack.c.l.b16 %v40
  %v149 = vunpack.c.l.b16 %v41
  %v150 = vunpack.c.l.b16 %v42
  %v151 = vunpack.c.l.b16 %v43
  %v152 = vunpack.c.l.b16 %v44
  %v153 = vunpack.c.l.b16 %v45
  %v154 = vpack.c.b16 %v137, %v136
  %v155 = vpack.c.b16 %v139, %v138
  %v156 = vpack.c.b16 %v141, %v140
  %v157 = vpack.c.b16 %v143, %v142
  %v158 = vpack.c.b16 %v145, %v144
  %v159 = vpack.c.b16 %v147, %v146
  %v160 = vpack.c.b16 %v149, %v148
  %v161 = vpack.c.b16 %v151, %v150
  %v162 = vpack.c.b16 %v153, %v152
  %vm172 = vcmask 130048
  %v174 = vsel %vm172, %v95, 0
  %v177 = vsel %vm172, %v97, 0
  %v180 = vsel %vm172, %v99, 0
  %v183 = vsel %vm172, %v101, 0
  %v186 = vsel %vm172, %v103, 0
  %v189 = vsel %vm172, %v105, 0
  %v192 = vsel %vm172, %v107, 0
  %v195 = vsel %vm172, %v109, 0
  %197 = vmatpush.bf16.msra.mxu0 %v161
  %198 = vmatpush.bf16.msra.mxu0 %v160
  %199 = vmatpush.bf16.msra.mxu0 %v159
  %200 = vmatpush.bf16.msra.mxu0 %v158
  %201 = vmatpush.bf16.msra.mxu0 %v157
  %202 = vmatpush.bf16.msra.mxu0 %v156
  %203 = vmatpush.bf16.msra.mxu0 %v155
  %204 = vmatpush.bf16.msra.mxu0 %v154
  %205 = vmatmul.bf16.gmra.mxu0 %v94
  %v206 = vpop.f32.mrf.mxu0
  %v207 = vadd.f32 0.0, %v206
  %v208 = vpop.f32.mrf.mxu0
  %v209 = vadd.f32 0.0, %v208
  %210 = vmatmul.bf16.gmra.mxu0 %v96
  %v211 = vpop.f32.mrf.mxu0
  %v212 = vadd.f32 0.0, %v211
  %v213 = vpop.f32.mrf.mxu0
  %v214 = vadd.f32 0.0, %v213
  %215 = vmatmul.bf16.gmra.mxu0 %v98
  %v216 = vpop.f32.mrf.mxu0
  %v217 = vadd.f32 0.0, %v216
  %v218 = vpop.f32.mrf.mxu0
  %v219 = vadd.f32 0.0, %v218
  %220 = vmatmul.bf16.gmra.mxu0 %v100
  %v221 = vpop.f32.mrf.mxu0
  %v222 = vadd.f32 0.0, %v221
  %v223 = vpop.f32.mrf.mxu0
  %v224 = vadd.f32 0.0, %v223
  %225 = vmatmul.bf16.gmra.mxu0 %v102
  %v226 = vpop.f32.mrf.mxu0
  %v227 = vadd.f32 0.0, %v226
  %v228 = vpop.f32.mrf.mxu0
  %v229 = vadd.f32 0.0, %v228
  %230 = vmatmul.bf16.gmra.mxu0 %v104
  %v231 = vpop.f32.mrf.mxu0
  %v232 = vadd.f32 0.0, %v231
  %v233 = vpop.f32.mrf.mxu0
  %v234 = vadd.f32 0.0, %v233
  %235 = vmatmul.bf16.gmra.mxu0 %v106
  %v236 = vpop.f32.mrf.mxu0
  %v237 = vadd.f32 0.0, %v236
  %v238 = vpop.f32.mrf.mxu0
  %v239 = vadd.f32 0.0, %v238
  %240 = vmatmul.bf16.gmra.mxu0 %v108
  %v241 = vpop.f32.mrf.mxu0
  %v242 = vadd.f32 0.0, %v241
  %v243 = vpop.f32.mrf.mxu0
  %v244 = vadd.f32 0.0, %v243
  %245 = vdwg.mxu0
  %246 = vmatpush.bf16.msra.mxu0 0
  %247 = vmatpush.bf16.msra.mxu0 0
  %248 = vmatpush.bf16.msra.mxu0 0
  %249 = vmatpush.bf16.msra.mxu0 0
  %250 = vmatpush.bf16.msra.mxu0 0
  %251 = vmatpush.bf16.msra.mxu0 0
  %252 = vmatpush.bf16.msra.mxu0 0
  %253 = vmatpush.bf16.msra.mxu0 %v162
  %254 = vmatmul.bf16.gmra.mxu0 %v174
  %v255 = vpop.f32.mrf.mxu0
  %v256 = vadd.f32 %v207, %v255
  %v257 = vpop.f32.mrf.mxu0
  %v258 = vadd.f32 %v209, %v257
  %259 = vmatmul.bf16.gmra.mxu0 %v177
  %v260 = vpop.f32.mrf.mxu0
  %v261 = vadd.f32 %v212, %v260
  %v262 = vpop.f32.mrf.mxu0
  %v263 = vadd.f32 %v214, %v262
  %264 = vmatmul.bf16.gmra.mxu0 %v180
  %v265 = vpop.f32.mrf.mxu0
  %v266 = vadd.f32 %v217, %v265
  %v267 = vpop.f32.mrf.mxu0
  %v268 = vadd.f32 %v219, %v267
  %269 = vmatmul.bf16.gmra.mxu0 %v183
  %v270 = vpop.f32.mrf.mxu0
  %v271 = vadd.f32 %v222, %v270
  %v272 = vpop.f32.mrf.mxu0
  %v273 = vadd.f32 %v224, %v272
  %274 = vmatmul.bf16.gmra.mxu0 %v186
  %v275 = vpop.f32.mrf.mxu0
  %v276 = vadd.f32 %v227, %v275
  %v277 = vpop.f32.mrf.mxu0
  %v278 = vadd.f32 %v229, %v277
  %279 = vmatmul.bf16.gmra.mxu0 %v189
  %v280 = vpop.f32.mrf.mxu0
  %v281 = vadd.f32 %v232, %v280
  %v282 = vpop.f32.mrf.mxu0
  %v283 = vadd.f32 %v234, %v282
  %284 = vmatmul.bf16.gmra.mxu0 %v192
  %v285 = vpop.f32.mrf.mxu0
  %v286 = vadd.f32 %v237, %v285
  %v287 = vpop.f32.mrf.mxu0
  %v288 = vadd.f32 %v239, %v287
  %289 = vmatmul.bf16.gmra.mxu0 %v195
  %v290 = vpop.f32.mrf.mxu0
  %v291 = vadd.f32 %v242, %v290
  %v292 = vpop.f32.mrf.mxu0
  %v293 = vadd.f32 %v244, %v292
  %294 = vdwg.mxu0
  %v295 = vmul.f32 %v256, 0.2
  %v296 = vmul.f32 %v258, 0.2
  %v297 = vmul.f32 %v261, 0.2
  %v298 = vmul.f32 %v263, 0.2
  %v299 = vmul.f32 %v266, 0.2
  %v300 = vmul.f32 %v268, 0.2
  %v301 = vmul.f32 %v271, 0.2
  %v302 = vmul.f32 %v273, 0.2
  %v303 = vmul.f32 %v276, 0.2
  %v304 = vmul.f32 %v278, 0.2
  %v305 = vmul.f32 %v281, 0.2
  %v306 = vmul.f32 %v283, 0.2
  %v307 = vmul.f32 %v286, 0.2
  %v308 = vmul.f32 %v288, 0.2
  %v309 = vmul.f32 %v291, 0.2
  %v310 = vmul.f32 %v293, 0.2
  %v311 = vmax.f32 %v256, %v295
  %v312 = vmax.f32 %v258, %v296
  %v313 = vmax.f32 %v261, %v297
  %v314 = vmax.f32 %v263, %v298
  %v315 = vmax.f32 %v266, %v299
  %v316 = vmax.f32 %v268, %v300
  %v317 = vmax.f32 %v271, %v301
  %v318 = vmax.f32 %v273, %v302
  %v319 = vmax.f32 %v276, %v303
  %v320 = vmax.f32 %v278, %v304
  %v321 = vmax.f32 %v281, %v305
  %v322 = vmax.f32 %v283, %v306
  %v323 = vmax.f32 %v286, %v307
  %v324 = vmax.f32 %v288, %v308
  %v325 = vmax.f32 %v291, %v309
  %v326 = vmax.f32 %v293, %v310
  %v327 = vpack.c.bf16 %v311, %v311
  %v328 = vpack.c.bf16 %v312, %v312
  %v329 = vpack.c.bf16 %v313, %v313
  %v330 = vpack.c.bf16 %v314, %v314
  %v331 = vpack.c.bf16 %v315, %v315
  %v332 = vpack.c.bf16 %v316, %v316
  %v333 = vpack.c.bf16 %v317, %v317
  %v334 = vpack.c.bf16 %v318, %v318
  %v335 = vpack.c.bf16 %v319, %v319
  %v336 = vpack.c.bf16 %v320, %v320
  %v337 = vpack.c.bf16 %v321, %v321
  %v338 = vpack.c.bf16 %v322, %v322
  %v339 = vpack.c.bf16 %v323, %v323
  %v340 = vpack.c.bf16 %v324, %v324
  %v341 = vpack.c.bf16 %v325, %v325
  %v342 = vpack.c.bf16 %v326, %v326
  %vm343 = vcmask 125952
  %344 = vst.msk [vmem:[%s2] sm:$0xf] %vm343, %v327
  %345 = vst.msk [vmem:[%s2 + $0x4] sm:$0xf] %vm343, %v328
  %346 = vst.msk [vmem:[%s2 + $0x8] sm:$0xf] %vm343, %v329
  %347 = vst.msk [vmem:[%s2 + $0xc] sm:$0xf] %vm343, %v330
  %348 = vst.msk [vmem:[%s2 + $0x10] sm:$0xf] %vm343, %v331
  %349 = vst.msk [vmem:[%s2 + $0x14] sm:$0xf] %vm343, %v332
  %350 = vst.msk [vmem:[%s2 + $0x18] sm:$0xf] %vm343, %v333
  %351 = vst.msk [vmem:[%s2 + $0x1c] sm:$0xf] %vm343, %v334
  %352 = vst.msk [vmem:[%s2 + $0x20] sm:$0xf] %vm343, %v335
  %353 = vst.msk [vmem:[%s2 + $0x24] sm:$0xf] %vm343, %v336
  %354 = vst.msk [vmem:[%s2 + $0x28] sm:$0xf] %vm343, %v337
  %355 = vst.msk [vmem:[%s2 + $0x2c] sm:$0xf] %vm343, %v338
  %356 = vst.msk [vmem:[%s2 + $0x30] sm:$0xf] %vm343, %v339
  %357 = vst.msk [vmem:[%s2 + $0x34] sm:$0xf] %vm343, %v340
  %358 = vst.msk [vmem:[%s2 + $0x38] sm:$0xf] %vm343, %v341
  %359 = vst.msk [vmem:[%s2 + $0x3c] sm:$0xf] %vm343, %v342
  // Predicated region
  $region10: #{unet_forward.16} parent=0 // pred_check
    _
  $region11: #{unet_forward.16} parent=0 // pred_check_branch
    %361 = sbr.rel (0) target = $region13
  $region12: #{unet_forward.16} parent=0 // pred_region
    _
  $region13: #{unet_forward.16} parent=0 // pred_fallthru
    _
  // Predicated region
  $region14: #{unet_forward.16} parent=0 // pred_check
    _
  $region15: #{unet_forward.16} parent=0 // pred_check_branch
    %363 = sbr.rel (0) target = $region17
  $region16: #{unet_forward.16} parent=0 // pred_region
    _
  $region17: #{unet_forward.16} parent=0 // pred_fallthru
    _

// kernel: unet_forward.17
$region0: #{unet_forward.17}
  #allocation0 [shape = 'u32[]', space=smem, size = 0x4, offset = 0x4, fixed_abs, tag = 'smem constant byte address 0x4 - core index']
  #allocation1 [shape = 'u32[72,128]{1,0:T(1,128)}', space=vmem, size = 0x9000, scoped, tag = 'internal scratch']
  %s0 = inlined_call_operand.vmem [shape: bf16[32,144], index: 0, kind: input, shape index: {}]
  %s1 = inlined_call_operand.vmem [shape: bf16[144,32], index: 1, kind: input, shape index: {}]
  %s2 = inlined_call_operand.vmem [shape: bf16[32,32], index: 2, kind: output, shape index: {}]
  %s3 = sld [smem:[#allocation0]]
  $region18: #{unet_forward.17} parent=0
    _
  %s5 = ssub.s32 1, %s3
  %s6 = scalar_select 0, %s5, %s3
  // Predicated region
  $region2: #{unet_forward.17} parent=0 // pred_check
    _
  $region3: #{unet_forward.17} parent=0 // pred_check_branch
    %8 = sbr.rel (0) target = $region5
  $region4: #{unet_forward.17} parent=0 // pred_region
    _
  $region5: #{unet_forward.17} parent=0 // pred_fallthru
    _
  // Predicated region
  $region6: #{unet_forward.17} parent=0 // pred_check
    _
  $region7: #{unet_forward.17} parent=0 // pred_check_branch
    %10 = sbr.rel (0) target = $region9
  $region8: #{unet_forward.17} parent=0 // pred_region
    _
  $region9: #{unet_forward.17} parent=0 // pred_fallthru
    _
  %v12 = vld [vmem:[%s0] sm:$0xff]
  %v13 = vld [vmem:[%s0 + $0x8] sm:$0xff]
  %v14 = vld [vmem:[%s0 + $0x10] sm:$0xff]
  %v15 = vld [vmem:[%s0 + $0x18] sm:$0xff]
  %v16 = vld [vmem:[%s1] sm:$0xf]
  %v17 = vld [vmem:[%s1 + $0x4] sm:$0xf]
  %v18 = vld [vmem:[%s1 + $0x8] sm:$0xf]
  %v19 = vld [vmem:[%s1 + $0xc] sm:$0xf]
  %v20 = vld [vmem:[%s1 + $0x10] sm:$0xf]
  %v21 = vld [vmem:[%s1 + $0x14] sm:$0xf]
  %v22 = vld [vmem:[%s1 + $0x18] sm:$0xf]
  %v23 = vld [vmem:[%s1 + $0x1c] sm:$0xf]
  %v24 = vld [vmem:[%s1 + $0x20] sm:$0xf]
  %v25 = vld [vmem:[%s1 + $0x24] sm:$0xf]
  %v26 = vld [vmem:[%s1 + $0x28] sm:$0xf]
  %v27 = vld [vmem:[%s1 + $0x2c] sm:$0xf]
  %v28 = vld [vmem:[%s1 + $0x30] sm:$0xf]
  %v29 = vld [vmem:[%s1 + $0x34] sm:$0xf]
  %v30 = vld [vmem:[%s1 + $0x38] sm:$0xf]
  %v31 = vld [vmem:[%s1 + $0x3c] sm:$0xf]
  %v32 = vld [vmem:[%s1 + $0x40] sm:$0xf]
  %v33 = vld [vmem:[%s1 + $0x44] sm:$0xf]
  %v38 = vunpack.c.l.b16 %v12
  %v39 = vunpack.c.h.b16 %v12
  %v40 = vunpack.c.l.b16 %v13
  %v41 = vunpack.c.h.b16 %v13
  %v42 = vunpack.c.l.b16 %v14
  %v43 = vunpack.c.h.b16 %v14
  %v44 = vunpack.c.l.b16 %v15
  %v45 = vunpack.c.h.b16 %v15
  %v46 = vpack.c.b16 %v40, %v38
  %v47 = vpack.c.b16 %v41, %v39
  %v48 = vpack.c.b16 %v44, %v42
  %v49 = vpack.c.b16 %v45, %v43
  %v70 = vunpack.c.l.b16 %v16
  %v71 = vunpack.c.l.b16 %v17
  %v72 = vunpack.c.l.b16 %v18
  %v73 = vunpack.c.l.b16 %v19
  %v74 = vunpack.c.l.b16 %v20
  %v75 = vunpack.c.l.b16 %v21
  %v76 = vunpack.c.l.b16 %v22
  %v77 = vunpack.c.l.b16 %v23
  %v78 = vunpack.c.l.b16 %v24
  %v79 = vunpack.c.l.b16 %v25
  %v80 = vunpack.c.l.b16 %v26
  %v81 = vunpack.c.l.b16 %v27
  %v82 = vunpack.c.l.b16 %v28
  %v83 = vunpack.c.l.b16 %v29
  %v84 = vunpack.c.l.b16 %v30
  %v85 = vunpack.c.l.b16 %v31
  %v86 = vunpack.c.l.b16 %v32
  %v87 = vunpack.c.l.b16 %v33
  %v88 = vpack.c.b16 %v71, %v70
  %v89 = vpack.c.b16 %v73, %v72
  %v90 = vpack.c.b16 %v75, %v74
  %v91 = vpack.c.b16 %v77, %v76
  %v92 = vpack.c.b16 %v79, %v78
  %v93 = vpack.c.b16 %v81, %v80
  %v94 = vpack.c.b16 %v83, %v82
  %v95 = vpack.c.b16 %v85, %v84
  %v96 = vpack.c.b16 %v87, %v86
  %vm106 = vcmask 130048
  %v108 = vsel %vm106, %v47, 0
  %v111 = vsel %vm106, %v49, 0
  %113 = vmatpush.bf16.msra.mxu0 %v95
  %114 = vmatpush.bf16.msra.mxu0 %v94
  %115 = vmatpush.bf16.msra.mxu0 %v93
  %116 = vmatpush.bf16.msra.mxu0 %v92
  %117 = vmatpush.bf16.msra.mxu0 %v91
  %118 = vmatpush.bf16.msra.mxu0 %v90
  %119 = vmatpush.bf16.msra.mxu0 %v89
  %120 = vmatpush.bf16.msra.mxu0 %v88
  %121 = vmatmul.bf16.gmra.mxu0 %v46
  %v122 = vpop.f32.mrf.mxu0
  %v123 = vadd.f32 0.0, %v122
  %v124 = vpop.f32.mrf.mxu0
  %v125 = vadd.f32 0.0, %v124
  %126 = vmatmul.bf16.gmra.mxu0 %v48
  %v127 = vpop.f32.mrf.mxu0
  %v128 = vadd.f32 0.0, %v127
  %v129 = vpop.f32.mrf.mxu0
  %v130 = vadd.f32 0.0, %v129
  %131 = vdwg.mxu0
  %132 = vmatpush.bf16.msra.mxu0 0
  %133 = vmatpush.bf16.msra.mxu0 0
  %134 = vmatpush.bf16.msra.mxu0 0
  %135 = vmatpush.bf16.msra.mxu0 0
  %136 = vmatpush.bf16.msra.mxu0 0
  %137 = vmatpush.bf16.msra.mxu0 0
  %138 = vmatpush.bf16.msra.mxu0 0
  %139 = vmatpush.bf16.msra.mxu0 %v96
  %140 = vmatmul.bf16.gmra.mxu0 %v108
  %v141 = vpop.f32.mrf.mxu0
  %v142 = vadd.f32 %v123, %v141
  %v143 = vpop.f32.mrf.mxu0
  %v144 = vadd.f32 %v125, %v143
  %145 = vmatmul.bf16.gmra.mxu0 %v111
  %v146 = vpop.f32.mrf.mxu0
  %v147 = vadd.f32 %v128, %v146
  %v148 = vpop.f32.mrf.mxu0
  %v149 = vadd.f32 %v130, %v148
  %150 = vdwg.mxu0
  %v151 = vmul.f32 %v142, 0.2
  %v152 = vmul.f32 %v144, 0.2
  %v153 = vmul.f32 %v147, 0.2
  %v154 = vmul.f32 %v149, 0.2
  %v155 = vmax.f32 %v142, %v151
  %v156 = vmax.f32 %v144, %v152
  %v157 = vmax.f32 %v147, %v153
  %v158 = vmax.f32 %v149, %v154
  %v159 = vpack.c.bf16 %v155, %v155
  %v160 = vpack.c.bf16 %v156, %v156
  %v161 = vpack.c.bf16 %v157, %v157
  %v162 = vpack.c.bf16 %v158, %v158
  %vm163 = vcmask 257024
  %164 = vst.msk [vmem:[%s2] sm:$0xf] %vm163, %v159
  %165 = vst.msk [vmem:[%s2 + $0x4] sm:$0xf] %vm163, %v160
  %166 = vst.msk [vmem:[%s2 + $0x8] sm:$0xf] %vm163, %v161
  %167 = vst.msk [vmem:[%s2 + $0xc] sm:$0xf] %vm163, %v162
  // Predicated region
  $region10: #{unet_forward.17} parent=0 // pred_check
    _
  $region11: #{unet_forward.17} parent=0 // pred_check_branch
    %169 = sbr.rel (0) target = $region13
  $region12: #{unet_forward.17} parent=0 // pred_region
    _
  $region13: #{unet_forward.17} parent=0 // pred_fallthru
    _
  // Predicated region
  $region14: #{unet_forward.17} parent=0 // pred_check
    _
  $region15: #{unet_forward.17} parent=0 // pred_check_branch
    %171 = sbr.rel (0) target = $region17
  $region16: #{unet_forward.17} parent=0 // pred_region
    _
  $region17: #{unet_forward.17} parent=0 // pred_fallthru
    _

// kernel: tile.14
$region0: #{tile.14}
  %s0 = inlined_call_operand.vmem [shape: f32[4,16], index: 0, kind: input, shape index: {}]
  %s1 = inlined_call_operand.vmem [shape: f32[1,64], index: 1, kind: output, shape index: {}]
  $region1: #{tile.14} parent=0
    #allocation0 [shape = 'u8[4096]{0}', space=vmem, size = 0x1000, scoped, tag = 'scoped mem for output reshape']
    #allocation1 [shape = 'u8[4096]{0}', space=vmem, size = 0x1000, scoped, tag = 'scoped mem for input reshape']
    %s3 = ssub.s32 16, 1
    %v4 = vld [vmem:[%s0] sm:%s3]
    %5 = vst [vmem:[#allocation1] sm:%s3] %v4
    %v6 = vld [vmem:[#allocation1] sm:$0x1]
    %vm7 = vcmask 130048
    %8 = vst.msk [vmem:[#allocation0] sm:$0x1] %vm7, %v6
    %s9 = scalar_lea.vmem [#allocation1], 3
    %v10 = vld [vmem:[%s9] sm:$0x1]
    %11 = vrot.lane.b32.xlu0 %v10, 48
    %v12 = vpop.permute.xlu0 %11
    %vm13 = vcmask 523648
    %14 = vst.msk [vmem:[#allocation0] sm:$0x1] %vm13, %v12
    %s15 = scalar_lea.vmem [#allocation1], 2
    %v16 = vld [vmem:[%s15] sm:$0x1]
    %17 = vrot.lane.b32.xlu0 %v16, 32
    %v18 = vpop.permute.xlu0 %17
    %vm19 = vcmask 392448
    %20 = vst.msk [vmem:[#allocation0] sm:$0x1] %vm19, %v18
    %s21 = scalar_lea.vmem [#allocation1], 1
    %v22 = vld [vmem:[%s21] sm:$0x1]
    %23 = vrot.lane.b32.xlu0 %v22, 16
    %v24 = vpop.permute.xlu0 %23
    %vm25 = vcmask 261248
    %26 = vst.msk [vmem:[#allocation0] sm:$0x1] %vm25, %v24
    %s28 = ssub.s32 2, 1
    %v29 = vld [vmem:[#allocation0] sm:%s28]
    %s31 = ssub.s32 2, 1
    %32 = vst [vmem:[%s1] sm:%s31] %v29

// kernel: tile.13
$region0: #{tile.13}
  #allocation0 [shape = 's32[1]{0}', space=sflag, size = 0x4, scoped, tag = 'scoped memory for tile.13']
  %s0 = inlined_call_operand.vmem [shape: f32[16], index: 0, kind: input, shape index: {}]
  %s1 = inlined_call_operand.vmem [shape: f32[4,16], index: 1, kind: output, shape index: {}]
  // Predicated region
  $region2: #{tile.13} parent=0 // pred_check
    _
  $region3: #{tile.13} parent=0 // pred_check_branch
    %3 = sbr.rel (0) target = $region5
  $region4: #{tile.13} parent=0 // pred_region
    _
  $region5: #{tile.13} parent=0 // pred_fallthru
    _
  %v4 = vld [vmem:[%s0] ss:$0 sm:$0xff]
  %5 = vst [vmem:[%s1] sm:$0xf] %v4

// kernel: unet_forward.19
$region0: #{unet_forward.19}
  #allocation0 [shape = 'u32[]', space=smem, size = 0x4, offset = 0x4, fixed_abs, tag = 'smem constant byte address 0x4 - core index']
  #allocation1 [shape = 'u32[72,128]{1,0:T(1,128)}', space=vmem, size = 0x9000, scoped, tag = 'internal scratch']
  %s0 = inlined_call_operand.vmem [shape: bf16[32,32], index: 0, kind: input, shape index: {}]
  %s1 = inlined_call_operand.vmem [shape: bf16[32,64], index: 1, kind: input, shape index: {}]
  %s2 = inlined_call_operand.vmem [shape: f32[1,64], index: 2, kind: input, shape index: {}]
  %s3 = inlined_call_operand.vmem [shape: bf16[32,64], index: 3, kind: output, shape index: {}]
  %s4 = sld [smem:[#allocation0]]
  $region22: #{unet_forward.19} parent=0
    _
  %s6 = ssub.s32 1, %s4
  %s7 = scalar_select 0, %s6, %s4
  // Predicated region
  $region2: #{unet_forward.19} parent=0 // pred_check
    _
  $region3: #{unet_forward.19} parent=0 // pred_check_branch
    %9 = sbr.rel (0) target = $region5
  $region4: #{unet_forward.19} parent=0 // pred_region
    _
  $region5: #{unet_forward.19} parent=0 // pred_fallthru
    _
  // Predicated region
  $region6: #{unet_forward.19} parent=0 // pred_check
    _
  $region7: #{unet_forward.19} parent=0 // pred_check_branch
    %11 = sbr.rel (0) target = $region9
  $region8: #{unet_forward.19} parent=0 // pred_region
    _
  $region9: #{unet_forward.19} parent=0 // pred_fallthru
    _
  // Predicated region
  $region10: #{unet_forward.19} parent=0 // pred_check
    _
  $region11: #{unet_forward.19} parent=0 // pred_check_branch
    %13 = sbr.rel (0) target = $region13
  $region12: #{unet_forward.19} parent=0 // pred_region
    _
  $region13: #{unet_forward.19} parent=0 // pred_fallthru
    _
  %v15 = vld [vmem:[%s0] sm:$0xf]
  %v16 = vld [vmem:[%s0 + $0x4] sm:$0xf]
  %v17 = vld [vmem:[%s0 + $0x8] sm:$0xf]
  %v18 = vld [vmem:[%s0 + $0xc] sm:$0xf]
  %v19 = vld [vmem:[%s1] sm:$0xf]
  %v20 = vld [vmem:[%s1 + $0x4] sm:$0xf]
  %v21 = vld [vmem:[%s1 + $0x8] sm:$0xf]
  %v22 = vld [vmem:[%s1 + $0xc] sm:$0xf]
  %v23 = vld [vmem:[%s2] sm:$0x1]
  %v25 = vperm.slane %v23, 0
  %v31 = vunpack.c.l.b16 %v15
  %v32 = vunpack.c.l.b16 %v16
  %v33 = vunpack.c.l.b16 %v17
  %v34 = vunpack.c.l.b16 %v18
  %v35 = vpack.c.b16 %v32, %v31
  %v36 = vpack.c.b16 %v34, %v33
  %v41 = vunpack.c.l.b16 %v19
  %v42 = vunpack.c.l.b16 %v20
  %v43 = vunpack.c.l.b16 %v21
  %v44 = vunpack.c.l.b16 %v22
  %v45 = vpack.c.b16 %v42, %v41
  %v46 = vpack.c.b16 %v44, %v43
  %vm49 = vcmask 261120
  %v51 = vsel %vm49, %v35, 0
  %v54 = vsel %vm49, %v36, 0
  %56 = vmatpush.bf16.msra.mxu0 0
  %57 = vmatpush.bf16.msra.mxu0 0
  %58 = vmatpush.bf16.msra.mxu0 0
  %59 = vmatpush.bf16.msra.mxu0 0
  %60 = vmatpush.bf16.msra.mxu0 0
  %61 = vmatpush.bf16.msra.mxu0 0
  %62 = vmatpush.bf16.msra.mxu0 %v46
  %63 = vmatpush.bf16.msra.mxu0 %v45
  %64 = vmatmul.bf16.gmra.mxu0 %v51
  %v65 = vpop.f32.mrf.mxu0
  %v66 = vadd.f32 %v25, %v65
  %v67 = vpop.f32.mrf.mxu0
  %v68 = vadd.f32 %v25, %v67
  %69 = vmatmul.bf16.gmra.mxu0 %v54
  %v70 = vpop.f32.mrf.mxu0
  %v71 = vadd.f32 %v25, %v70
  %v72 = vpop.f32.mrf.mxu0
  %v73 = vadd.f32 %v25, %v72
  %74 = vdwg.mxu0
  %v75 = vpack.c.bf16 %v66, %v66
  %v76 = vpack.c.bf16 %v68, %v68
  %v77 = vpack.c.bf16 %v71, %v71
  %v78 = vpack.c.bf16 %v73, %v73
  %vm79 = vcmask 519168
  %80 = vst.msk [vmem:[%s3] sm:$0xf] %vm79, %v75
  %81 = vst.msk [vmem:[%s3 + $0x4] sm:$0xf] %vm79, %v76
  %82 = vst.msk [vmem:[%s3 + $0x8] sm:$0xf] %vm79, %v77
  %83 = vst.msk [vmem:[%s3 + $0xc] sm:$0xf] %vm79, %v78
  // Predicated region
  $region14: #{unet_forward.19} parent=0 // pred_check
    _
  $region15: #{unet_forward.19} parent=0 // pred_check_branch
    %85 = sbr.rel (0) target = $region17
  $region16: #{unet_forward.19} parent=0 // pred_region
    _
  $region17: #{unet_forward.19} parent=0 // pred_fallthru
    _
  // Predicated region
  $region18: #{unet_forward.19} parent=0 // pred_check
    _
  $region19: #{unet_forward.19} parent=0 // pred_check_branch
    %87 = sbr.rel (0) target = $region21
  $region20: #{unet_forward.19} parent=0 // pred_region
    _
  $region21: #{unet_forward.19} parent=0 // pred_fallthru
    _

// kernel: unet_forward.18
$region0: #{unet_forward.18}
  #allocation0 [shape = 'u32[]', space=smem, size = 0x4, offset = 0x4, fixed_abs, tag = 'smem constant byte address 0x4 - core index']
  #allocation1 [shape = 'u32[72,128]{1,0:T(1,128)}', space=vmem, size = 0x9000, scoped, tag = 'internal scratch']
  %s0 = inlined_call_operand.vmem [shape: bf16[32,288], index: 0, kind: input, shape index: {}]
  %s1 = inlined_call_operand.vmem [shape: bf16[288,32], index: 1, kind: input, shape index: {}]
  %s2 = inlined_call_operand.vmem [shape: bf16[32,32], index: 2, kind: output, shape index: {}]
  %s3 = sld [smem:[#allocation0]]
  $region18: #{unet_forward.18} parent=0
    _
  %s5 = ssub.s32 1, %s3
  %s6 = scalar_select 0, %s5, %s3
  // Predicated region
  $region2: #{unet_forward.18} parent=0 // pred_check
    _
  $region3: #{unet_forward.18} parent=0 // pred_check_branch
    %8 = sbr.rel (0) target = $region5
  $region4: #{unet_forward.18} parent=0 // pred_region
    _
  $region5: #{unet_forward.18} parent=0 // pred_fallthru
    _
  // Predicated region
  $region6: #{unet_forward.18} parent=0 // pred_check
    _
  $region7: #{unet_forward.18} parent=0 // pred_check_branch
    %10 = sbr.rel (0) target = $region9
  $region8: #{unet_forward.18} parent=0 // pred_region
    _
  $region9: #{unet_forward.18} parent=0 // pred_fallthru
    _
  %v12 = vld [vmem:[%s0] sm:$0xff]
  %v13 = vld [vmem:[%s0 + $0x8] sm:$0xf]
  %v14 = vld [vmem:[%s0 + $0xc] sm:$0xff]
  %v15 = vld [vmem:[%s0 + $0x14] sm:$0xf]
  %v16 = vld [vmem:[%s0 + $0x18] sm:$0xff]
  %v17 = vld [vmem:[%s0 + $0x20] sm:$0xf]
  %v18 = vld [vmem:[%s0 + $0x24] sm:$0xff]
  %v19 = vld [vmem:[%s0 + $0x2c] sm:$0xf]
  %v20 = vld [vmem:[%s1] sm:$0xf]
  %v21 = vld [vmem:[%s1 + $0x4] sm:$0xf]
  %v22 = vld [vmem:[%s1 + $0x8] sm:$0xf]
  %v23 = vld [vmem:[%s1 + $0xc] sm:$0xf]
  %v24 = vld [vmem:[%s1 + $0x10] sm:$0xf]
  %v25 = vld [vmem:[%s1 + $0x14] sm:$0xf]
  %v26 = vld [vmem:[%s1 + $0x18] sm:$0xf]
  %v27 = vld [vmem:[%s1 + $0x1c] sm:$0xf]
  %v28 = vld [vmem:[%s1 + $0x20] sm:$0xf]
  %v29 = vld [vmem:[%s1 + $0x24] sm:$0xf]
  %v30 = vld [vmem:[%s1 + $0x28] sm:$0xf]
  %v31 = vld [vmem:[%s1 + $0x2c] sm:$0xf]
  %v32 = vld [vmem:[%s1 + $0x30] sm:$0xf]
  %v33 = vld [vmem:[%s1 + $0x34] sm:$0xf]
  %v34 = vld [vmem:[%s1 + $0x38] sm:$0xf]
  %v35 = vld [vmem:[%s1 + $0x3c] sm:$0xf]
  %v36 = vld [vmem:[%s1 + $0x40] sm:$0xf]
  %v37 = vld [vmem:[%s1 + $0x44] sm:$0xf]
  %v38 = vld [vmem:[%s1 + $0x48] sm:$0xf]
  %v39 = vld [vmem:[%s1 + $0x4c] sm:$0xf]
  %v40 = vld [vmem:[%s1 + $0x50] sm:$0xf]
  %v41 = vld [vmem:[%s1 + $0x54] sm:$0xf]
  %v42 = vld [vmem:[%s1 + $0x58] sm:$0xf]
  %v43 = vld [vmem:[%s1 + $0x5c] sm:$0xf]
  %v44 = vld [vmem:[%s1 + $0x60] sm:$0xf]
  %v45 = vld [vmem:[%s1 + $0x64] sm:$0xf]
  %v46 = vld [vmem:[%s1 + $0x68] sm:$0xf]
  %v47 = vld [vmem:[%s1 + $0x6c] sm:$0xf]
  %v48 = vld [vmem:[%s1 + $0x70] sm:$0xf]
  %v49 = vld [vmem:[%s1 + $0x74] sm:$0xf]
  %v50 = vld [vmem:[%s1 + $0x78] sm:$0xf]
  %v51 = vld [vmem:[%s1 + $0x7c] sm:$0xf]
  %v52 = vld [vmem:[%s1 + $0x80] sm:$0xf]
  %v53 = vld [vmem:[%s1 + $0x84] sm:$0xf]
  %v54 = vld [vmem:[%s1 + $0x88] sm:$0xf]
  %v55 = vld [vmem:[%s1 + $0x8c] sm:$0xf]
  %v64 = vunpack.c.l.b16 %v12
  %v65 = vunpack.c.h.b16 %v12
  %v66 = vunpack.c.l.b16 %v13
  %v67 = vunpack.c.l.b16 %v14
  %v68 = vunpack.c.h.b16 %v14
  %v69 = vunpack.c.l.b16 %v15
  %v70 = vunpack.c.l.b16 %v16
  %v71 = vunpack.c.h.b16 %v16
  %v72 = vunpack.c.l.b16 %v17
  %v73 = vunpack.c.l.b16 %v18
  %v74 = vunpack.c.h.b16 %v18
  %v75 = vunpack.c.l.b16 %v19
  %v76 = vpack.c.b16 %v67, %v64
  %v77 = vpack.c.b16 %v68, %v65
  %v78 = vpack.c.b16 %v69, %v66
  %v79 = vpack.c.b16 %v73, %v70
  %v80 = vpack.c.b16 %v74, %v71
  %v81 = vpack.c.b16 %v75, %v72
  %v122 = vunpack.c.l.b16 %v20
  %v123 = vunpack.c.l.b16 %v21
  %v124 = vunpack.c.l.b16 %v22
  %v125 = vunpack.c.l.b16 %v23
  %v126 = vunpack.c.l.b16 %v24
  %v127 = vunpack.c.l.b16 %v25
  %v128 = vunpack.c.l.b16 %v26
  %v129 = vunpack.c.l.b16 %v27
  %v130 = vunpack.c.l.b16 %v28
  %v131 = vunpack.c.l.b16 %v29
  %v132 = vunpack.c.l.b16 %v30
  %v133 = vunpack.c.l.b16 %v31
  %v134 = vunpack.c.l.b16 %v32
  %v135 = vunpack.c.l.b16 %v33
  %v136 = vunpack.c.l.b16 %v34
  %v137 = vunpack.c.l.b16 %v35
  %v138 = vunpack.c.l.b16 %v36
  %v139 = vunpack.c.l.b16 %v37
  %v140 = vunpack.c.l.b16 %v38
  %v141 = vunpack.c.l.b16 %v39
  %v142 = vunpack.c.l.b16 %v40
  %v143 = vunpack.c.l.b16 %v41
  %v144 = vunpack.c.l.b16 %v42
  %v145 = vunpack.c.l.b16 %v43
  %v146 = vunpack.c.l.b16 %v44
  %v147 = vunpack.c.l.b16 %v45
  %v148 = vunpack.c.l.b16 %v46
  %v149 = vunpack.c.l.b16 %v47
  %v150 = vunpack.c.l.b16 %v48
  %v151 = vunpack.c.l.b16 %v49
  %v152 = vunpack.c.l.b16 %v50
  %v153 = vunpack.c.l.b16 %v51
  %v154 = vunpack.c.l.b16 %v52
  %v155 = vunpack.c.l.b16 %v53
  %v156 = vunpack.c.l.b16 %v54
  %v157 = vunpack.c.l.b16 %v55
  %v158 = vpack.c.b16 %v123, %v122
  %v159 = vpack.c.b16 %v125, %v124
  %v160 = vpack.c.b16 %v127, %v126
  %v161 = vpack.c.b16 %v129, %v128
  %v162 = vpack.c.b16 %v131, %v130
  %v163 = vpack.c.b16 %v133, %v132
  %v164 = vpack.c.b16 %v135, %v134
  %v165 = vpack.c.b16 %v137, %v136
  %v166 = vpack.c.b16 %v139, %v138
  %v167 = vpack.c.b16 %v141, %v140
  %v168 = vpack.c.b16 %v143, %v142
  %v169 = vpack.c.b16 %v145, %v144
  %v170 = vpack.c.b16 %v147, %v146
  %v171 = vpack.c.b16 %v149, %v148
  %v172 = vpack.c.b16 %v151, %v150
  %v173 = vpack.c.b16 %v153, %v152
  %v174 = vpack.c.b16 %v155, %v154
  %v175 = vpack.c.b16 %v157, %v156
  %vm194 = vcmask 261120
  %v196 = vsel %vm194, %v78, 0
  %v199 = vsel %vm194, %v81, 0
  %201 = vmatpush.bf16.msra.mxu0 %v165
  %202 = vmatpush.bf16.msra.mxu0 %v164
  %203 = vmatpush.bf16.msra.mxu0 %v163
  %204 = vmatpush.bf16.msra.mxu0 %v162
  %205 = vmatpush.bf16.msra.mxu0 %v161
  %206 = vmatpush.bf16.msra.mxu0 %v160
  %207 = vmatpush.bf16.msra.mxu0 %v159
  %208 = vmatpush.bf16.msra.mxu0 %v158
  %209 = vmatmul.bf16.gmra.mxu0 %v76
  %v210 = vpop.f32.mrf.mxu0
  %v211 = vadd.f32 0.0, %v210
  %v212 = vpop.f32.mrf.mxu0
  %v213 = vadd.f32 0.0, %v212
  %214 = vmatmul.bf16.gmra.mxu0 %v79
  %v215 = vpop.f32.mrf.mxu0
  %v216 = vadd.f32 0.0, %v215
  %v217 = vpop.f32.mrf.mxu0
  %v218 = vadd.f32 0.0, %v217
  %219 = vdwg.mxu0
  %220 = vmatpush.bf16.msra.mxu0 %v173
  %221 = vmatpush.bf16.msra.mxu0 %v172
  %222 = vmatpush.bf16.msra.mxu0 %v171
  %223 = vmatpush.bf16.msra.mxu0 %v170
  %224 = vmatpush.bf16.msra.mxu0 %v169
  %225 = vmatpush.bf16.msra.mxu0 %v168
  %226 = vmatpush.bf16.msra.mxu0 %v167
  %227 = vmatpush.bf16.msra.mxu0 %v166
  %228 = vmatmul.bf16.gmra.mxu0 %v77
  %v229 = vpop.f32.mrf.mxu0
  %v230 = vadd.f32 %v211, %v229
  %v231 = vpop.f32.mrf.mxu0
  %v232 = vadd.f32 %v213, %v231
  %233 = vmatmul.bf16.gmra.mxu0 %v80
  %v234 = vpop.f32.mrf.mxu0
  %v235 = vadd.f32 %v216, %v234
  %v236 = vpop.f32.mrf.mxu0
  %v237 = vadd.f32 %v218, %v236
  %238 = vdwg.mxu0
  %239 = vmatpush.bf16.msra.mxu0 0
  %240 = vmatpush.bf16.msra.mxu0 0
  %241 = vmatpush.bf16.msra.mxu0 0
  %242 = vmatpush.bf16.msra.mxu0 0
  %243 = vmatpush.bf16.msra.mxu0 0
  %244 = vmatpush.bf16.msra.mxu0 0
  %245 = vmatpush.bf16.msra.mxu0 %v175
  %246 = vmatpush.bf16.msra.mxu0 %v174
  %247 = vmatmul.bf16.gmra.mxu0 %v196
  %v248 = vpop.f32.mrf.mxu0
  %v249 = vadd.f32 %v230, %v248
  %v250 = vpop.f32.mrf.mxu0
  %v251 = vadd.f32 %v232, %v250
  %252 = vmatmul.bf16.gmra.mxu0 %v199
  %v253 = vpop.f32.mrf.mxu0
  %v254 = vadd.f32 %v235, %v253
  %v255 = vpop.f32.mrf.mxu0
  %v256 = vadd.f32 %v237, %v255
  %257 = vdwg.mxu0
  %v258 = vmul.f32 %v249, 0.2
  %v259 = vmul.f32 %v251, 0.2
  %v260 = vmul.f32 %v254, 0.2
  %v261 = vmul.f32 %v256, 0.2
  %v262 = vmax.f32 %v249, %v258
  %v263 = vmax.f32 %v251, %v259
  %v264 = vmax.f32 %v254, %v260
  %v265 = vmax.f32 %v256, %v261
  %v266 = vpack.c.bf16 %v262, %v262
  %v267 = vpack.c.bf16 %v263, %v263
  %v268 = vpack.c.bf16 %v264, %v264
  %v269 = vpack.c.bf16 %v265, %v265
  %vm270 = vcmask 257024
  %271 = vst.msk [vmem:[%s2] sm:$0xf] %vm270, %v266
  %272 = vst.msk [vmem:[%s2 + $0x4] sm:$0xf] %vm270, %v267
  %273 = vst.msk [vmem:[%s2 + $0x8] sm:$0xf] %vm270, %v268
  %274 = vst.msk [vmem:[%s2 + $0xc] sm:$0xf] %vm270, %v269
  // Predicated region
  $region10: #{unet_forward.18} parent=0 // pred_check
    _
  $region11: #{unet_forward.18} parent=0 // pred_check_branch
    %276 = sbr.rel (0) target = $region13
  $region12: #{unet_forward.18} parent=0 // pred_region
    _
  $region13: #{unet_forward.18} parent=0 // pred_fallthru
    _
  // Predicated region
  $region14: #{unet_forward.18} parent=0 // pred_check
    _
  $region15: #{unet_forward.18} parent=0 // pred_check_branch
    %278 = sbr.rel (0) target = $region17
  $region16: #{unet_forward.18} parent=0 // pred_region
    _
  $region17: #{unet_forward.18} parent=0 // pred_fallthru
    _

// kernel: tile.18
$region0: #{tile.18}
  #allocation0 [shape = 's32[1]{0}', space=sflag, size = 0x4, scoped, tag = 'scoped memory for tile.18']
  %s0 = inlined_call_operand.vmem [shape: f32[8], index: 0, kind: input, shape index: {}]
  %s1 = inlined_call_operand.vmem [shape: f32[4,8], index: 1, kind: output, shape index: {}]
  // Predicated region
  $region2: #{tile.18} parent=0 // pred_check
    _
  $region3: #{tile.18} parent=0 // pred_check_branch
    %3 = sbr.rel (0) target = $region5
  $region4: #{tile.18} parent=0 // pred_region
    _
  $region5: #{tile.18} parent=0 // pred_fallthru
    _
  %v4 = vld [vmem:[%s0] ss:$0 sm:$0xff]
  %5 = vst [vmem:[%s1] sm:$0xf] %v4

// kernel: tile.19
$region0: #{tile.19}
  %s0 = inlined_call_operand.vmem [shape: f32[4,8], index: 0, kind: input, shape index: {}]
  %s1 = inlined_call_operand.vmem [shape: f32[1,32], index: 1, kind: output, shape index: {}]
  $region1: #{tile.19} parent=0
    #allocation0 [shape = 'u8[4096]{0}', space=vmem, size = 0x1000, scoped, tag = 'scoped mem for output reshape']
    #allocation1 [shape = 'u8[4096]{0}', space=vmem, size = 0x1000, scoped, tag = 'scoped mem for input reshape']
    %s3 = ssub.s32 16, 1
    %v4 = vld [vmem:[%s0] sm:%s3]
    %5 = vst [vmem:[#allocation1] sm:%s3] %v4
    %v6 = vld [vmem:[#allocation1] sm:$0x1]
    %vm7 = vcmask 64512
    %8 = vst.msk [vmem:[#allocation0] sm:$0x1] %vm7, %v6
    %s9 = scalar_lea.vmem [#allocation1], 3
    %v10 = vld [vmem:[%s9] sm:$0x1]
    %11 = vrot.lane.b32.xlu0 %v10, 24
    %v12 = vpop.permute.xlu0 %11
    %vm13 = vcmask 261312
    %14 = vst.msk [vmem:[#allocation0] sm:$0x1] %vm13, %v12
    %s15 = scalar_lea.vmem [#allocation1], 2
    %v16 = vld [vmem:[%s15] sm:$0x1]
    %17 = vrot.lane.b32.xlu0 %v16, 16
    %v18 = vpop.permute.xlu0 %17
    %vm19 = vcmask 195712
    %20 = vst.msk [vmem:[#allocation0] sm:$0x1] %vm19, %v18
    %s21 = scalar_lea.vmem [#allocation1], 1
    %v22 = vld [vmem:[%s21] sm:$0x1]
    %23 = vrot.lane.b32.xlu0 %v22, 8
    %v24 = vpop.permute.xlu0 %23
    %vm25 = vcmask 130112
    %26 = vst.msk [vmem:[#allocation0] sm:$0x1] %vm25, %v24
    %s28 = ssub.s32 2, 1
    %v29 = vld [vmem:[#allocation0] sm:%s28]
    %s31 = ssub.s32 2, 1
    %32 = vst [vmem:[%s1] sm:%s31] %v29

// kernel: unet_forward.22
$region0: #{unet_forward.22}
  #allocation0 [shape = 'u32[]', space=smem, size = 0x4, offset = 0x4, fixed_abs, tag = 'smem constant byte address 0x4 - core index']
  #allocation1 [shape = 'u32[72,128]{1,0:T(1,128)}', space=vmem, size = 0x9000, scoped, tag = 'internal scratch']
  %s0 = inlined_call_operand.vmem [shape: bf16[128,16], index: 0, kind: input, shape index: {}]
  %s1 = inlined_call_operand.vmem [shape: bf16[16,32], index: 1, kind: input, shape index: {}]
  %s2 = inlined_call_operand.vmem [shape: f32[1,32], index: 2, kind: input, shape index: {}]
  %s3 = inlined_call_operand.vmem [shape: bf16[128,32], index: 3, kind: output, shape index: {}]
  %s4 = sld [smem:[#allocation0]]
  $region22: #{unet_forward.22} parent=0
    _
  %s6 = ssub.s32 1, %s4
  %s7 = scalar_select 0, %s6, %s4
  // Predicated region
  $region2: #{unet_forward.22} parent=0 // pred_check
    _
  $region3: #{unet_forward.22} parent=0 // pred_check_branch
    %9 = sbr.rel (0) target = $region5
  $region4: #{unet_forward.22} parent=0 // pred_region
    _
  $region5: #{unet_forward.22} parent=0 // pred_fallthru
    _
  // Predicated region
  $region6: #{unet_forward.22} parent=0 // pred_check
    _
  $region7: #{unet_forward.22} parent=0 // pred_check_branch
    %11 = sbr.rel (0) target = $region9
  $region8: #{unet_forward.22} parent=0 // pred_region
    _
  $region9: #{unet_forward.22} parent=0 // pred_fallthru
    _
  // Predicated region
  $region10: #{unet_forward.22} parent=0 // pred_check
    _
  $region11: #{unet_forward.22} parent=0 // pred_check_branch
    %13 = sbr.rel (0) target = $region13
  $region12: #{unet_forward.22} parent=0 // pred_region
    _
  $region13: #{unet_forward.22} parent=0 // pred_fallthru
    _
  %v15 = vld [vmem:[%s0] sm:$0xf]
  %v16 = vld [vmem:[%s0 + $0x4] sm:$0xf]
  %v17 = vld [vmem:[%s0 + $0x8] sm:$0xf]
  %v18 = vld [vmem:[%s0 + $0xc] sm:$0xf]
  %v19 = vld [vmem:[%s0 + $0x10] sm:$0xf]
  %v20 = vld [vmem:[%s0 + $0x14] sm:$0xf]
  %v21 = vld [vmem:[%s0 + $0x18] sm:$0xf]
  %v22 = vld [vmem:[%s0 + $0x1c] sm:$0xf]
  %v23 = vld [vmem:[%s0 + $0x20] sm:$0xf]
  %v24 = vld [vmem:[%s0 + $0x24] sm:$0xf]
  %v25 = vld [vmem:[%s0 + $0x28] sm:$0xf]
  %v26 = vld [vmem:[%s0 + $0x2c] sm:$0xf]
  %v27 = vld [vmem:[%s0 + $0x30] sm:$0xf]
  %v28 = vld [vmem:[%s0 + $0x34] sm:$0xf]
  %v29 = vld [vmem:[%s0 + $0x38] sm:$0xf]
  %v30 = vld [vmem:[%s0 + $0x3c] sm:$0xf]
  %v31 = vld [vmem:[%s1] sm:$0xf]
  %v32 = vld [vmem:[%s1 + $0x4] sm:$0xf]
  %v33 = vld [vmem:[%s2] sm:$0x1]
  %v35 = vperm.slane %v33, 0
  %v53 = vunpack.c.l.b16 %v15
  %v54 = vunpack.c.l.b16 %v16
  %v55 = vunpack.c.l.b16 %v17
  %v56 = vunpack.c.l.b16 %v18
  %v57 = vunpack.c.l.b16 %v19
  %v58 = vunpack.c.l.b16 %v20
  %v59 = vunpack.c.l.b16 %v21
  %v60 = vunpack.c.l.b16 %v22
  %v61 = vunpack.c.l.b16 %v23
  %v62 = vunpack.c.l.b16 %v24
  %v63 = vunpack.c.l.b16 %v25
  %v64 = vunpack.c.l.b16 %v26
  %v65 = vunpack.c.l.b16 %v27
  %v66 = vunpack.c.l.b16 %v28
  %v67 = vunpack.c.l.b16 %v29
  %v68 = vunpack.c.l.b16 %v30
  %v69 = vpack.c.b16 %v54, %v53
  %v70 = vpack.c.b16 %v56, %v55
  %v71 = vpack.c.b16 %v58, %v57
  %v72 = vpack.c.b16 %v60, %v59
  %v73 = vpack.c.b16 %v62, %v61
  %v74 = vpack.c.b16 %v64, %v63
  %v75 = vpack.c.b16 %v66, %v65
  %v76 = vpack.c.b16 %v68, %v67
  %v79 = vunpack.c.l.b16 %v31
  %v80 = vunpack.c.l.b16 %v32
  %v81 = vpack.c.b16 %v80, %v79
  %vm83 = vcmask 130048
  %v85 = vsel %vm83, %v69, 0
  %v88 = vsel %vm83, %v70, 0
  %v91 = vsel %vm83, %v71, 0
  %v94 = vsel %vm83, %v72, 0
  %v97 = vsel %vm83, %v73, 0
  %v100 = vsel %vm83, %v74, 0
  %v103 = vsel %vm83, %v75, 0
  %v106 = vsel %vm83, %v76, 0
  %108 = vmatpush.bf16.msra.mxu0 0
  %109 = vmatpush.bf16.msra.mxu0 0
  %110 = vmatpush.bf16.msra.mxu0 0
  %111 = vmatpush.bf16.msra.mxu0 0
  %112 = vmatpush.bf16.msra.mxu0 0
  %113 = vmatpush.bf16.msra.mxu0 0
  %114 = vmatpush.bf16.msra.mxu0 0
  %115 = vmatpush.bf16.msra.mxu0 %v81
  %116 = vmatmul.bf16.gmra.mxu0 %v85
  %v117 = vpop.f32.mrf.mxu0
  %v118 = vadd.f32 %v35, %v117
  %v119 = vpop.f32.mrf.mxu0
  %v120 = vadd.f32 %v35, %v119
  %121 = vmatmul.bf16.gmra.mxu0 %v88
  %v122 = vpop.f32.mrf.mxu0
  %v123 = vadd.f32 %v35, %v122
  %v124 = vpop.f32.mrf.mxu0
  %v125 = vadd.f32 %v35, %v124
  %126 = vmatmul.bf16.gmra.mxu0 %v91
  %v127 = vpop.f32.mrf.mxu0
  %v128 = vadd.f32 %v35, %v127
  %v129 = vpop.f32.mrf.mxu0
  %v130 = vadd.f32 %v35, %v129
  %131 = vmatmul.bf16.gmra.mxu0 %v94
  %v132 = vpop.f32.mrf.mxu0
  %v133 = vadd.f32 %v35, %v132
  %v134 = vpop.f32.mrf.mxu0
  %v135 = vadd.f32 %v35, %v134
  %136 = vmatmul.bf16.gmra.mxu0 %v97
  %v137 = vpop.f32.mrf.mxu0
  %v138 = vadd.f32 %v35, %v137
  %v139 = vpop.f32.mrf.mxu0
  %v140 = vadd.f32 %v35, %v139
  %141 = vmatmul.bf16.gmra.mxu0 %v100
  %v142 = vpop.f32.mrf.mxu0
  %v143 = vadd.f32 %v35, %v142
  %v144 = vpop.f32.mrf.mxu0
  %v145 = vadd.f32 %v35, %v144
  %146 = vmatmul.bf16.gmra.mxu0 %v103
  %v147 = vpop.f32.mrf.mxu0
  %v148 = vadd.f32 %v35, %v147
  %v149 = vpop.f32.mrf.mxu0
  %v150 = vadd.f32 %v35, %v149
  %151 = vmatmul.bf16.gmra.mxu0 %v106
  %v152 = vpop.f32.mrf.mxu0
  %v153 = vadd.f32 %v35, %v152
  %v154 = vpop.f32.mrf.mxu0
  %v155 = vadd.f32 %v35, %v154
  %156 = vdwg.mxu0
  %v157 = vpack.c.bf16 %v118, %v118
  %v158 = vpack.c.bf16 %v120, %v120
  %v159 = vpack.c.bf16 %v123, %v123
  %v160 = vpack.c.bf16 %v125, %v125
  %v161 = vpack.c.bf16 %v128, %v128
  %v162 = vpack.c.bf16 %v130, %v130
  %v163 = vpack.c.bf16 %v133, %v133
  %v164 = vpack.c.bf16 %v135, %v135
  %v165 = vpack.c.bf16 %v138, %v138
  %v166 = vpack.c.bf16 %v140, %v140
  %v167 = vpack.c.bf16 %v143, %v143
  %v168 = vpack.c.bf16 %v145, %v145
  %v169 = vpack.c.bf16 %v148, %v148
  %v170 = vpack.c.bf16 %v150, %v150
  %v171 = vpack.c.bf16 %v153, %v153
  %v172 = vpack.c.bf16 %v155, %v155
  %vm173 = vcmask 257024
  %174 = vst.msk [vmem:[%s3] sm:$0xf] %vm173, %v157
  %175 = vst.msk [vmem:[%s3 + $0x4] sm:$0xf] %vm173, %v158
  %176 = vst.msk [vmem:[%s3 + $0x8] sm:$0xf] %vm173, %v159
  %177 = vst.msk [vmem:[%s3 + $0xc] sm:$0xf] %vm173, %v160
  %178 = vst.msk [vmem:[%s3 + $0x10] sm:$0xf] %vm173, %v161
  %179 = vst.msk [vmem:[%s3 + $0x14] sm:$0xf] %vm173, %v162
  %180 = vst.msk [vmem:[%s3 + $0x18] sm:$0xf] %vm173, %v163
  %181 = vst.msk [vmem:[%s3 + $0x1c] sm:$0xf] %vm173, %v164
  %182 = vst.msk [vmem:[%s3 + $0x20] sm:$0xf] %vm173, %v165
  %183 = vst.msk [vmem:[%s3 + $0x24] sm:$0xf] %vm173, %v166
  %184 = vst.msk [vmem:[%s3 + $0x28] sm:$0xf] %vm173, %v167
  %185 = vst.msk [vmem:[%s3 + $0x2c] sm:$0xf] %vm173, %v168
  %186 = vst.msk [vmem:[%s3 + $0x30] sm:$0xf] %vm173, %v169
  %187 = vst.msk [vmem:[%s3 + $0x34] sm:$0xf] %vm173, %v170
  %188 = vst.msk [vmem:[%s3 + $0x38] sm:$0xf] %vm173, %v171
  %189 = vst.msk [vmem:[%s3 + $0x3c] sm:$0xf] %vm173, %v172
  // Predicated region
  $region14: #{unet_forward.22} parent=0 // pred_check
    _
  $region15: #{unet_forward.22} parent=0 // pred_check_branch
    %191 = sbr.rel (0) target = $region17
  $region16: #{unet_forward.22} parent=0 // pred_region
    _
  $region17: #{unet_forward.22} parent=0 // pred_fallthru
    _
  // Predicated region
  $region18: #{unet_forward.22} parent=0 // pred_check
    _
  $region19: #{unet_forward.22} parent=0 // pred_check_branch
    %193 = sbr.rel (0) target = $region21
  $region20: #{unet_forward.22} parent=0 // pred_region
    _
  $region21: #{unet_forward.22} parent=0 // pred_fallthru
    _

// kernel: unet_forward.20
$region0: #{unet_forward.20}
  #allocation0 [shape = 'u32[]', space=smem, size = 0x4, offset = 0x4, fixed_abs, tag = 'smem constant byte address 0x4 - core index']
  #allocation1 [shape = 'u32[72,128]{1,0:T(1,128)}', space=vmem, size = 0x9000, scoped, tag = 'internal scratch']
  %s0 = inlined_call_operand.vmem [shape: bf16[128,288], index: 0, kind: input, shape index: {}]
  %s1 = inlined_call_operand.vmem [shape: bf16[288,16], index: 1, kind: input, shape index: {}]
  %s2 = inlined_call_operand.vmem [shape: bf16[128,16], index: 2, kind: output, shape index: {}]
  %s3 = sld [smem:[#allocation0]]
  $region18: #{unet_forward.20} parent=0
    _
  %s5 = ssub.s32 1, %s3
  %s6 = scalar_select 0, %s5, %s3
  // Predicated region
  $region2: #{unet_forward.20} parent=0 // pred_check
    _
  $region3: #{unet_forward.20} parent=0 // pred_check_branch
    %8 = sbr.rel (0) target = $region5
  $region4: #{unet_forward.20} parent=0 // pred_region
    _
  $region5: #{unet_forward.20} parent=0 // pred_fallthru
    _
  // Predicated region
  $region6: #{unet_forward.20} parent=0 // pred_check
    _
  $region7: #{unet_forward.20} parent=0 // pred_check_branch
    %10 = sbr.rel (0) target = $region9
  $region8: #{unet_forward.20} parent=0 // pred_region
    _
  $region9: #{unet_forward.20} parent=0 // pred_fallthru
    _
  %v12 = vld [vmem:[%s0] sm:$0xff]
  %v13 = vld [vmem:[%s0 + $0x8] sm:$0xf]
  %v14 = vld [vmem:[%s0 + $0xc] sm:$0xff]
  %v15 = vld [vmem:[%s0 + $0x14] sm:$0xf]
  %v16 = vld [vmem:[%s0 + $0x18] sm:$0xff]
  %v17 = vld [vmem:[%s0 + $0x20] sm:$0xf]
  %v18 = vld [vmem:[%s0 + $0x24] sm:$0xff]
  %v19 = vld [vmem:[%s0 + $0x2c] sm:$0xf]
  %v20 = vld [vmem:[%s0 + $0x30] sm:$0xff]
  %v21 = vld [vmem:[%s0 + $0x38] sm:$0xf]
  %v22 = vld [vmem:[%s0 + $0x3c] sm:$0xff]
  %v23 = vld [vmem:[%s0 + $0x44] sm:$0xf]
  %v24 = vld [vmem:[%s0 + $0x48] sm:$0xff]
  %v25 = vld [vmem:[%s0 + $0x50] sm:$0xf]
  %v26 = vld [vmem:[%s0 + $0x54] sm:$0xff]
  %v27 = vld [vmem:[%s0 + $0x5c] sm:$0xf]
  %v28 = vld [vmem:[%s0 + $0x60] sm:$0xff]
  %v29 = vld [vmem:[%s0 + $0x68] sm:$0xf]
  %v30 = vld [vmem:[%s0 + $0x6c] sm:$0xff]
  %v31 = vld [vmem:[%s0 + $0x74] sm:$0xf]
  %v32 = vld [vmem:[%s0 + $0x78] sm:$0xff]
  %v33 = vld [vmem:[%s0 + $0x80] sm:$0xf]
  %v34 = vld [vmem:[%s0 + $0x84] sm:$0xff]
  %v35 = vld [vmem:[%s0 + $0x8c] sm:$0xf]
  %v36 = vld [vmem:[%s0 + $0x90] sm:$0xff]
  %v37 = vld [vmem:[%s0 + $0x98] sm:$0xf]
  %v38 = vld [vmem:[%s0 + $0x9c] sm:$0xff]
  %v39 = vld [vmem:[%s0 + $0xa4] sm:$0xf]
  %v40 = vld [vmem:[%s0 + $0xa8] sm:$0xff]
  %v41 = vld [vmem:[%s0 + $0xb0] sm:$0xf]
  %v42 = vld [vmem:[%s0 + $0xb4] sm:$0xff]
  %v43 = vld [vmem:[%s0 + $0xbc] sm:$0xf]
  %v44 = vld [vmem:[%s1] sm:$0xf]
  %v45 = vld [vmem:[%s1 + $0x4] sm:$0xf]
  %v46 = vld [vmem:[%s1 + $0x8] sm:$0xf]
  %v47 = vld [vmem:[%s1 + $0xc] sm:$0xf]
  %v48 = vld [vmem:[%s1 + $0x10] sm:$0xf]
  %v49 = vld [vmem:[%s1 + $0x14] sm:$0xf]
  %v50 = vld [vmem:[%s1 + $0x18] sm:$0xf]
  %v51 = vld [vmem:[%s1 + $0x1c] sm:$0xf]
  %v52 = vld [vmem:[%s1 + $0x20] sm:$0xf]
  %v53 = vld [vmem:[%s1 + $0x24] sm:$0xf]
  %v54 = vld [vmem:[%s1 + $0x28] sm:$0xf]
  %v55 = vld [vmem:[%s1 + $0x2c] sm:$0xf]
  %v56 = vld [vmem:[%s1 + $0x30] sm:$0xf]
  %v57 = vld [vmem:[%s1 + $0x34] sm:$0xf]
  %v58 = vld [vmem:[%s1 + $0x38] sm:$0xf]
  %v59 = vld [vmem:[%s1 + $0x3c] sm:$0xf]
  %v60 = vld [vmem:[%s1 + $0x40] sm:$0xf]
  %v61 = vld [vmem:[%s1 + $0x44] sm:$0xf]
  %v62 = vld [vmem:[%s1 + $0x48] sm:$0xf]
  %v63 = vld [vmem:[%s1 + $0x4c] sm:$0xf]
  %v64 = vld [vmem:[%s1 + $0x50] sm:$0xf]
  %v65 = vld [vmem:[%s1 + $0x54] sm:$0xf]
  %v66 = vld [vmem:[%s1 + $0x58] sm:$0xf]
  %v67 = vld [vmem:[%s1 + $0x5c] sm:$0xf]
  %v68 = vld [vmem:[%s1 + $0x60] sm:$0xf]
  %v69 = vld [vmem:[%s1 + $0x64] sm:$0xf]
  %v70 = vld [vmem:[%s1 + $0x68] sm:$0xf]
  %v71 = vld [vmem:[%s1 + $0x6c] sm:$0xf]
  %v72 = vld [vmem:[%s1 + $0x70] sm:$0xf]
  %v73 = vld [vmem:[%s1 + $0x74] sm:$0xf]
  %v74 = vld [vmem:[%s1 + $0x78] sm:$0xf]
  %v75 = vld [vmem:[%s1 + $0x7c] sm:$0xf]
  %v76 = vld [vmem:[%s1 + $0x80] sm:$0xf]
  %v77 = vld [vmem:[%s1 + $0x84] sm:$0xf]
  %v78 = vld [vmem:[%s1 + $0x88] sm:$0xf]
  %v79 = vld [vmem:[%s1 + $0x8c] sm:$0xf]
  %v112 = vunpack.c.l.b16 %v12
  %v113 = vunpack.c.h.b16 %v12
  %v114 = vunpack.c.l.b16 %v13
  %v115 = vunpack.c.l.b16 %v14
  %v116 = vunpack.c.h.b16 %v14
  %v117 = vunpack.c.l.b16 %v15
  %v118 = vunpack.c.l.b16 %v16
  %v119 = vunpack.c.h.b16 %v16
  %v120 = vunpack.c.l.b16 %v17
  %v121 = vunpack.c.l.b16 %v18
  %v122 = vunpack.c.h.b16 %v18
  %v123 = vunpack.c.l.b16 %v19
  %v124 = vunpack.c.l.b16 %v20
  %v125 = vunpack.c.h.b16 %v20
  %v126 = vunpack.c.l.b16 %v21
  %v127 = vunpack.c.l.b16 %v22
  %v128 = vunpack.c.h.b16 %v22
  %v129 = vunpack.c.l.b16 %v23
  %v130 = vunpack.c.l.b16 %v24
  %v131 = vunpack.c.h.b16 %v24
  %v132 = vunpack.c.l.b16 %v25
  %v133 = vunpack.c.l.b16 %v26
  %v134 = vunpack.c.h.b16 %v26
  %v135 = vunpack.c.l.b16 %v27
  %v136 = vunpack.c.l.b16 %v28
  %v137 = vunpack.c.h.b16 %v28
  %v138 = vunpack.c.l.b16 %v29
  %v139 = vunpack.c.l.b16 %v30
  %v140 = vunpack.c.h.b16 %v30
  %v141 = vunpack.c.l.b16 %v31
  %v142 = vunpack.c.l.b16 %v32
  %v143 = vunpack.c.h.b16 %v32
  %v144 = vunpack.c.l.b16 %v33
  %v145 = vunpack.c.l.b16 %v34
  %v146 = vunpack.c.h.b16 %v34
  %v147 = vunpack.c.l.b16 %v35
  %v148 = vunpack.c.l.b16 %v36
  %v149 = vunpack.c.h.b16 %v36
  %v150 = vunpack.c.l.b16 %v37
  %v151 = vunpack.c.l.b16 %v38
  %v152 = vunpack.c.h.b16 %v38
  %v153 = vunpack.c.l.b16 %v39
  %v154 = vunpack.c.l.b16 %v40
  %v155 = vunpack.c.h.b16 %v40
  %v156 = vunpack.c.l.b16 %v41
  %v157 = vunpack.c.l.b16 %v42
  %v158 = vunpack.c.h.b16 %v42
  %v159 = vunpack.c.l.b16 %v43
  %v160 = vpack.c.b16 %v115, %v112
  %v161 = vpack.c.b16 %v116, %v113
  %v162 = vpack.c.b16 %v117, %v114
  %v163 = vpack.c.b16 %v121, %v118
  %v164 = vpack.c.b16 %v122, %v119
  %v165 = vpack.c.b16 %v123, %v120
  %v166 = vpack.c.b16 %v127, %v124
  %v167 = vpack.c.b16 %v128, %v125
  %v168 = vpack.c.b16 %v129, %v126
  %v169 = vpack.c.b16 %v133, %v130
  %v170 = vpack.c.b16 %v134, %v131
  %v171 = vpack.c.b16 %v135, %v132
  %v172 = vpack.c.b16 %v139, %v136
  %v173 = vpack.c.b16 %v140, %v137
  %v174 = vpack.c.b16 %v141, %v138
  %v175 = vpack.c.b16 %v145, %v142
  %v176 = vpack.c.b16 %v146, %v143
  %v177 = vpack.c.b16 %v147, %v144
  %v178 = vpack.c.b16 %v151, %v148
  %v179 = vpack.c.b16 %v152, %v149
  %v180 = vpack.c.b16 %v153, %v150
  %v181 = vpack.c.b16 %v157, %v154
  %v182 = vpack.c.b16 %v158, %v155
  %v183 = vpack.c.b16 %v159, %v156
  %v236 = vunpack.c.l.b16 %v44
  %v237 = vunpack.c.l.b16 %v45
  %v238 = vunpack.c.l.b16 %v46
  %v239 = vunpack.c.l.b16 %v47
  %v240 = vunpack.c.l.b16 %v48
  %v241 = vunpack.c.l.b16 %v49
  %v242 = vunpack.c.l.b16 %v50
  %v243 = vunpack.c.l.b16 %v51
  %v244 = vunpack.c.l.b16 %v52
  %v245 = vunpack.c.l.b16 %v53
  %v246 = vunpack.c.l.b16 %v54
  %v247 = vunpack.c.l.b16 %v55
  %v248 = vunpack.c.l.b16 %v56
  %v249 = vunpack.c.l.b16 %v57
  %v250 = vunpack.c.l.b16 %v58
  %v251 = vunpack.c.l.b16 %v59
  %v252 = vunpack.c.l.b16 %v60
  %v253 = vunpack.c.l.b16 %v61
  %v254 = vunpack.c.l.b16 %v62
  %v255 = vunpack.c.l.b16 %v63
  %v256 = vunpack.c.l.b16 %v64
  %v257 = vunpack.c.l.b16 %v65
  %v258 = vunpack.c.l.b16 %v66
  %v259 = vunpack.c.l.b16 %v67
  %v260 = vunpack.c.l.b16 %v68
  %v261 = vunpack.c.l.b16 %v69
  %v262 = vunpack.c.l.b16 %v70
  %v263 = vunpack.c.l.b16 %v71
  %v264 = vunpack.c.l.b16 %v72
  %v265 = vunpack.c.l.b16 %v73
  %v266 = vunpack.c.l.b16 %v74
  %v267 = vunpack.c.l.b16 %v75
  %v268 = vunpack.c.l.b16 %v76
  %v269 = vunpack.c.l.b16 %v77
  %v270 = vunpack.c.l.b16 %v78
  %v271 = vunpack.c.l.b16 %v79
  %v272 = vpack.c.b16 %v237, %v236
  %v273 = vpack.c.b16 %v239, %v238
  %v274 = vpack.c.b16 %v241, %v240
  %v275 = vpack.c.b16 %v243, %v242
  %v276 = vpack.c.b16 %v245, %v244
  %v277 = vpack.c.b16 %v247, %v246
  %v278 = vpack.c.b16 %v249, %v248
  %v279 = vpack.c.b16 %v251, %v250
  %v280 = vpack.c.b16 %v253, %v252
  %v281 = vpack.c.b16 %v255, %v254
  %v282 = vpack.c.b16 %v257, %v256
  %v283 = vpack.c.b16 %v259, %v258
  %v284 = vpack.c.b16 %v261, %v260
  %v285 = vpack.c.b16 %v263, %v262
  %v286 = vpack.c.b16 %v265, %v264
  %v287 = vpack.c.b16 %v267, %v266
  %v288 = vpack.c.b16 %v269, %v268
  %v289 = vpack.c.b16 %v271, %v270
  %vm308 = vcmask 261120
  %v310 = vsel %vm308, %v162, 0
  %v313 = vsel %vm308, %v165, 0
  %v316 = vsel %vm308, %v168, 0
  %v319 = vsel %vm308, %v171, 0
  %v322 = vsel %vm308, %v174, 0
  %v325 = vsel %vm308, %v177, 0
  %v328 = vsel %vm308, %v180, 0
  %v331 = vsel %vm308, %v183, 0
  %333 = vmatpush.bf16.msra.mxu0 %v279
  %334 = vmatpush.bf16.msra.mxu0 %v278
  %335 = vmatpush.bf16.msra.mxu0 %v277
  %336 = vmatpush.bf16.msra.mxu0 %v276
  %337 = vmatpush.bf16.msra.mxu0 %v275
  %338 = vmatpush.bf16.msra.mxu0 %v274
  %339 = vmatpush.bf16.msra.mxu0 %v273
  %340 = vmatpush.bf16.msra.mxu0 %v272
  %341 = vmatmul.bf16.gmra.mxu0 %v160
  %v342 = vpop.f32.mrf.mxu0
  %v343 = vadd.f32 0.0, %v342
  %v344 = vpop.f32.mrf.mxu0
  %v345 = vadd.f32 0.0, %v344
  %346 = vmatmul.bf16.gmra.mxu0 %v163
  %v347 = vpop.f32.mrf.mxu0
  %v348 = vadd.f32 0.0, %v347
  %v349 = vpop.f32.mrf.mxu0
  %v350 = vadd.f32 0.0, %v349
  %351 = vmatmul.bf16.gmra.mxu0 %v166
  %v352 = vpop.f32.mrf.mxu0
  %v353 = vadd.f32 0.0, %v352
  %v354 = vpop.f32.mrf.mxu0
  %v355 = vadd.f32 0.0, %v354
  %356 = vmatmul.bf16.gmra.mxu0 %v169
  %v357 = vpop.f32.mrf.mxu0
  %v358 = vadd.f32 0.0, %v357
  %v359 = vpop.f32.mrf.mxu0
  %v360 = vadd.f32 0.0, %v359
  %361 = vmatmul.bf16.gmra.mxu0 %v172
  %v362 = vpop.f32.mrf.mxu0
  %v363 = vadd.f32 0.0, %v362
  %v364 = vpop.f32.mrf.mxu0
  %v365 = vadd.f32 0.0, %v364
  %366 = vmatmul.bf16.gmra.mxu0 %v175
  %v367 = vpop.f32.mrf.mxu0
  %v368 = vadd.f32 0.0, %v367
  %v369 = vpop.f32.mrf.mxu0
  %v370 = vadd.f32 0.0, %v369
  %371 = vmatmul.bf16.gmra.mxu0 %v178
  %v372 = vpop.f32.mrf.mxu0
  %v373 = vadd.f32 0.0, %v372
  %v374 = vpop.f32.mrf.mxu0
  %v375 = vadd.f32 0.0, %v374
  %376 = vmatmul.bf16.gmra.mxu0 %v181
  %v377 = vpop.f32.mrf.mxu0
  %v378 = vadd.f32 0.0, %v377
  %v379 = vpop.f32.mrf.mxu0
  %v380 = vadd.f32 0.0, %v379
  %381 = vdwg.mxu0
  %382 = vmatpush.bf16.msra.mxu0 %v287
  %383 = vmatpush.bf16.msra.mxu0 %v286
  %384 = vmatpush.bf16.msra.mxu0 %v285
  %385 = vmatpush.bf16.msra.mxu0 %v284
  %386 = vmatpush.bf16.msra.mxu0 %v283
  %387 = vmatpush.bf16.msra.mxu0 %v282
  %388 = vmatpush.bf16.msra.mxu0 %v281
  %389 = vmatpush.bf16.msra.mxu0 %v280
  %390 = vmatmul.bf16.gmra.mxu0 %v161
  %v391 = vpop.f32.mrf.mxu0
  %v392 = vadd.f32 %v343, %v391
  %v393 = vpop.f32.mrf.mxu0
  %v394 = vadd.f32 %v345, %v393
  %395 = vmatmul.bf16.gmra.mxu0 %v164
  %v396 = vpop.f32.mrf.mxu0
  %v397 = vadd.f32 %v348, %v396
  %v398 = vpop.f32.mrf.mxu0
  %v399 = vadd.f32 %v350, %v398
  %400 = vmatmul.bf16.gmra.mxu0 %v167
  %v401 = vpop.f32.mrf.mxu0
  %v402 = vadd.f32 %v353, %v401
  %v403 = vpop.f32.mrf.mxu0
  %v404 = vadd.f32 %v355, %v403
  %405 = vmatmul.bf16.gmra.mxu0 %v170
  %v406 = vpop.f32.mrf.mxu0
  %v407 = vadd.f32 %v358, %v406
  %v408 = vpop.f32.mrf.mxu0
  %v409 = vadd.f32 %v360, %v408
  %410 = vmatmul.bf16.gmra.mxu0 %v173
  %v411 = vpop.f32.mrf.mxu0
  %v412 = vadd.f32 %v363, %v411
  %v413 = vpop.f32.mrf.mxu0
  %v414 = vadd.f32 %v365, %v413
  %415 = vmatmul.bf16.gmra.mxu0 %v176
  %v416 = vpop.f32.mrf.mxu0
  %v417 = vadd.f32 %v368, %v416
  %v418 = vpop.f32.mrf.mxu0
  %v419 = vadd.f32 %v370, %v418
  %420 = vmatmul.bf16.gmra.mxu0 %v179
  %v421 = vpop.f32.mrf.mxu0
  %v422 = vadd.f32 %v373, %v421
  %v423 = vpop.f32.mrf.mxu0
  %v424 = vadd.f32 %v375, %v423
  %425 = vmatmul.bf16.gmra.mxu0 %v182
  %v426 = vpop.f32.mrf.mxu0
  %v427 = vadd.f32 %v378, %v426
  %v428 = vpop.f32.mrf.mxu0
  %v429 = vadd.f32 %v380, %v428
  %430 = vdwg.mxu0
  %431 = vmatpush.bf16.msra.mxu0 0
  %432 = vmatpush.bf16.msra.mxu0 0
  %433 = vmatpush.bf16.msra.mxu0 0
  %434 = vmatpush.bf16.msra.mxu0 0
  %435 = vmatpush.bf16.msra.mxu0 0
  %436 = vmatpush.bf16.msra.mxu0 0
  %437 = vmatpush.bf16.msra.mxu0 %v289
  %438 = vmatpush.bf16.msra.mxu0 %v288
  %439 = vmatmul.bf16.gmra.mxu0 %v310
  %v440 = vpop.f32.mrf.mxu0
  %v441 = vadd.f32 %v392, %v440
  %v442 = vpop.f32.mrf.mxu0
  %v443 = vadd.f32 %v394, %v442
  %444 = vmatmul.bf16.gmra.mxu0 %v313
  %v445 = vpop.f32.mrf.mxu0
  %v446 = vadd.f32 %v397, %v445
  %v447 = vpop.f32.mrf.mxu0
  %v448 = vadd.f32 %v399, %v447
  %449 = vmatmul.bf16.gmra.mxu0 %v316
  %v450 = vpop.f32.mrf.mxu0
  %v451 = vadd.f32 %v402, %v450
  %v452 = vpop.f32.mrf.mxu0
  %v453 = vadd.f32 %v404, %v452
  %454 = vmatmul.bf16.gmra.mxu0 %v319
  %v455 = vpop.f32.mrf.mxu0
  %v456 = vadd.f32 %v407, %v455
  %v457 = vpop.f32.mrf.mxu0
  %v458 = vadd.f32 %v409, %v457
  %459 = vmatmul.bf16.gmra.mxu0 %v322
  %v460 = vpop.f32.mrf.mxu0
  %v461 = vadd.f32 %v412, %v460
  %v462 = vpop.f32.mrf.mxu0
  %v463 = vadd.f32 %v414, %v462
  %464 = vmatmul.bf16.gmra.mxu0 %v325
  %v465 = vpop.f32.mrf.mxu0
  %v466 = vadd.f32 %v417, %v465
  %v467 = vpop.f32.mrf.mxu0
  %v468 = vadd.f32 %v419, %v467
  %469 = vmatmul.bf16.gmra.mxu0 %v328
  %v470 = vpop.f32.mrf.mxu0
  %v471 = vadd.f32 %v422, %v470
  %v472 = vpop.f32.mrf.mxu0
  %v473 = vadd.f32 %v424, %v472
  %474 = vmatmul.bf16.gmra.mxu0 %v331
  %v475 = vpop.f32.mrf.mxu0
  %v476 = vadd.f32 %v427, %v475
  %v477 = vpop.f32.mrf.mxu0
  %v478 = vadd.f32 %v429, %v477
  %479 = vdwg.mxu0
  %v480 = vmul.f32 %v441, 0.2
  %v481 = vmul.f32 %v443, 0.2
  %v482 = vmul.f32 %v446, 0.2
  %v483 = vmul.f32 %v448, 0.2
  %v484 = vmul.f32 %v451, 0.2
  %v485 = vmul.f32 %v453, 0.2
  %v486 = vmul.f32 %v456, 0.2
  %v487 = vmul.f32 %v458, 0.2
  %v488 = vmul.f32 %v461, 0.2
  %v489 = vmul.f32 %v463, 0.2
  %v490 = vmul.f32 %v466, 0.2
  %v491 = vmul.f32 %v468, 0.2
  %v492 = vmul.f32 %v471, 0.2
  %v493 = vmul.f32 %v473, 0.2
  %v494 = vmul.f32 %v476, 0.2
  %v495 = vmul.f32 %v478, 0.2
  %v496 = vmax.f32 %v441, %v480
  %v497 = vmax.f32 %v443, %v481
  %v498 = vmax.f32 %v446, %v482
  %v499 = vmax.f32 %v448, %v483
  %v500 = vmax.f32 %v451, %v484
  %v501 = vmax.f32 %v453, %v485
  %v502 = vmax.f32 %v456, %v486
  %v503 = vmax.f32 %v458, %v487
  %v504 = vmax.f32 %v461, %v488
  %v505 = vmax.f32 %v463, %v489
  %v506 = vmax.f32 %v466, %v490
  %v507 = vmax.f32 %v468, %v491
  %v508 = vmax.f32 %v471, %v492
  %v509 = vmax.f32 %v473, %v493
  %v510 = vmax.f32 %v476, %v494
  %v511 = vmax.f32 %v478, %v495
  %v512 = vpack.c.bf16 %v496, %v496
  %v513 = vpack.c.bf16 %v497, %v497
  %v514 = vpack.c.bf16 %v498, %v498
  %v515 = vpack.c.bf16 %v499, %v499
  %v516 = vpack.c.bf16 %v500, %v500
  %v517 = vpack.c.bf16 %v501, %v501
  %v518 = vpack.c.bf16 %v502, %v502
  %v519 = vpack.c.bf16 %v503, %v503
  %v520 = vpack.c.bf16 %v504, %v504
  %v521 = vpack.c.bf16 %v505, %v505
  %v522 = vpack.c.bf16 %v506, %v506
  %v523 = vpack.c.bf16 %v507, %v507
  %v524 = vpack.c.bf16 %v508, %v508
  %v525 = vpack.c.bf16 %v509, %v509
  %v526 = vpack.c.bf16 %v510, %v510
  %v527 = vpack.c.bf16 %v511, %v511
  %vm528 = vcmask 125952
  %529 = vst.msk [vmem:[%s2] sm:$0xf] %vm528, %v512
  %530 = vst.msk [vmem:[%s2 + $0x4] sm:$0xf] %vm528, %v513
  %531 = vst.msk [vmem:[%s2 + $0x8] sm:$0xf] %vm528, %v514
  %532 = vst.msk [vmem:[%s2 + $0xc] sm:$0xf] %vm528, %v515
  %533 = vst.msk [vmem:[%s2 + $0x10] sm:$0xf] %vm528, %v516
  %534 = vst.msk [vmem:[%s2 + $0x14] sm:$0xf] %vm528, %v517
  %535 = vst.msk [vmem:[%s2 + $0x18] sm:$0xf] %vm528, %v518
  %536 = vst.msk [vmem:[%s2 + $0x1c] sm:$0xf] %vm528, %v519
  %537 = vst.msk [vmem:[%s2 + $0x20] sm:$0xf] %vm528, %v520
  %538 = vst.msk [vmem:[%s2 + $0x24] sm:$0xf] %vm528, %v521
  %539 = vst.msk [vmem:[%s2 + $0x28] sm:$0xf] %vm528, %v522
  %540 = vst.msk [vmem:[%s2 + $0x2c] sm:$0xf] %vm528, %v523
  %541 = vst.msk [vmem:[%s2 + $0x30] sm:$0xf] %vm528, %v524
  %542 = vst.msk [vmem:[%s2 + $0x34] sm:$0xf] %vm528, %v525
  %543 = vst.msk [vmem:[%s2 + $0x38] sm:$0xf] %vm528, %v526
  %544 = vst.msk [vmem:[%s2 + $0x3c] sm:$0xf] %vm528, %v527
  // Predicated region
  $region10: #{unet_forward.20} parent=0 // pred_check
    _
  $region11: #{unet_forward.20} parent=0 // pred_check_branch
    %546 = sbr.rel (0) target = $region13
  $region12: #{unet_forward.20} parent=0 // pred_region
    _
  $region13: #{unet_forward.20} parent=0 // pred_fallthru
    _
  // Predicated region
  $region14: #{unet_forward.20} parent=0 // pred_check
    _
  $region15: #{unet_forward.20} parent=0 // pred_check_branch
    %548 = sbr.rel (0) target = $region17
  $region16: #{unet_forward.20} parent=0 // pred_region
    _
  $region17: #{unet_forward.20} parent=0 // pred_fallthru
    _

// kernel: unet_forward.23
$region0: #{unet_forward.23}
  #allocation0 [shape = 'u32[]', space=smem, size = 0x4, offset = 0x4, fixed_abs, tag = 'smem constant byte address 0x4 - core index']
  #allocation1 [shape = 'u32[72,128]{1,0:T(1,128)}', space=vmem, size = 0x9000, scoped, tag = 'internal scratch']
  %s0 = inlined_call_operand.vmem [shape: bf16[512,144], index: 0, kind: input, shape index: {}]
  %s1 = inlined_call_operand.vmem [shape: bf16[144,8], index: 1, kind: input, shape index: {}]
  %s2 = inlined_call_operand.vmem [shape: bf16[512,8], index: 2, kind: output, shape index: {}]
  %s3 = sld [smem:[#allocation0]]
  $region41: #{unet_forward.23} parent=0
    _
  %s5 = ssub.s32 1, %s3
  %s6 = scalar_select 0, %s5, %s3
  loop: start=0, step=1, limit=4
  $region2: #{unet_forward.23} parent=0 // loop_pre_header
    _
  $region3: #{unet_forward.23} parent=0 // loop_header
    %s8 = sphi 0, %s12
    %p9 = scmp.ge.s32.totalorder %s8, 4
    %s18 = sphi 0, %s20
    %s21 = sphi 0, %s18
    %s22 = sphi 0, %s21
    %s38 = sphi 0, %s22
    %s42 = sphi 0, %s42
    %s44 = sphi 0, %s42
    %s45 = sphi 0, %s44
    %s59 = sphi 0, %s45
    %s65 = sphi 0, %s67
    %s68 = sphi 0, %s65
    %s69 = sphi 0, %s68
    %s85 = sphi 0, %s69
  $region4: #{unet_forward.23} parent=0 // loop_header_branch
    %11 = sbr.rel (%p9) target = $region8
  $region5: #{unet_forward.23} parent=0 // loop_body
    %s13 = ssub.s32 %s8, 1
    %s14 = ssub.s32 %s8, 2
    %s15 = sadd.s32 %s8, 1
    %s16 = ssub.s32 %s8, %s15
    %p17 = scmp.eq.s32.totalorder %s16, 0
    %s19 = sadd.s32 %s18, 1
    %s20 = scalar_select %p17, %s18, %s19
    %p23 = pneg %p17
    %p24 = scmp.eq.s32.totalorder %s8, 1
    %p25 = por %p23, %p24
    %p26 = scmp.ne.s32.totalorder %s18, %s21
    %p27 = scmp.eq.s32.totalorder %s8, 0
    %p28 = por %p26, %p27
    %p29 = scmp.ne.s32.totalorder %s18, %s21
    %p30 = scmp.eq.s32.totalorder %s13, 1
    %p31 = por %p29, %p30
    %p32 = scmp.ne.s32.totalorder %s21, %s22
    %p33 = scmp.eq.s32.totalorder %s13, 0
    %p34 = por %p32, %p33
    %p35 = scmp.ne.s32.totalorder %s21, %s22
    %p36 = scmp.eq.s32.totalorder %s14, 1
    %p37 = por %p35, %p36
    %p39 = scmp.ne.s32.totalorder %s22, %s38
    %p40 = scmp.eq.s32.totalorder %s14, 0
    %p41 = por %p39, %p40
    %s43 = sadd.s32 %s42, 1
    %p46 = scmp.eq.s32.totalorder %s8, 1
    %p47 = scmp.ne.s32.totalorder %s42, %s44
    %p48 = scmp.eq.s32.totalorder %s8, 0
    %p49 = por %p47, %p48
    %p50 = scmp.ne.s32.totalorder %s42, %s44
    %p51 = scmp.eq.s32.totalorder %s13, 1
    %p52 = por %p50, %p51
    %p53 = scmp.ne.s32.totalorder %s44, %s45
    %p54 = scmp.eq.s32.totalorder %s13, 0
    %p55 = por %p53, %p54
    %p56 = scmp.ne.s32.totalorder %s44, %s45
    %p57 = scmp.eq.s32.totalorder %s14, 1
    %p58 = por %p56, %p57
    %p60 = scmp.ne.s32.totalorder %s45, %s59
    %p61 = scmp.eq.s32.totalorder %s14, 0
    %p62 = por %p60, %p61
    %s63 = ssub.s32 %s8, %s15
    %p64 = scmp.eq.s32.totalorder %s63, 0
    %s66 = sadd.s32 %s65, 1
    %s67 = scalar_select %p64, %s65, %s66
    %p70 = pneg %p64
    %p71 = scmp.eq.s32.totalorder %s8, 1
    %p72 = por %p70, %p71
    %p73 = scmp.ne.s32.totalorder %s65, %s68
    %p74 = scmp.eq.s32.totalorder %s8, 0
    %p75 = por %p73, %p74
    %p76 = scmp.ne.s32.totalorder %s65, %s68
    %p77 = scmp.eq.s32.totalorder %s13, 1
    %p78 = por %p76, %p77
    %p79 = scmp.ne.s32.totalorder %s68, %s69
    %p80 = scmp.eq.s32.totalorder %s13, 0
    %p81 = por %p79, %p80
    %p82 = scmp.ne.s32.totalorder %s68, %s69
    %p83 = scmp.eq.s32.totalorder %s14, 1
    %p84 = por %p82, %p83
    %p86 = scmp.ne.s32.totalorder %s69, %s85
    %p87 = scmp.eq.s32.totalorder %s14, 0
    %p88 = por %p86, %p87
    %p89 = scmp.le.s32.totalorder 1, %s8
    %p90 = scmp.lt.s32.totalorder %s8, 3
    %p91 = pnand %p89, %p90
    %p92 = pneg %p91
    // Predicated region
    $region9: #{unet_forward.23} parent=5 // pred_check
      _
    $region10: #{unet_forward.23} parent=5 // pred_check_branch
      %94 = sbr.rel (%p91) target = $region12
    $region11: #{unet_forward.23} parent=5 // pred_region
      %s95 = ssub.s32 %s8, 1
      // Predicated region
      $region13: #{unet_forward.23} parent=11 // pred_check
        %p96 = pneg %p55
      $region14: #{unet_forward.23} parent=11 // pred_check_branch
        %98 = sbr.rel (%p96) target = $region16
      $region15: #{unet_forward.23} parent=11 // pred_region
        _
      $region16: #{unet_forward.23} parent=11 // pred_fallthru
        _
    $region12: #{unet_forward.23} parent=5 // pred_fallthru
      _
    %p99 = scmp.lt.s32.totalorder %s8, 2
    // Predicated region
    $region17: #{unet_forward.23} parent=5 // pred_check
      %p100 = pneg %p99
    $region18: #{unet_forward.23} parent=5 // pred_check_branch
      %102 = sbr.rel (%p100) target = $region20
    $region19: #{unet_forward.23} parent=5 // pred_region
      // Predicated region
      $region21: #{unet_forward.23} parent=19 // pred_check
        %p103 = pneg %p28
      $region22: #{unet_forward.23} parent=19 // pred_check_branch
        %105 = sbr.rel (%p103) target = $region24
      $region23: #{unet_forward.23} parent=19 // pred_region
        %s106 = smul.u32 32, %s8
        %p107 = scmp.lt.s32.totalorder %s106, 63
        %s108 = scalar_select %p107, %s106, 63
        %s109 = smul.addr %s108, 2
        %s110 = smul.addr %s109, 4
        %s111 = scalar_lea.vmem %s0, %s110
        %s112 = smul.u32 32, %s8
      $region24: #{unet_forward.23} parent=19 // pred_fallthru
        _
    $region20: #{unet_forward.23} parent=5 // pred_fallthru
      _
    %p113 = scmp.le.s32.totalorder 1, %s8
    %p114 = scmp.lt.s32.totalorder %s8, 3
    %p115 = pnand %p113, %p114
    %p116 = pneg %p115
    // Predicated region
    $region25: #{unet_forward.23} parent=5 // pred_check
      _
    $region26: #{unet_forward.23} parent=5 // pred_check_branch
      %118 = sbr.rel (%p115) target = $region28
    $region27: #{unet_forward.23} parent=5 // pred_region
      %s119 = ssub.s32 %s8, 1
      %s120 = smul.u32 32, %s13
      %p121 = scmp.lt.s32.totalorder %s120, 63
      %s122 = scalar_select %p121, %s120, 63
      %s123 = smul.addr %s122, 2
      %s124 = smul.addr %s123, 4
      %s125 = scalar_lea.vmem %s0, %s124
      %p126 = pneg %p34
      %p127 = pneg %p31
      %p128 = pneg %p55
      %p129 = pneg %p52
      %p130 = pneg %p81
      %p131 = pneg %p78
      %s132 = smul.u32 32, %s13
      %p133 = scmp.lt.s32.totalorder %s132, 63
      %s134 = scalar_select %p133, %s132, 63
      %s135 = smul.addr %s134, 4
      %s136 = scalar_lea.vmem %s2, %s135
      %s137 = smul.u32 32, %s13
      %p138 = scmp.lt.s32.totalorder %s137, 63
      %s139 = scalar_select %p138, %s137, 63
      %s140 = smul.addr %s139, 2
      %s141 = smul.addr %s140, 4
      %s142 = scalar_lea.vmem %s0, %s141
      %s143 = smul.u32 32, %s13
      %s144 = smul.u32 32, %s13
      %p145 = scmp.lt.s32.totalorder %s144, 63
      %s146 = scalar_select %p145, %s144, 63
      %s147 = smul.addr %s146, 4
      %s148 = scalar_lea.vmem %s2, %s147
      %s149 = smul.u32 32, %s13
      %v151 = vld [vmem:[%s142] sm:$0xff]
      %v152 = vld [vmem:[%s142 + $0x8] sm:$0xff]
      %v153 = vld [vmem:[%s142 + $0x10] sm:$0xff]
      %v154 = vld [vmem:[%s142 + $0x18] sm:$0xff]
      %v155 = vld [vmem:[%s142 + $0x20] sm:$0xff]
      %v156 = vld [vmem:[%s142 + $0x28] sm:$0xff]
      %v157 = vld [vmem:[%s142 + $0x30] sm:$0xff]
      %v158 = vld [vmem:[%s142 + $0x38] sm:$0xff]
      %v159 = vld [vmem:[%s142 + $0x40] sm:$0xff]
      %v160 = vld [vmem:[%s142 + $0x48] sm:$0xff]
      %v161 = vld [vmem:[%s142 + $0x50] sm:$0xff]
      %v162 = vld [vmem:[%s142 + $0x58] sm:$0xff]
      %v163 = vld [vmem:[%s142 + $0x60] sm:$0xff]
      %v164 = vld [vmem:[%s142 + $0x68] sm:$0xff]
      %v165 = vld [vmem:[%s142 + $0x70] sm:$0xff]
      %v166 = vld [vmem:[%s142 + $0x78] sm:$0xff]
      %v167 = vld [vmem:[%s142 + $0x80] sm:$0xff]
      %v168 = vld [vmem:[%s142 + $0x88] sm:$0xff]
      %v169 = vld [vmem:[%s142 + $0x90] sm:$0xff]
      %v170 = vld [vmem:[%s142 + $0x98] sm:$0xff]
      %v171 = vld [vmem:[%s142 + $0xa0] sm:$0xff]
      %v172 = vld [vmem:[%s142 + $0xa8] sm:$0xff]
      %v173 = vld [vmem:[%s142 + $0xb0] sm:$0xff]
      %v174 = vld [vmem:[%s142 + $0xb8] sm:$0xff]
      %v175 = vld [vmem:[%s142 + $0xc0] sm:$0xff]
      %v176 = vld [vmem:[%s142 + $0xc8] sm:$0xff]
      %v177 = vld [vmem:[%s142 + $0xd0] sm:$0xff]
      %v178 = vld [vmem:[%s142 + $0xd8] sm:$0xff]
      %v179 = vld [vmem:[%s142 + $0xe0] sm:$0xff]
      %v180 = vld [vmem:[%s142 + $0xe8] sm:$0xff]
      %v181 = vld [vmem:[%s142 + $0xf0] sm:$0xff]
      %v182 = vld [vmem:[%s142 + $0xf8] sm:$0xff]
      %v183 = vld [vmem:[%s1] sm:$0xf]
      %v184 = vld [vmem:[%s1 + $0x4] sm:$0xf]
      %v185 = vld [vmem:[%s1 + $0x8] sm:$0xf]
      %v186 = vld [vmem:[%s1 + $0xc] sm:$0xf]
      %v187 = vld [vmem:[%s1 + $0x10] sm:$0xf]
      %v188 = vld [vmem:[%s1 + $0x14] sm:$0xf]
      %v189 = vld [vmem:[%s1 + $0x18] sm:$0xf]
      %v190 = vld [vmem:[%s1 + $0x1c] sm:$0xf]
      %v191 = vld [vmem:[%s1 + $0x20] sm:$0xf]
      %v192 = vld [vmem:[%s1 + $0x24] sm:$0xf]
      %v193 = vld [vmem:[%s1 + $0x28] sm:$0xf]
      %v194 = vld [vmem:[%s1 + $0x2c] sm:$0xf]
      %v195 = vld [vmem:[%s1 + $0x30] sm:$0xf]
      %v196 = vld [vmem:[%s1 + $0x34] sm:$0xf]
      %v197 = vld [vmem:[%s1 + $0x38] sm:$0xf]
      %v198 = vld [vmem:[%s1 + $0x3c] sm:$0xf]
      %v199 = vld [vmem:[%s1 + $0x40] sm:$0xf]
      %v200 = vld [vmem:[%s1 + $0x44] sm:$0xf]
      %v233 = vunpack.c.l.b16 %v151
      %v234 = vunpack.c.h.b16 %v151
      %v235 = vunpack.c.l.b16 %v152
      %v236 = vunpack.c.h.b16 %v152
      %v237 = vunpack.c.l.b16 %v153
      %v238 = vunpack.c.h.b16 %v153
      %v239 = vunpack.c.l.b16 %v154
      %v240 = vunpack.c.h.b16 %v154
      %v241 = vunpack.c.l.b16 %v155
      %v242 = vunpack.c.h.b16 %v155
      %v243 = vunpack.c.l.b16 %v156
      %v244 = vunpack.c.h.b16 %v156
      %v245 = vunpack.c.l.b16 %v157
      %v246 = vunpack.c.h.b16 %v157
      %v247 = vunpack.c.l.b16 %v158
      %v248 = vunpack.c.h.b16 %v158
      %v249 = vunpack.c.l.b16 %v159
      %v250 = vunpack.c.h.b16 %v159
      %v251 = vunpack.c.l.b16 %v160
      %v252 = vunpack.c.h.b16 %v160
      %v253 = vunpack.c.l.b16 %v161
      %v254 = vunpack.c.h.b16 %v161
      %v255 = vunpack.c.l.b16 %v162
      %v256 = vunpack.c.h.b16 %v162
      %v257 = vunpack.c.l.b16 %v163
      %v258 = vunpack.c.h.b16 %v163
      %v259 = vunpack.c.l.b16 %v164
      %v260 = vunpack.c.h.b16 %v164
      %v261 = vunpack.c.l.b16 %v165
      %v262 = vunpack.c.h.b16 %v165
      %v263 = vunpack.c.l.b16 %v166
      %v264 = vunpack.c.h.b16 %v166
      %v265 = vunpack.c.l.b16 %v167
      %v266 = vunpack.c.h.b16 %v167
      %v267 = vunpack.c.l.b16 %v168
      %v268 = vunpack.c.h.b16 %v168
      %v269 = vunpack.c.l.b16 %v169
      %v270 = vunpack.c.h.b16 %v169
      %v271 = vunpack.c.l.b16 %v170
      %v272 = vunpack.c.h.b16 %v170
      %v273 = vunpack.c.l.b16 %v171
      %v274 = vunpack.c.h.b16 %v171
      %v275 = vunpack.c.l.b16 %v172
      %v276 = vunpack.c.h.b16 %v172
      %v277 = vunpack.c.l.b16 %v173
      %v278 = vunpack.c.h.b16 %v173
      %v279 = vunpack.c.l.b16 %v174
      %v280 = vunpack.c.h.b16 %v174
      %v281 = vunpack.c.l.b16 %v175
      %v282 = vunpack.c.h.b16 %v175
      %v283 = vunpack.c.l.b16 %v176
      %v284 = vunpack.c.h.b16 %v176
      %v285 = vunpack.c.l.b16 %v177
      %v286 = vunpack.c.h.b16 %v177
      %v287 = vunpack.c.l.b16 %v178
      %v288 = vunpack.c.h.b16 %v178
      %v289 = vunpack.c.l.b16 %v179
      %v290 = vunpack.c.h.b16 %v179
      %v291 = vunpack.c.l.b16 %v180
      %v292 = vunpack.c.h.b16 %v180
      %v293 = vunpack.c.l.b16 %v181
      %v294 = vunpack.c.h.b16 %v181
      %v295 = vunpack.c.l.b16 %v182
      %v296 = vunpack.c.h.b16 %v182
      %v297 = vpack.c.b16 %v235, %v233
      %v298 = vpack.c.b16 %v236, %v234
      %v299 = vpack.c.b16 %v239, %v237
      %v300 = vpack.c.b16 %v240, %v238
      %v301 = vpack.c.b16 %v243, %v241
      %v302 = vpack.c.b16 %v244, %v242
      %v303 = vpack.c.b16 %v247, %v245
      %v304 = vpack.c.b16 %v248, %v246
      %v305 = vpack.c.b16 %v251, %v249
      %v306 = vpack.c.b16 %v252, %v250
      %v307 = vpack.c.b16 %v255, %v253
      %v308 = vpack.c.b16 %v256, %v254
      %v309 = vpack.c.b16 %v259, %v257
      %v310 = vpack.c.b16 %v260, %v258
      %v311 = vpack.c.b16 %v263, %v261
      %v312 = vpack.c.b16 %v264, %v262
      %v313 = vpack.c.b16 %v267, %v265
      %v314 = vpack.c.b16 %v268, %v266
      %v315 = vpack.c.b16 %v271, %v269
      %v316 = vpack.c.b16 %v272, %v270
      %v317 = vpack.c.b16 %v275, %v273
      %v318 = vpack.c.b16 %v276, %v274
      %v319 = vpack.c.b16 %v279, %v277
      %v320 = vpack.c.b16 %v280, %v278
      %v321 = vpack.c.b16 %v283, %v281
      %v322 = vpack.c.b16 %v284, %v282
      %v323 = vpack.c.b16 %v287, %v285
      %v324 = vpack.c.b16 %v288, %v286
      %v325 = vpack.c.b16 %v291, %v289
      %v326 = vpack.c.b16 %v292, %v290
      %v327 = vpack.c.b16 %v295, %v293
      %v328 = vpack.c.b16 %v296, %v294
      %v363 = vunpack.c.l.b16 %v183
      %v364 = vunpack.c.l.b16 %v184
      %v365 = vunpack.c.l.b16 %v185
      %v366 = vunpack.c.l.b16 %v186
      %v367 = vunpack.c.l.b16 %v187
      %v368 = vunpack.c.l.b16 %v188
      %v369 = vunpack.c.l.b16 %v189
      %v370 = vunpack.c.l.b16 %v190
      %v371 = vunpack.c.l.b16 %v191
      %v372 = vunpack.c.l.b16 %v192
      %v373 = vunpack.c.l.b16 %v193
      %v374 = vunpack.c.l.b16 %v194
      %v375 = vunpack.c.l.b16 %v195
      %v376 = vunpack.c.l.b16 %v196
      %v377 = vunpack.c.l.b16 %v197
      %v378 = vunpack.c.l.b16 %v198
      %v379 = vunpack.c.l.b16 %v199
      %v380 = vunpack.c.l.b16 %v200
      %v381 = vpack.c.b16 %v364, %v363
      %v382 = vpack.c.b16 %v366, %v365
      %v383 = vpack.c.b16 %v368, %v367
      %v384 = vpack.c.b16 %v370, %v369
      %v385 = vpack.c.b16 %v372, %v371
      %v386 = vpack.c.b16 %v374, %v373
      %v387 = vpack.c.b16 %v376, %v375
      %v388 = vpack.c.b16 %v378, %v377
      %v389 = vpack.c.b16 %v380, %v379
      %vm399 = vcmask 130048
      %v401 = vsel %vm399, %v298, 0
      %v404 = vsel %vm399, %v300, 0
      %v407 = vsel %vm399, %v302, 0
      %v410 = vsel %vm399, %v304, 0
      %v413 = vsel %vm399, %v306, 0
      %v416 = vsel %vm399, %v308, 0
      %v419 = vsel %vm399, %v310, 0
      %v422 = vsel %vm399, %v312, 0
      %v425 = vsel %vm399, %v314, 0
      %v428 = vsel %vm399, %v316, 0
      %v431 = vsel %vm399, %v318, 0
      %v434 = vsel %vm399, %v320, 0
      %v437 = vsel %vm399, %v322, 0
      %v440 = vsel %vm399, %v324, 0
      %v443 = vsel %vm399, %v326, 0
      %v446 = vsel %vm399, %v328, 0
      %448 = vmatpush.bf16.msra.mxu0 %v388
      %449 = vmatpush.bf16.msra.mxu0 %v387
      %450 = vmatpush.bf16.msra.mxu0 %v386
      %451 = vmatpush.bf16.msra.mxu0 %v385
      %452 = vmatpush.bf16.msra.mxu0 %v384
      %453 = vmatpush.bf16.msra.mxu0 %v383
      %454 = vmatpush.bf16.msra.mxu0 %v382
      %455 = vmatpush.bf16.msra.mxu0 %v381
      %456 = vmatmul.bf16.gmra.mxu0 %v297
      %v457 = vpop.f32.mrf.mxu0
      %v458 = vadd.f32 0.0, %v457
      %v459 = vpop.f32.mrf.mxu0
      %v460 = vadd.f32 0.0, %v459
      %461 = vmatmul.bf16.gmra.mxu0 %v299
      %v462 = vpop.f32.mrf.mxu0
      %v463 = vadd.f32 0.0, %v462
      %v464 = vpop.f32.mrf.mxu0
      %v465 = vadd.f32 0.0, %v464
      %466 = vmatmul.bf16.gmra.mxu0 %v301
      %v467 = vpop.f32.mrf.mxu0
      %v468 = vadd.f32 0.0, %v467
      %v469 = vpop.f32.mrf.mxu0
      %v470 = vadd.f32 0.0, %v469
      %471 = vmatmul.bf16.gmra.mxu0 %v303
      %v472 = vpop.f32.mrf.mxu0
      %v473 = vadd.f32 0.0, %v472
      %v474 = vpop.f32.mrf.mxu0
      %v475 = vadd.f32 0.0, %v474
      %476 = vmatmul.bf16.gmra.mxu0 %v305
      %v477 = vpop.f32.mrf.mxu0
      %v478 = vadd.f32 0.0, %v477
      %v479 = vpop.f32.mrf.mxu0
      %v480 = vadd.f32 0.0, %v479
      %481 = vmatmul.bf16.gmra.mxu0 %v307
      %v482 = vpop.f32.mrf.mxu0
      %v483 = vadd.f32 0.0, %v482
      %v484 = vpop.f32.mrf.mxu0
      %v485 = vadd.f32 0.0, %v484
      %486 = vmatmul.bf16.gmra.mxu0 %v309
      %v487 = vpop.f32.mrf.mxu0
      %v488 = vadd.f32 0.0, %v487
      %v489 = vpop.f32.mrf.mxu0
      %v490 = vadd.f32 0.0, %v489
      %491 = vmatmul.bf16.gmra.mxu0 %v311
      %v492 = vpop.f32.mrf.mxu0
      %v493 = vadd.f32 0.0, %v492
      %v494 = vpop.f32.mrf.mxu0
      %v495 = vadd.f32 0.0, %v494
      %496 = vmatmul.bf16.gmra.mxu0 %v313
      %v497 = vpop.f32.mrf.mxu0
      %v498 = vadd.f32 0.0, %v497
      %v499 = vpop.f32.mrf.mxu0
      %v500 = vadd.f32 0.0, %v499
      %501 = vmatmul.bf16.gmra.mxu0 %v315
      %v502 = vpop.f32.mrf.mxu0
      %v503 = vadd.f32 0.0, %v502
      %v504 = vpop.f32.mrf.mxu0
      %v505 = vadd.f32 0.0, %v504
      %506 = vmatmul.bf16.gmra.mxu0 %v317
      %v507 = vpop.f32.mrf.mxu0
      %v508 = vadd.f32 0.0, %v507
      %v509 = vpop.f32.mrf.mxu0
      %v510 = vadd.f32 0.0, %v509
      %511 = vmatmul.bf16.gmra.mxu0 %v319
      %v512 = vpop.f32.mrf.mxu0
      %v513 = vadd.f32 0.0, %v512
      %v514 = vpop.f32.mrf.mxu0
      %v515 = vadd.f32 0.0, %v514
      %516 = vmatmul.bf16.gmra.mxu0 %v321
      %v517 = vpop.f32.mrf.mxu0
      %v518 = vadd.f32 0.0, %v517
      %v519 = vpop.f32.mrf.mxu0
      %v520 = vadd.f32 0.0, %v519
      %521 = vmatmul.bf16.gmra.mxu0 %v323
      %v522 = vpop.f32.mrf.mxu0
      %v523 = vadd.f32 0.0, %v522
      %v524 = vpop.f32.mrf.mxu0
      %v525 = vadd.f32 0.0, %v524
      %526 = vmatmul.bf16.gmra.mxu0 %v325
      %v527 = vpop.f32.mrf.mxu0
      %v528 = vadd.f32 0.0, %v527
      %v529 = vpop.f32.mrf.mxu0
      %v530 = vadd.f32 0.0, %v529
      %531 = vmatmul.bf16.gmra.mxu0 %v327
      %v532 = vpop.f32.mrf.mxu0
      %v533 = vadd.f32 0.0, %v532
      %v534 = vpop.f32.mrf.mxu0
      %v535 = vadd.f32 0.0, %v534
      %536 = vdwg.mxu0
      %537 = vmatpush.bf16.msra.mxu0 0
      %538 = vmatpush.bf16.msra.mxu0 0
      %539 = vmatpush.bf16.msra.mxu0 0
      %540 = vmatpush.bf16.msra.mxu0 0
      %541 = vmatpush.bf16.msra.mxu0 0
      %542 = vmatpush.bf16.msra.mxu0 0
      %543 = vmatpush.bf16.msra.mxu0 0
      %544 = vmatpush.bf16.msra.mxu0 %v389
      %545 = vmatmul.bf16.gmra.mxu0 %v401
      %v546 = vpop.f32.mrf.mxu0
      %v547 = vadd.f32 %v458, %v546
      %v548 = vpop.f32.mrf.mxu0
      %v549 = vadd.f32 %v460, %v548
      %550 = vmatmul.bf16.gmra.mxu0 %v404
      %v551 = vpop.f32.mrf.mxu0
      %v552 = vadd.f32 %v463, %v551
      %v553 = vpop.f32.mrf.mxu0
      %v554 = vadd.f32 %v465, %v553
      %555 = vmatmul.bf16.gmra.mxu0 %v407
      %v556 = vpop.f32.mrf.mxu0
      %v557 = vadd.f32 %v468, %v556
      %v558 = vpop.f32.mrf.mxu0
      %v559 = vadd.f32 %v470, %v558
      %560 = vmatmul.bf16.gmra.mxu0 %v410
      %v561 = vpop.f32.mrf.mxu0
      %v562 = vadd.f32 %v473, %v561
      %v563 = vpop.f32.mrf.mxu0
      %v564 = vadd.f32 %v475, %v563
      %565 = vmatmul.bf16.gmra.mxu0 %v413
      %v566 = vpop.f32.mrf.mxu0
      %v567 = vadd.f32 %v478, %v566
      %v568 = vpop.f32.mrf.mxu0
      %v569 = vadd.f32 %v480, %v568
      %570 = vmatmul.bf16.gmra.mxu0 %v416
      %v571 = vpop.f32.mrf.mxu0
      %v572 = vadd.f32 %v483, %v571
      %v573 = vpop.f32.mrf.mxu0
      %v574 = vadd.f32 %v485, %v573
      %575 = vmatmul.bf16.gmra.mxu0 %v419
      %v576 = vpop.f32.mrf.mxu0
      %v577 = vadd.f32 %v488, %v576
      %v578 = vpop.f32.mrf.mxu0
      %v579 = vadd.f32 %v490, %v578
      %580 = vmatmul.bf16.gmra.mxu0 %v422
      %v581 = vpop.f32.mrf.mxu0
      %v582 = vadd.f32 %v493, %v581
      %v583 = vpop.f32.mrf.mxu0
      %v584 = vadd.f32 %v495, %v583
      %585 = vmatmul.bf16.gmra.mxu0 %v425
      %v586 = vpop.f32.mrf.mxu0
      %v587 = vadd.f32 %v498, %v586
      %v588 = vpop.f32.mrf.mxu0
      %v589 = vadd.f32 %v500, %v588
      %590 = vmatmul.bf16.gmra.mxu0 %v428
      %v591 = vpop.f32.mrf.mxu0
      %v592 = vadd.f32 %v503, %v591
      %v593 = vpop.f32.mrf.mxu0
      %v594 = vadd.f32 %v505, %v593
      %595 = vmatmul.bf16.gmra.mxu0 %v431
      %v596 = vpop.f32.mrf.mxu0
      %v597 = vadd.f32 %v508, %v596
      %v598 = vpop.f32.mrf.mxu0
      %v599 = vadd.f32 %v510, %v598
      %600 = vmatmul.bf16.gmra.mxu0 %v434
      %v601 = vpop.f32.mrf.mxu0
      %v602 = vadd.f32 %v513, %v601
      %v603 = vpop.f32.mrf.mxu0
      %v604 = vadd.f32 %v515, %v603
      %605 = vmatmul.bf16.gmra.mxu0 %v437
      %v606 = vpop.f32.mrf.mxu0
      %v607 = vadd.f32 %v518, %v606
      %v608 = vpop.f32.mrf.mxu0
      %v609 = vadd.f32 %v520, %v608
      %610 = vmatmul.bf16.gmra.mxu0 %v440
      %v611 = vpop.f32.mrf.mxu0
      %v612 = vadd.f32 %v523, %v611
      %v613 = vpop.f32.mrf.mxu0
      %v614 = vadd.f32 %v525, %v613
      %615 = vmatmul.bf16.gmra.mxu0 %v443
      %v616 = vpop.f32.mrf.mxu0
      %v617 = vadd.f32 %v528, %v616
      %v618 = vpop.f32.mrf.mxu0
      %v619 = vadd.f32 %v530, %v618
      %620 = vmatmul.bf16.gmra.mxu0 %v446
      %v621 = vpop.f32.mrf.mxu0
      %v622 = vadd.f32 %v533, %v621
      %v623 = vpop.f32.mrf.mxu0
      %v624 = vadd.f32 %v535, %v623
      %625 = vdwg.mxu0
      %v626 = vmul.f32 %v547, 0.2
      %v627 = vmul.f32 %v549, 0.2
      %v628 = vmul.f32 %v552, 0.2
      %v629 = vmul.f32 %v554, 0.2
      %v630 = vmul.f32 %v557, 0.2
      %v631 = vmul.f32 %v559, 0.2
      %v632 = vmul.f32 %v562, 0.2
      %v633 = vmul.f32 %v564, 0.2
      %v634 = vmul.f32 %v567, 0.2
      %v635 = vmul.f32 %v569, 0.2
      %v636 = vmul.f32 %v572, 0.2
      %v637 = vmul.f32 %v574, 0.2
      %v638 = vmul.f32 %v577, 0.2
      %v639 = vmul.f32 %v579, 0.2
      %v640 = vmul.f32 %v582, 0.2
      %v641 = vmul.f32 %v584, 0.2
      %v642 = vmul.f32 %v587, 0.2
      %v643 = vmul.f32 %v589, 0.2
      %v644 = vmul.f32 %v592, 0.2
      %v645 = vmul.f32 %v594, 0.2
      %v646 = vmul.f32 %v597, 0.2
      %v647 = vmul.f32 %v599, 0.2
      %v648 = vmul.f32 %v602, 0.2
      %v649 = vmul.f32 %v604, 0.2
      %v650 = vmul.f32 %v607, 0.2
      %v651 = vmul.f32 %v609, 0.2
      %v652 = vmul.f32 %v612, 0.2
      %v653 = vmul.f32 %v614, 0.2
      %v654 = vmul.f32 %v617, 0.2
      %v655 = vmul.f32 %v619, 0.2
      %v656 = vmul.f32 %v622, 0.2
      %v657 = vmul.f32 %v624, 0.2
      %v658 = vmax.f32 %v547, %v626
      %v659 = vmax.f32 %v549, %v627
      %v660 = vmax.f32 %v552, %v628
      %v661 = vmax.f32 %v554, %v629
      %v662 = vmax.f32 %v557, %v630
      %v663 = vmax.f32 %v559, %v631
      %v664 = vmax.f32 %v562, %v632
      %v665 = vmax.f32 %v564, %v633
      %v666 = vmax.f32 %v567, %v634
      %v667 = vmax.f32 %v569, %v635
      %v668 = vmax.f32 %v572, %v636
      %v669 = vmax.f32 %v574, %v637
      %v670 = vmax.f32 %v577, %v638
      %v671 = vmax.f32 %v579, %v639
      %v672 = vmax.f32 %v582, %v640
      %v673 = vmax.f32 %v584, %v641
      %v674 = vmax.f32 %v587, %v642
      %v675 = vmax.f32 %v589, %v643
      %v676 = vmax.f32 %v592, %v644
      %v677 = vmax.f32 %v594, %v645
      %v678 = vmax.f32 %v597, %v646
      %v679 = vmax.f32 %v599, %v647
      %v680 = vmax.f32 %v602, %v648
      %v681 = vmax.f32 %v604, %v649
      %v682 = vmax.f32 %v607, %v650
      %v683 = vmax.f32 %v609, %v651
      %v684 = vmax.f32 %v612, %v652
      %v685 = vmax.f32 %v614, %v653
      %v686 = vmax.f32 %v617, %v654
      %v687 = vmax.f32 %v619, %v655
      %v688 = vmax.f32 %v622, %v656
      %v689 = vmax.f32 %v624, %v657
      %v690 = vpack.c.bf16 %v658, %v658
      %v691 = vpack.c.bf16 %v659, %v659
      %v692 = vpack.c.bf16 %v660, %v660
      %v693 = vpack.c.bf16 %v661, %v661
      %v694 = vpack.c.bf16 %v662, %v662
      %v695 = vpack.c.bf16 %v663, %v663
      %v696 = vpack.c.bf16 %v664, %v664
      %v697 = vpack.c.bf16 %v665, %v665
      %v698 = vpack.c.bf16 %v666, %v666
      %v699 = vpack.c.bf16 %v667, %v667
      %v700 = vpack.c.bf16 %v668, %v668
      %v701 = vpack.c.bf16 %v669, %v669
      %v702 = vpack.c.bf16 %v670, %v670
      %v703 = vpack.c.bf16 %v671, %v671
      %v704 = vpack.c.bf16 %v672, %v672
      %v705 = vpack.c.bf16 %v673, %v673
      %v706 = vpack.c.bf16 %v674, %v674
      %v707 = vpack.c.bf16 %v675, %v675
      %v708 = vpack.c.bf16 %v676, %v676
      %v709 = vpack.c.bf16 %v677, %v677
      %v710 = vpack.c.bf16 %v678, %v678
      %v711 = vpack.c.bf16 %v679, %v679
      %v712 = vpack.c.bf16 %v680, %v680
      %v713 = vpack.c.bf16 %v681, %v681
      %v714 = vpack.c.bf16 %v682, %v682
      %v715 = vpack.c.bf16 %v683, %v683
      %v716 = vpack.c.bf16 %v684, %v684
      %v717 = vpack.c.bf16 %v685, %v685
      %v718 = vpack.c.bf16 %v686, %v686
      %v719 = vpack.c.bf16 %v687, %v687
      %v720 = vpack.c.bf16 %v688, %v688
      %v721 = vpack.c.bf16 %v689, %v689
      %vm722 = vcmask 60416
      %723 = vst.msk [vmem:[%s148] sm:$0xf] %vm722, %v690
      %724 = vst.msk [vmem:[%s148 + $0x4] sm:$0xf] %vm722, %v691
      %725 = vst.msk [vmem:[%s148 + $0x8] sm:$0xf] %vm722, %v692
      %726 = vst.msk [vmem:[%s148 + $0xc] sm:$0xf] %vm722, %v693
      %727 = vst.msk [vmem:[%s148 + $0x10] sm:$0xf] %vm722, %v694
      %728 = vst.msk [vmem:[%s148 + $0x14] sm:$0xf] %vm722, %v695
      %729 = vst.msk [vmem:[%s148 + $0x18] sm:$0xf] %vm722, %v696
      %730 = vst.msk [vmem:[%s148 + $0x1c] sm:$0xf] %vm722, %v697
      %731 = vst.msk [vmem:[%s148 + $0x20] sm:$0xf] %vm722, %v698
      %732 = vst.msk [vmem:[%s148 + $0x24] sm:$0xf] %vm722, %v699
      %733 = vst.msk [vmem:[%s148 + $0x28] sm:$0xf] %vm722, %v700
      %734 = vst.msk [vmem:[%s148 + $0x2c] sm:$0xf] %vm722, %v701
      %735 = vst.msk [vmem:[%s148 + $0x30] sm:$0xf] %vm722, %v702
      %736 = vst.msk [vmem:[%s148 + $0x34] sm:$0xf] %vm722, %v703
      %737 = vst.msk [vmem:[%s148 + $0x38] sm:$0xf] %vm722, %v704
      %738 = vst.msk [vmem:[%s148 + $0x3c] sm:$0xf] %vm722, %v705
      %739 = vst.msk [vmem:[%s148 + $0x40] sm:$0xf] %vm722, %v706
      %740 = vst.msk [vmem:[%s148 + $0x44] sm:$0xf] %vm722, %v707
      %741 = vst.msk [vmem:[%s148 + $0x48] sm:$0xf] %vm722, %v708
      %742 = vst.msk [vmem:[%s148 + $0x4c] sm:$0xf] %vm722, %v709
      %743 = vst.msk [vmem:[%s148 + $0x50] sm:$0xf] %vm722, %v710
      %744 = vst.msk [vmem:[%s148 + $0x54] sm:$0xf] %vm722, %v711
      %745 = vst.msk [vmem:[%s148 + $0x58] sm:$0xf] %vm722, %v712
      %746 = vst.msk [vmem:[%s148 + $0x5c] sm:$0xf] %vm722, %v713
      %747 = vst.msk [vmem:[%s148 + $0x60] sm:$0xf] %vm722, %v714
      %748 = vst.msk [vmem:[%s148 + $0x64] sm:$0xf] %vm722, %v715
      %749 = vst.msk [vmem:[%s148 + $0x68] sm:$0xf] %vm722, %v716
      %750 = vst.msk [vmem:[%s148 + $0x6c] sm:$0xf] %vm722, %v717
      %751 = vst.msk [vmem:[%s148 + $0x70] sm:$0xf] %vm722, %v718
      %752 = vst.msk [vmem:[%s148 + $0x74] sm:$0xf] %vm722, %v719
      %753 = vst.msk [vmem:[%s148 + $0x78] sm:$0xf] %vm722, %v720
      %754 = vst.msk [vmem:[%s148 + $0x7c] sm:$0xf] %vm722, %v721
      %s755 = smul.u32 32, %s13
      %p756 = scmp.lt.s32.totalorder %s755, 63
      %s757 = scalar_select %p756, %s755, 63
      %s758 = smul.addr %s757, 4
      %s759 = scalar_lea.vmem %s2, %s758
      // Predicated region
      $region29: #{unet_forward.23} parent=27 // pred_check
        %p760 = pneg %p78
      $region30: #{unet_forward.23} parent=27 // pred_check_branch
        %762 = sbr.rel (%p760) target = $region32
      $region31: #{unet_forward.23} parent=27 // pred_region
        %s763 = smul.u32 32, %s13
      $region32: #{unet_forward.23} parent=27 // pred_fallthru
        _
    $region28: #{unet_forward.23} parent=5 // pred_fallthru
      _
    %p764 = scmp.le.s32.totalorder 2, %s8
    // Predicated region
    $region33: #{unet_forward.23} parent=5 // pred_check
      %p765 = pneg %p764
    $region34: #{unet_forward.23} parent=5 // pred_check_branch
      %767 = sbr.rel (%p765) target = $region36
    $region35: #{unet_forward.23} parent=5 // pred_region
      %s768 = ssub.s32 %s8, 2
      // Predicated region
      $region37: #{unet_forward.23} parent=35 // pred_check
        %p769 = pneg %p84
      $region38: #{unet_forward.23} parent=35 // pred_check_branch
        %771 = sbr.rel (%p769) target = $region40
      $region39: #{unet_forward.23} parent=35 // pred_region
        %s772 = smul.u32 32, %s14
        %p773 = scmp.lt.s32.totalorder %s772, 63
        %s774 = scalar_select %p773, %s772, 63
        %s775 = smul.addr %s774, 4
        %s776 = scalar_lea.vmem %s2, %s775
      $region40: #{unet_forward.23} parent=35 // pred_fallthru
        _
    $region36: #{unet_forward.23} parent=5 // pred_fallthru
      _
  $region6: #{unet_forward.23} parent=0 // loop_footer
    %s12 = sadd.s32 1, %s8
  $region7: #{unet_forward.23} parent=0 // loop_footer_branch
    %7 = sbr.rel target = $region3
  $region8: #{unet_forward.23} parent=0 // loop_exit
    _

// kernel: unet_forward.25
$region0: #{unet_forward.25}
  #allocation0 [shape = 'u32[]', space=smem, size = 0x4, offset = 0x4, fixed_abs, tag = 'smem constant byte address 0x4 - core index']
  #allocation1 [shape = 'u32[72,128]{1,0:T(1,128)}', space=vmem, size = 0x9000, scoped, tag = 'internal scratch']
  %s0 = inlined_call_operand.vmem [shape: bf16[512,8], index: 0, kind: input, shape index: {}]
  %s1 = inlined_call_operand.vmem [shape: bf16[8,2], index: 1, kind: input, shape index: {}]
  %s2 = inlined_call_operand.vmem [shape: f32[1,2], index: 2, kind: input, shape index: {}]
  %s3 = inlined_call_operand.vmem [shape: f32[512,2], index: 3, kind: output, shape index: {}]
  %s4 = sld [smem:[#allocation0]]
  $region45: #{unet_forward.25} parent=0
    _
  %s6 = ssub.s32 1, %s4
  %s7 = scalar_select 0, %s6, %s4
  loop: start=0, step=1, limit=4
  $region2: #{unet_forward.25} parent=0 // loop_pre_header
    _
  $region3: #{unet_forward.25} parent=0 // loop_header
    %s9 = sphi 0, %s13
    %p10 = scmp.ge.s32.totalorder %s9, 4
    %s19 = sphi 0, %s21
    %s22 = sphi 0, %s19
    %s23 = sphi 0, %s22
    %s39 = sphi 0, %s23
    %s43 = sphi 0, %s43
    %s45 = sphi 0, %s43
    %s46 = sphi 0, %s45
    %s60 = sphi 0, %s46
    %s64 = sphi 0, %s64
    %s66 = sphi 0, %s64
    %s67 = sphi 0, %s66
    %s81 = sphi 0, %s67
    %s87 = sphi 0, %s89
    %s90 = sphi 0, %s87
    %s91 = sphi 0, %s90
    %s107 = sphi 0, %s91
  $region4: #{unet_forward.25} parent=0 // loop_header_branch
    %12 = sbr.rel (%p10) target = $region8
  $region5: #{unet_forward.25} parent=0 // loop_body
    %s14 = ssub.s32 %s9, 1
    %s15 = ssub.s32 %s9, 2
    %s16 = sadd.s32 %s9, 1
    %s17 = ssub.s32 %s9, %s16
    %p18 = scmp.eq.s32.totalorder %s17, 0
    %s20 = sadd.s32 %s19, 1
    %s21 = scalar_select %p18, %s19, %s20
    %p24 = pneg %p18
    %p25 = scmp.eq.s32.totalorder %s9, 1
    %p26 = por %p24, %p25
    %p27 = scmp.ne.s32.totalorder %s19, %s22
    %p28 = scmp.eq.s32.totalorder %s9, 0
    %p29 = por %p27, %p28
    %p30 = scmp.ne.s32.totalorder %s19, %s22
    %p31 = scmp.eq.s32.totalorder %s14, 1
    %p32 = por %p30, %p31
    %p33 = scmp.ne.s32.totalorder %s22, %s23
    %p34 = scmp.eq.s32.totalorder %s14, 0
    %p35 = por %p33, %p34
    %p36 = scmp.ne.s32.totalorder %s22, %s23
    %p37 = scmp.eq.s32.totalorder %s15, 1
    %p38 = por %p36, %p37
    %p40 = scmp.ne.s32.totalorder %s23, %s39
    %p41 = scmp.eq.s32.totalorder %s15, 0
    %p42 = por %p40, %p41
    %s44 = sadd.s32 %s43, 1
    %p47 = scmp.eq.s32.totalorder %s9, 1
    %p48 = scmp.ne.s32.totalorder %s43, %s45
    %p49 = scmp.eq.s32.totalorder %s9, 0
    %p50 = por %p48, %p49
    %p51 = scmp.ne.s32.totalorder %s43, %s45
    %p52 = scmp.eq.s32.totalorder %s14, 1
    %p53 = por %p51, %p52
    %p54 = scmp.ne.s32.totalorder %s45, %s46
    %p55 = scmp.eq.s32.totalorder %s14, 0
    %p56 = por %p54, %p55
    %p57 = scmp.ne.s32.totalorder %s45, %s46
    %p58 = scmp.eq.s32.totalorder %s15, 1
    %p59 = por %p57, %p58
    %p61 = scmp.ne.s32.totalorder %s46, %s60
    %p62 = scmp.eq.s32.totalorder %s15, 0
    %p63 = por %p61, %p62
    %s65 = sadd.s32 %s64, 1
    %p68 = scmp.eq.s32.totalorder %s9, 1
    %p69 = scmp.ne.s32.totalorder %s64, %s66
    %p70 = scmp.eq.s32.totalorder %s9, 0
    %p71 = por %p69, %p70
    %p72 = scmp.ne.s32.totalorder %s64, %s66
    %p73 = scmp.eq.s32.totalorder %s14, 1
    %p74 = por %p72, %p73
    %p75 = scmp.ne.s32.totalorder %s66, %s67
    %p76 = scmp.eq.s32.totalorder %s14, 0
    %p77 = por %p75, %p76
    %p78 = scmp.ne.s32.totalorder %s66, %s67
    %p79 = scmp.eq.s32.totalorder %s15, 1
    %p80 = por %p78, %p79
    %p82 = scmp.ne.s32.totalorder %s67, %s81
    %p83 = scmp.eq.s32.totalorder %s15, 0
    %p84 = por %p82, %p83
    %s85 = ssub.s32 %s9, %s16
    %p86 = scmp.eq.s32.totalorder %s85, 0
    %s88 = sadd.s32 %s87, 1
    %s89 = scalar_select %p86, %s87, %s88
    %p92 = pneg %p86
    %p93 = scmp.eq.s32.totalorder %s9, 1
    %p94 = por %p92, %p93
    %p95 = scmp.ne.s32.totalorder %s87, %s90
    %p96 = scmp.eq.s32.totalorder %s9, 0
    %p97 = por %p95, %p96
    %p98 = scmp.ne.s32.totalorder %s87, %s90
    %p99 = scmp.eq.s32.totalorder %s14, 1
    %p100 = por %p98, %p99
    %p101 = scmp.ne.s32.totalorder %s90, %s91
    %p102 = scmp.eq.s32.totalorder %s14, 0
    %p103 = por %p101, %p102
    %p104 = scmp.ne.s32.totalorder %s90, %s91
    %p105 = scmp.eq.s32.totalorder %s15, 1
    %p106 = por %p104, %p105
    %p108 = scmp.ne.s32.totalorder %s91, %s107
    %p109 = scmp.eq.s32.totalorder %s15, 0
    %p110 = por %p108, %p109
    %p111 = scmp.le.s32.totalorder 1, %s9
    %p112 = scmp.lt.s32.totalorder %s9, 3
    %p113 = pnand %p111, %p112
    %p114 = pneg %p113
    // Predicated region
    $region9: #{unet_forward.25} parent=5 // pred_check
      _
    $region10: #{unet_forward.25} parent=5 // pred_check_branch
      %116 = sbr.rel (%p113) target = $region12
    $region11: #{unet_forward.25} parent=5 // pred_region
      %s117 = ssub.s32 %s9, 1
      // Predicated region
      $region13: #{unet_forward.25} parent=11 // pred_check
        %p118 = pneg %p56
      $region14: #{unet_forward.25} parent=11 // pred_check_branch
        %120 = sbr.rel (%p118) target = $region16
      $region15: #{unet_forward.25} parent=11 // pred_region
        _
      $region16: #{unet_forward.25} parent=11 // pred_fallthru
        _
      // Predicated region
      $region17: #{unet_forward.25} parent=11 // pred_check
        %p121 = pneg %p77
      $region18: #{unet_forward.25} parent=11 // pred_check_branch
        %123 = sbr.rel (%p121) target = $region20
      $region19: #{unet_forward.25} parent=11 // pred_region
        _
      $region20: #{unet_forward.25} parent=11 // pred_fallthru
        _
    $region12: #{unet_forward.25} parent=5 // pred_fallthru
      _
    %p124 = scmp.lt.s32.totalorder %s9, 2
    // Predicated region
    $region21: #{unet_forward.25} parent=5 // pred_check
      %p125 = pneg %p124
    $region22: #{unet_forward.25} parent=5 // pred_check_branch
      %127 = sbr.rel (%p125) target = $region24
    $region23: #{unet_forward.25} parent=5 // pred_region
      // Predicated region
      $region25: #{unet_forward.25} parent=23 // pred_check
        %p128 = pneg %p29
      $region26: #{unet_forward.25} parent=23 // pred_check_branch
        %130 = sbr.rel (%p128) target = $region28
      $region27: #{unet_forward.25} parent=23 // pred_region
        %s131 = smul.u32 32, %s9
        %p132 = scmp.lt.s32.totalorder %s131, 63
        %s133 = scalar_select %p132, %s131, 63
        %s134 = smul.addr %s133, 4
        %s135 = scalar_lea.vmem %s0, %s134
        %s136 = smul.u32 32, %s9
      $region28: #{unet_forward.25} parent=23 // pred_fallthru
        _
    $region24: #{unet_forward.25} parent=5 // pred_fallthru
      _
    %p137 = scmp.le.s32.totalorder 1, %s9
    %p138 = scmp.lt.s32.totalorder %s9, 3
    %p139 = pnand %p137, %p138
    %p140 = pneg %p139
    // Predicated region
    $region29: #{unet_forward.25} parent=5 // pred_check
      _
    $region30: #{unet_forward.25} parent=5 // pred_check_branch
      %142 = sbr.rel (%p139) target = $region32
    $region31: #{unet_forward.25} parent=5 // pred_region
      %s143 = ssub.s32 %s9, 1
      %s144 = smul.u32 32, %s14
      %p145 = scmp.lt.s32.totalorder %s144, 63
      %s146 = scalar_select %p145, %s144, 63
      %s147 = smul.addr %s146, 4
      %s148 = scalar_lea.vmem %s0, %s147
      %p149 = pneg %p35
      %p150 = pneg %p32
      %p151 = pneg %p56
      %p152 = pneg %p53
      %p153 = pneg %p77
      %p154 = pneg %p74
      %p155 = pneg %p103
      %p156 = pneg %p100
      %s157 = smul.u32 32, %s14
      %p158 = scmp.lt.s32.totalorder %s157, 63
      %s159 = scalar_select %p158, %s157, 63
      %s160 = smul.addr %s159, 8
      %s161 = scalar_lea.vmem %s3, %s160
      %s162 = smul.u32 32, %s14
      %p163 = scmp.lt.s32.totalorder %s162, 63
      %s164 = scalar_select %p163, %s162, 63
      %s165 = smul.addr %s164, 4
      %s166 = scalar_lea.vmem %s0, %s165
      %s167 = smul.u32 32, %s14
      %s168 = smul.u32 32, %s14
      %p169 = scmp.lt.s32.totalorder %s168, 63
      %s170 = scalar_select %p169, %s168, 63
      %s171 = smul.addr %s170, 8
      %s172 = scalar_lea.vmem %s3, %s171
      %s173 = smul.u32 32, %s14
      %v175 = vld [vmem:[%s166] sm:$0xf]
      %v176 = vld [vmem:[%s166 + $0x4] sm:$0xf]
      %v177 = vld [vmem:[%s166 + $0x8] sm:$0xf]
      %v178 = vld [vmem:[%s166 + $0xc] sm:$0xf]
      %v179 = vld [vmem:[%s166 + $0x10] sm:$0xf]
      %v180 = vld [vmem:[%s166 + $0x14] sm:$0xf]
      %v181 = vld [vmem:[%s166 + $0x18] sm:$0xf]
      %v182 = vld [vmem:[%s166 + $0x1c] sm:$0xf]
      %v183 = vld [vmem:[%s166 + $0x20] sm:$0xf]
      %v184 = vld [vmem:[%s166 + $0x24] sm:$0xf]
      %v185 = vld [vmem:[%s166 + $0x28] sm:$0xf]
      %v186 = vld [vmem:[%s166 + $0x2c] sm:$0xf]
      %v187 = vld [vmem:[%s166 + $0x30] sm:$0xf]
      %v188 = vld [vmem:[%s166 + $0x34] sm:$0xf]
      %v189 = vld [vmem:[%s166 + $0x38] sm:$0xf]
      %v190 = vld [vmem:[%s166 + $0x3c] sm:$0xf]
      %v191 = vld [vmem:[%s166 + $0x40] sm:$0xf]
      %v192 = vld [vmem:[%s166 + $0x44] sm:$0xf]
      %v193 = vld [vmem:[%s166 + $0x48] sm:$0xf]
      %v194 = vld [vmem:[%s166 + $0x4c] sm:$0xf]
      %v195 = vld [vmem:[%s166 + $0x50] sm:$0xf]
      %v196 = vld [vmem:[%s166 + $0x54] sm:$0xf]
      %v197 = vld [vmem:[%s166 + $0x58] sm:$0xf]
      %v198 = vld [vmem:[%s166 + $0x5c] sm:$0xf]
      %v199 = vld [vmem:[%s166 + $0x60] sm:$0xf]
      %v200 = vld [vmem:[%s166 + $0x64] sm:$0xf]
      %v201 = vld [vmem:[%s166 + $0x68] sm:$0xf]
      %v202 = vld [vmem:[%s166 + $0x6c] sm:$0xf]
      %v203 = vld [vmem:[%s166 + $0x70] sm:$0xf]
      %v204 = vld [vmem:[%s166 + $0x74] sm:$0xf]
      %v205 = vld [vmem:[%s166 + $0x78] sm:$0xf]
      %v206 = vld [vmem:[%s166 + $0x7c] sm:$0xf]
      %v207 = vld [vmem:[%s1] sm:$0xf]
      %v208 = vld [vmem:[%s2] sm:$0x1]
      %v210 = vperm.slane %v208, 0
      %v244 = vunpack.c.l.b16 %v175
      %v245 = vunpack.c.l.b16 %v176
      %v246 = vunpack.c.l.b16 %v177
      %v247 = vunpack.c.l.b16 %v178
      %v248 = vunpack.c.l.b16 %v179
      %v249 = vunpack.c.l.b16 %v180
      %v250 = vunpack.c.l.b16 %v181
      %v251 = vunpack.c.l.b16 %v182
      %v252 = vunpack.c.l.b16 %v183
      %v253 = vunpack.c.l.b16 %v184
      %v254 = vunpack.c.l.b16 %v185
      %v255 = vunpack.c.l.b16 %v186
      %v256 = vunpack.c.l.b16 %v187
      %v257 = vunpack.c.l.b16 %v188
      %v258 = vunpack.c.l.b16 %v189
      %v259 = vunpack.c.l.b16 %v190
      %v260 = vunpack.c.l.b16 %v191
      %v261 = vunpack.c.l.b16 %v192
      %v262 = vunpack.c.l.b16 %v193
      %v263 = vunpack.c.l.b16 %v194
      %v264 = vunpack.c.l.b16 %v195
      %v265 = vunpack.c.l.b16 %v196
      %v266 = vunpack.c.l.b16 %v197
      %v267 = vunpack.c.l.b16 %v198
      %v268 = vunpack.c.l.b16 %v199
      %v269 = vunpack.c.l.b16 %v200
      %v270 = vunpack.c.l.b16 %v201
      %v271 = vunpack.c.l.b16 %v202
      %v272 = vunpack.c.l.b16 %v203
      %v273 = vunpack.c.l.b16 %v204
      %v274 = vunpack.c.l.b16 %v205
      %v275 = vunpack.c.l.b16 %v206
      %v276 = vpack.c.b16 %v245, %v244
      %v277 = vpack.c.b16 %v247, %v246
      %v278 = vpack.c.b16 %v249, %v248
      %v279 = vpack.c.b16 %v251, %v250
      %v280 = vpack.c.b16 %v253, %v252
      %v281 = vpack.c.b16 %v255, %v254
      %v282 = vpack.c.b16 %v257, %v256
      %v283 = vpack.c.b16 %v259, %v258
      %v284 = vpack.c.b16 %v261, %v260
      %v285 = vpack.c.b16 %v263, %v262
      %v286 = vpack.c.b16 %v265, %v264
      %v287 = vpack.c.b16 %v267, %v266
      %v288 = vpack.c.b16 %v269, %v268
      %v289 = vpack.c.b16 %v271, %v270
      %v290 = vpack.c.b16 %v273, %v272
      %v291 = vpack.c.b16 %v275, %v274
      %vm292 = vcmask 64512
      %v294 = vsel %vm292, %v276, 0
      %v297 = vsel %vm292, %v277, 0
      %v300 = vsel %vm292, %v278, 0
      %v303 = vsel %vm292, %v279, 0
      %v306 = vsel %vm292, %v280, 0
      %v309 = vsel %vm292, %v281, 0
      %v312 = vsel %vm292, %v282, 0
      %v315 = vsel %vm292, %v283, 0
      %v318 = vsel %vm292, %v284, 0
      %v321 = vsel %vm292, %v285, 0
      %v324 = vsel %vm292, %v286, 0
      %v327 = vsel %vm292, %v287, 0
      %v330 = vsel %vm292, %v288, 0
      %v333 = vsel %vm292, %v289, 0
      %v336 = vsel %vm292, %v290, 0
      %v339 = vsel %vm292, %v291, 0
      %vm341 = vcmask 1043456
      %v343 = vsel %vm341, %v207, 0
      %345 = vmatpush.bf16.msra.mxu0 0
      %346 = vmatpush.bf16.msra.mxu0 0
      %347 = vmatpush.bf16.msra.mxu0 0
      %348 = vmatpush.bf16.msra.mxu0 0
      %349 = vmatpush.bf16.msra.mxu0 0
      %350 = vmatpush.bf16.msra.mxu0 0
      %351 = vmatpush.bf16.msra.mxu0 0
      %352 = vmatpush.bf16.msra.mxu0 %v343
      %353 = vmatmul.bf16.gmra.mxu0 %v294
      %v354 = vpop.f32.mrf.mxu0
      %v355 = vadd.f32 %v210, %v354
      %v356 = vpop.f32.mrf.mxu0
      %v357 = vadd.f32 %v210, %v356
      %358 = vmatmul.bf16.gmra.mxu0 %v297
      %v359 = vpop.f32.mrf.mxu0
      %v360 = vadd.f32 %v210, %v359
      %v361 = vpop.f32.mrf.mxu0
      %v362 = vadd.f32 %v210, %v361
      %363 = vmatmul.bf16.gmra.mxu0 %v300
      %v364 = vpop.f32.mrf.mxu0
      %v365 = vadd.f32 %v210, %v364
      %v366 = vpop.f32.mrf.mxu0
      %v367 = vadd.f32 %v210, %v366
      %368 = vmatmul.bf16.gmra.mxu0 %v303
      %v369 = vpop.f32.mrf.mxu0
      %v370 = vadd.f32 %v210, %v369
      %v371 = vpop.f32.mrf.mxu0
      %v372 = vadd.f32 %v210, %v371
      %373 = vmatmul.bf16.gmra.mxu0 %v306
      %v374 = vpop.f32.mrf.mxu0
      %v375 = vadd.f32 %v210, %v374
      %v376 = vpop.f32.mrf.mxu0
      %v377 = vadd.f32 %v210, %v376
      %378 = vmatmul.bf16.gmra.mxu0 %v309
      %v379 = vpop.f32.mrf.mxu0
      %v380 = vadd.f32 %v210, %v379
      %v381 = vpop.f32.mrf.mxu0
      %v382 = vadd.f32 %v210, %v381
      %383 = vmatmul.bf16.gmra.mxu0 %v312
      %v384 = vpop.f32.mrf.mxu0
      %v385 = vadd.f32 %v210, %v384
      %v386 = vpop.f32.mrf.mxu0
      %v387 = vadd.f32 %v210, %v386
      %388 = vmatmul.bf16.gmra.mxu0 %v315
      %v389 = vpop.f32.mrf.mxu0
      %v390 = vadd.f32 %v210, %v389
      %v391 = vpop.f32.mrf.mxu0
      %v392 = vadd.f32 %v210, %v391
      %393 = vmatmul.bf16.gmra.mxu0 %v318
      %v394 = vpop.f32.mrf.mxu0
      %v395 = vadd.f32 %v210, %v394
      %v396 = vpop.f32.mrf.mxu0
      %v397 = vadd.f32 %v210, %v396
      %398 = vmatmul.bf16.gmra.mxu0 %v321
      %v399 = vpop.f32.mrf.mxu0
      %v400 = vadd.f32 %v210, %v399
      %v401 = vpop.f32.mrf.mxu0
      %v402 = vadd.f32 %v210, %v401
      %403 = vmatmul.bf16.gmra.mxu0 %v324
      %v404 = vpop.f32.mrf.mxu0
      %v405 = vadd.f32 %v210, %v404
      %v406 = vpop.f32.mrf.mxu0
      %v407 = vadd.f32 %v210, %v406
      %408 = vmatmul.bf16.gmra.mxu0 %v327
      %v409 = vpop.f32.mrf.mxu0
      %v410 = vadd.f32 %v210, %v409
      %v411 = vpop.f32.mrf.mxu0
      %v412 = vadd.f32 %v210, %v411
      %413 = vmatmul.bf16.gmra.mxu0 %v330
      %v414 = vpop.f32.mrf.mxu0
      %v415 = vadd.f32 %v210, %v414
      %v416 = vpop.f32.mrf.mxu0
      %v417 = vadd.f32 %v210, %v416
      %418 = vmatmul.bf16.gmra.mxu0 %v333
      %v419 = vpop.f32.mrf.mxu0
      %v420 = vadd.f32 %v210, %v419
      %v421 = vpop.f32.mrf.mxu0
      %v422 = vadd.f32 %v210, %v421
      %423 = vmatmul.bf16.gmra.mxu0 %v336
      %v424 = vpop.f32.mrf.mxu0
      %v425 = vadd.f32 %v210, %v424
      %v426 = vpop.f32.mrf.mxu0
      %v427 = vadd.f32 %v210, %v426
      %428 = vmatmul.bf16.gmra.mxu0 %v339
      %v429 = vpop.f32.mrf.mxu0
      %v430 = vadd.f32 %v210, %v429
      %v431 = vpop.f32.mrf.mxu0
      %v432 = vadd.f32 %v210, %v431
      %433 = vdwg.mxu0
      %v434 = vsub.f32 0.0, %v355
      %v435 = vsub.f32 0.0, %v357
      %v436 = vsub.f32 0.0, %v360
      %v437 = vsub.f32 0.0, %v362
      %v438 = vsub.f32 0.0, %v365
      %v439 = vsub.f32 0.0, %v367
      %v440 = vsub.f32 0.0, %v370
      %v441 = vsub.f32 0.0, %v372
      %v442 = vsub.f32 0.0, %v375
      %v443 = vsub.f32 0.0, %v377
      %v444 = vsub.f32 0.0, %v380
      %v445 = vsub.f32 0.0, %v382
      %v446 = vsub.f32 0.0, %v385
      %v447 = vsub.f32 0.0, %v387
      %v448 = vsub.f32 0.0, %v390
      %v449 = vsub.f32 0.0, %v392
      %v450 = vsub.f32 0.0, %v395
      %v451 = vsub.f32 0.0, %v397
      %v452 = vsub.f32 0.0, %v400
      %v453 = vsub.f32 0.0, %v402
      %v454 = vsub.f32 0.0, %v405
      %v455 = vsub.f32 0.0, %v407
      %v456 = vsub.f32 0.0, %v410
      %v457 = vsub.f32 0.0, %v412
      %v458 = vsub.f32 0.0, %v415
      %v459 = vsub.f32 0.0, %v417
      %v460 = vsub.f32 0.0, %v420
      %v461 = vsub.f32 0.0, %v422
      %v462 = vsub.f32 0.0, %v425
      %v463 = vsub.f32 0.0, %v427
      %v464 = vsub.f32 0.0, %v430
      %v465 = vsub.f32 0.0, %v432
      %v466 = vmul.f32 %v434, 1.442695
      %v467 = vpow.pop %v466
      %v468 = vmul.f32 %v435, 1.442695
      %v469 = vpow.pop %v468
      %v470 = vmul.f32 %v436, 1.442695
      %v471 = vpow.pop %v470
      %v472 = vmul.f32 %v437, 1.442695
      %v473 = vpow.pop %v472
      %v474 = vmul.f32 %v438, 1.442695
      %v475 = vpow.pop %v474
      %v476 = vmul.f32 %v439, 1.442695
      %v477 = vpow.pop %v476
      %v478 = vmul.f32 %v440, 1.442695
      %v479 = vpow.pop %v478
      %v480 = vmul.f32 %v441, 1.442695
      %v481 = vpow.pop %v480
      %v482 = vmul.f32 %v442, 1.442695
      %v483 = vpow.pop %v482
      %v484 = vmul.f32 %v443, 1.442695
      %v485 = vpow.pop %v484
      %v486 = vmul.f32 %v444, 1.442695
      %v487 = vpow.pop %v486
      %v488 = vmul.f32 %v445, 1.442695
      %v489 = vpow.pop %v488
      %v490 = vmul.f32 %v446, 1.442695
      %v491 = vpow.pop %v490
      %v492 = vmul.f32 %v447, 1.442695
      %v493 = vpow.pop %v492
      %v494 = vmul.f32 %v448, 1.442695
      %v495 = vpow.pop %v494
      %v496 = vmul.f32 %v449, 1.442695
      %v497 = vpow.pop %v496
      %v498 = vmul.f32 %v450, 1.442695
      %v499 = vpow.pop %v498
      %v500 = vmul.f32 %v451, 1.442695
      %v501 = vpow.pop %v500
      %v502 = vmul.f32 %v452, 1.442695
      %v503 = vpow.pop %v502
      %v504 = vmul.f32 %v453, 1.442695
      %v505 = vpow.pop %v504
      %v506 = vmul.f32 %v454, 1.442695
      %v507 = vpow.pop %v506
      %v508 = vmul.f32 %v455, 1.442695
      %v509 = vpow.pop %v508
      %v510 = vmul.f32 %v456, 1.442695
      %v511 = vpow.pop %v510
      %v512 = vmul.f32 %v457, 1.442695
      %v513 = vpow.pop %v512
      %v514 = vmul.f32 %v458, 1.442695
      %v515 = vpow.pop %v514
      %v516 = vmul.f32 %v459, 1.442695
      %v517 = vpow.pop %v516
      %v518 = vmul.f32 %v460, 1.442695
      %v519 = vpow.pop %v518
      %v520 = vmul.f32 %v461, 1.442695
      %v521 = vpow.pop %v520
      %v522 = vmul.f32 %v462, 1.442695
      %v523 = vpow.pop %v522
      %v524 = vmul.f32 %v463, 1.442695
      %v525 = vpow.pop %v524
      %v526 = vmul.f32 %v464, 1.442695
      %v527 = vpow.pop %v526
      %v528 = vmul.f32 %v465, 1.442695
      %v529 = vpow.pop %v528
      %v530 = vadd.f32 %v467, 1.0
      %v531 = vadd.f32 %v469, 1.0
      %v532 = vadd.f32 %v471, 1.0
      %v533 = vadd.f32 %v473, 1.0
      %v534 = vadd.f32 %v475, 1.0
      %v535 = vadd.f32 %v477, 1.0
      %v536 = vadd.f32 %v479, 1.0
      %v537 = vadd.f32 %v481, 1.0
      %v538 = vadd.f32 %v483, 1.0
      %v539 = vadd.f32 %v485, 1.0
      %v540 = vadd.f32 %v487, 1.0
      %v541 = vadd.f32 %v489, 1.0
      %v542 = vadd.f32 %v491, 1.0
      %v543 = vadd.f32 %v493, 1.0
      %v544 = vadd.f32 %v495, 1.0
      %v545 = vadd.f32 %v497, 1.0
      %v546 = vadd.f32 %v499, 1.0
      %v547 = vadd.f32 %v501, 1.0
      %v548 = vadd.f32 %v503, 1.0
      %v549 = vadd.f32 %v505, 1.0
      %v550 = vadd.f32 %v507, 1.0
      %v551 = vadd.f32 %v509, 1.0
      %v552 = vadd.f32 %v511, 1.0
      %v553 = vadd.f32 %v513, 1.0
      %v554 = vadd.f32 %v515, 1.0
      %v555 = vadd.f32 %v517, 1.0
      %v556 = vadd.f32 %v519, 1.0
      %v557 = vadd.f32 %v521, 1.0
      %v558 = vadd.f32 %v523, 1.0
      %v559 = vadd.f32 %v525, 1.0
      %v560 = vadd.f32 %v527, 1.0
      %v561 = vadd.f32 %v529, 1.0
      %v562 = vrcp.pop %v530
      %v563 = vrcp.pop %v531
      %v564 = vrcp.pop %v532
      %v565 = vrcp.pop %v533
      %v566 = vrcp.pop %v534
      %v567 = vrcp.pop %v535
      %v568 = vrcp.pop %v536
      %v569 = vrcp.pop %v537
      %v570 = vrcp.pop %v538
      %v571 = vrcp.pop %v539
      %v572 = vrcp.pop %v540
      %v573 = vrcp.pop %v541
      %v574 = vrcp.pop %v542
      %v575 = vrcp.pop %v543
      %v576 = vrcp.pop %v544
      %v577 = vrcp.pop %v545
      %v578 = vrcp.pop %v546
      %v579 = vrcp.pop %v547
      %v580 = vrcp.pop %v548
      %v581 = vrcp.pop %v549
      %v582 = vrcp.pop %v550
      %v583 = vrcp.pop %v551
      %v584 = vrcp.pop %v552
      %v585 = vrcp.pop %v553
      %v586 = vrcp.pop %v554
      %v587 = vrcp.pop %v555
      %v588 = vrcp.pop %v556
      %v589 = vrcp.pop %v557
      %v590 = vrcp.pop %v558
      %v591 = vrcp.pop %v559
      %v592 = vrcp.pop %v560
      %v593 = vrcp.pop %v561
      %vm594 = vcmask 15360
      %595 = vst.msk [vmem:[%s172] sm:$0xff] %vm594, %v562
      %596 = vst.msk [vmem:[%s172 + $0x8] sm:$0xff] %vm594, %v563
      %597 = vst.msk [vmem:[%s172 + $0x10] sm:$0xff] %vm594, %v564
      %598 = vst.msk [vmem:[%s172 + $0x18] sm:$0xff] %vm594, %v565
      %599 = vst.msk [vmem:[%s172 + $0x20] sm:$0xff] %vm594, %v566
      %600 = vst.msk [vmem:[%s172 + $0x28] sm:$0xff] %vm594, %v567
      %601 = vst.msk [vmem:[%s172 + $0x30] sm:$0xff] %vm594, %v568
      %602 = vst.msk [vmem:[%s172 + $0x38] sm:$0xff] %vm594, %v569
      %603 = vst.msk [vmem:[%s172 + $0x40] sm:$0xff] %vm594, %v570
      %604 = vst.msk [vmem:[%s172 + $0x48] sm:$0xff] %vm594, %v571
      %605 = vst.msk [vmem:[%s172 + $0x50] sm:$0xff] %vm594, %v572
      %606 = vst.msk [vmem:[%s172 + $0x58] sm:$0xff] %vm594, %v573
      %607 = vst.msk [vmem:[%s172 + $0x60] sm:$0xff] %vm594, %v574
      %608 = vst.msk [vmem:[%s172 + $0x68] sm:$0xff] %vm594, %v575
      %609 = vst.msk [vmem:[%s172 + $0x70] sm:$0xff] %vm594, %v576
      %610 = vst.msk [vmem:[%s172 + $0x78] sm:$0xff] %vm594, %v577
      %611 = vst.msk [vmem:[%s172 + $0x80] sm:$0xff] %vm594, %v578
      %612 = vst.msk [vmem:[%s172 + $0x88] sm:$0xff] %vm594, %v579
      %613 = vst.msk [vmem:[%s172 + $0x90] sm:$0xff] %vm594, %v580
      %614 = vst.msk [vmem:[%s172 + $0x98] sm:$0xff] %vm594, %v581
      %615 = vst.msk [vmem:[%s172 + $0xa0] sm:$0xff] %vm594, %v582
      %616 = vst.msk [vmem:[%s172 + $0xa8] sm:$0xff] %vm594, %v583
      %617 = vst.msk [vmem:[%s172 + $0xb0] sm:$0xff] %vm594, %v584
      %618 = vst.msk [vmem:[%s172 + $0xb8] sm:$0xff] %vm594, %v585
      %619 = vst.msk [vmem:[%s172 + $0xc0] sm:$0xff] %vm594, %v586
      %620 = vst.msk [vmem:[%s172 + $0xc8] sm:$0xff] %vm594, %v587
      %621 = vst.msk [vmem:[%s172 + $0xd0] sm:$0xff] %vm594, %v588
      %622 = vst.msk [vmem:[%s172 + $0xd8] sm:$0xff] %vm594, %v589
      %623 = vst.msk [vmem:[%s172 + $0xe0] sm:$0xff] %vm594, %v590
      %624 = vst.msk [vmem:[%s172 + $0xe8] sm:$0xff] %vm594, %v591
      %625 = vst.msk [vmem:[%s172 + $0xf0] sm:$0xff] %vm594, %v592
      %626 = vst.msk [vmem:[%s172 + $0xf8] sm:$0xff] %vm594, %v593
      %s627 = smul.u32 32, %s14
      %p628 = scmp.lt.s32.totalorder %s627, 63
      %s629 = scalar_select %p628, %s627, 63
      %s630 = smul.addr %s629, 8
      %s631 = scalar_lea.vmem %s3, %s630
      // Predicated region
      $region33: #{unet_forward.25} parent=31 // pred_check
        %p632 = pneg %p100
      $region34: #{unet_forward.25} parent=31 // pred_check_branch
        %634 = sbr.rel (%p632) target = $region36
      $region35: #{unet_forward.25} parent=31 // pred_region
        %s635 = smul.u32 32, %s14
      $region36: #{unet_forward.25} parent=31 // pred_fallthru
        _
    $region32: #{unet_forward.25} parent=5 // pred_fallthru
      _
    %p636 = scmp.le.s32.totalorder 2, %s9
    // Predicated region
    $region37: #{unet_forward.25} parent=5 // pred_check
      %p637 = pneg %p636
    $region38: #{unet_forward.25} parent=5 // pred_check_branch
      %639 = sbr.rel (%p637) target = $region40
    $region39: #{unet_forward.25} parent=5 // pred_region
      %s640 = ssub.s32 %s9, 2
      // Predicated region
      $region41: #{unet_forward.25} parent=39 // pred_check
        %p641 = pneg %p106
      $region42: #{unet_forward.25} parent=39 // pred_check_branch
        %643 = sbr.rel (%p641) target = $region44
      $region43: #{unet_forward.25} parent=39 // pred_region
        %s644 = smul.u32 32, %s15
        %p645 = scmp.lt.s32.totalorder %s644, 63
        %s646 = scalar_select %p645, %s644, 63
        %s647 = smul.addr %s646, 8
        %s648 = scalar_lea.vmem %s3, %s647
      $region44: #{unet_forward.25} parent=39 // pred_fallthru
        _
    $region40: #{unet_forward.25} parent=5 // pred_fallthru
      _
  $region6: #{unet_forward.25} parent=0 // loop_footer
    %s13 = sadd.s32 1, %s9
  $region7: #{unet_forward.25} parent=0 // loop_footer_branch
    %8 = sbr.rel target = $region3
  $region8: #{unet_forward.25} parent=0 // loop_exit
    _

</llo_original>
